<compile_context>
chip_gen: v7x
topology: tpu7x:2x2x1
jax: 0.10.0
libtpu: 0.0.40
codegen_flags: <defaults>
</compile_context>

<pallas_src>
import functools
import math

import jax
import jax.numpy as jnp
import numpy as np
from jax import lax
from jax.experimental import pallas as pl
from jax.experimental.pallas import tpu as pltpu


def _round_up(x, m):
    return (x + m - 1) // m * m


def _lstm_cls_kernel(L, Hp, Tc, Bt, mm_dtype, unroll, x_ref, *refs):
    """Grid = (batch_tiles, time_chunks).

    refs layout (positional):
      [w_ih_T_l, w_hh_T_l, b_l] for l in range(L), fc_w_T, fc_b,   <- inputs
      out_ref,                                                     <- output
      h_scr, c_scr, seq_scr, z_scr                                 <- scratch
    """
    n_in = 3 * L + 2
    in_refs = refs[:n_in]
    out_ref = refs[n_in]
    h_scr, c_scr, seq_scr, z_scr = refs[n_in + 1:n_in + 5]
    fc_w_ref = in_refs[3 * L]      # (Hp, Op)
    fc_b_ref = in_refs[3 * L + 1]  # (1, Op)

    tc = pl.program_id(1)

    @pl.when(tc == 0)
    def _init():
        h_scr[...] = jnp.zeros_like(h_scr)
        c_scr[...] = jnp.zeros_like(c_scr)

    top_h = None
    for layer in range(L):
        w_ih_T = in_refs[3 * layer][...]       # (in_pad_l, 4*Hp), mm_dtype
        w_hh_T = in_refs[3 * layer + 1][...]   # (Hp, 4*Hp),      mm_dtype
        b = in_refs[3 * layer + 2][...]        # (1, 4*Hp),       f32

        if layer == 0:
            inp_flat = x_ref[0]                # (Tc*Bt, I) — rows ordered (t, batch)
        else:
            inp_flat = seq_scr[...]            # previous layer's h for all timesteps

        # Hoisted, time-independent input projection: one MXU-shaped matmul
        # (M = Tc*Bt rows) off the strictly-serial critical path.
        z_scr[...] = (
            jnp.dot(inp_flat.astype(mm_dtype), w_ih_T,
                    preferred_element_type=jnp.float32) + b)

        write_seq = layer < L - 1

        def step(t, carry, w_hh_T=w_hh_T, write_seq=write_seq):
            h, c = carry
            row = t * Bt
            if Bt % 8 == 0:
                row = pl.multiple_of(row, 8)
            # Serial part: only the recurrent matmul remains here.
            z = z_scr[pl.ds(row, Bt), :] + jnp.dot(
                h.astype(mm_dtype), w_hh_T, preferred_element_type=jnp.float32)
            # Each gate occupies a lane-aligned 128-multiple block of z.
            i_g = jax.nn.sigmoid(z[:, 0:Hp])
            f_g = jax.nn.sigmoid(z[:, Hp:2 * Hp])
            g_g = jnp.tanh(z[:, 2 * Hp:3 * Hp])
            o_g = jax.nn.sigmoid(z[:, 3 * Hp:4 * Hp])
            c_new = f_g * c + i_g * g_g
            h_new = o_g * jnp.tanh(c_new)
            if write_seq:
                seq_scr[pl.ds(row, Bt), :] = h_new   # next layer's input sequence
            return h_new, c_new

        h, c = lax.fori_loop(0, Tc, step, (h_scr[layer], c_scr[layer]),
                             unroll=unroll)
        h_scr[layer] = h
        c_scr[layer] = c
        top_h = h

    @pl.when(tc == pl.num_programs(1) - 1)
    def _finalize():
        logits = (jnp.dot(top_h.astype(mm_dtype), fc_w_ref[...],
                          preferred_element_type=jnp.float32) + fc_b_ref[...])
        out_ref[...] = jax.nn.sigmoid(logits)   # lane-dense (Bt, Op) store


def _pad_gate_blocks(w_T, in_pad, H, Hp):
    """(in, 4H) -> (in_pad, 4*Hp); PyTorch gate g (i,f,g,o) lands in cols [g*Hp, g*Hp+H)."""
    in_dim = w_T.shape[0]
    blocks = []
    for g in range(4):
        blk = w_T[:, g * H:(g + 1) * H]
        blocks.append(jnp.pad(blk, ((0, in_pad - in_dim), (0, Hp - H))))
    return jnp.concatenate(blocks, axis=1)


def _pad_gate_bias(bias, H, Hp):
    blocks = [jnp.pad(bias[g * H:(g + 1) * H], (0, Hp - H)) for g in range(4)]
    return jnp.concatenate(blocks).reshape(1, 4 * Hp)


def lstm_classifier_forward(x, lstm_params, fc_w, fc_b, *,
                            time_chunk=None, batch_tile=None,
                            matmul_dtype=jnp.float32):
    """x: (B, T, I) f32, batch-first (same as nn.LSTM(batch_first=True)).
    lstm_params: [(w_ih (4H,in_l), w_hh (4H,H), b_ih (4H,), b_hh (4H,))] per layer.
    fc_w: (O, H), fc_b: (O,). Returns sigmoid(fc(h_top at last step)): (B, O) f32."""
    B, T, I = x.shape
    L = len(lstm_params)
    H = lstm_params[0][1].shape[1]
    O = fc_w.shape[0]
    Hp = _round_up(H, 128)
    Op = _round_up(O, 128)
    Tc = T if time_chunk is None else time_chunk
    Bt = B if batch_tile is None else batch_tile
    if T % Tc != 0 or B % Bt != 0:
        raise ValueError("time_chunk must divide T and batch_tile must divide B")

    # Rearrange x to (batch_tiles, T*Bt, I), time-major within each batch tile,
    # so every grid step DMAs one dense 2D slab (rows ordered (t, batch)).
    x_arr = (x.reshape(B // Bt, Bt, T, I)
              .transpose(0, 2, 1, 3)
              .reshape(B // Bt, T * Bt, I))

    kernel_inputs = [x_arr]
    in_specs = [pl.BlockSpec((1, Tc * Bt, I), lambda b, t: (b, t, 0))]

    for layer, (w_ih, w_hh, b_ih, b_hh) in enumerate(lstm_params):
        in_pad = I if layer == 0 else Hp
        w_ih_T = _pad_gate_blocks(jnp.transpose(w_ih), in_pad, H, Hp).astype(matmul_dtype)
        w_hh_T = _pad_gate_blocks(jnp.transpose(w_hh), Hp, H, Hp).astype(matmul_dtype)
        bias = _pad_gate_bias((b_ih + b_hh).astype(jnp.float32), H, Hp)
        kernel_inputs += [w_ih_T, w_hh_T, bias]
        in_specs += [
            pl.BlockSpec(w_ih_T.shape, lambda b, t: (0, 0)),
            pl.BlockSpec(w_hh_T.shape, lambda b, t: (0, 0)),
            pl.BlockSpec(bias.shape, lambda b, t: (0, 0)),
        ]

    fc_w_T = jnp.pad(jnp.transpose(fc_w), ((0, Hp - H), (0, Op - O))).astype(matmul_dtype)
    fc_b2 = jnp.pad(fc_b.astype(jnp.float32), (0, Op - O)).reshape(1, Op)
    kernel_inputs += [fc_w_T, fc_b2]
    in_specs += [
        pl.BlockSpec(fc_w_T.shape, lambda b, t: (0, 0)),
        pl.BlockSpec(fc_b2.shape, lambda b, t: (0, 0)),
    ]

    # Explicit VMEM budget (important on v7x's 64 MiB parts): weights + x/out blocks
    # (assumed double-buffered by the pipeline) + scratch, with headroom.
    mm_sz = jnp.dtype(matmul_dtype).itemsize
    w_bytes = 0
    for layer in range(L):
        in_pad = I if layer == 0 else Hp
        w_bytes += (in_pad + Hp) * 4 * Hp * mm_sz + 4 * Hp * 4
    w_bytes += Hp * Op * mm_sz + Op * 4
    io_bytes = Tc * Bt * I * 4 + Bt * Op * 4
    scratch_bytes = (2 * L * Bt * Hp + Tc * Bt * Hp + Tc * Bt * 4 * Hp) * 4
    vmem_limit = int(min(max(2 * (w_bytes + io_bytes) + scratch_bytes + (4 << 20),
                             32 << 20), 64 << 20))

    # Fully unroll short recurrences (LLO scheduler visibility); cap for long chunks so
    # compile time / i-cache stay bounded.
    unroll = Tc if Tc <= 16 else 8

    kernel = functools.partial(_lstm_cls_kernel, L, Hp, Tc, Bt, matmul_dtype, unroll)

    out_padded = pl.pallas_call(
        kernel,
        out_shape=jax.ShapeDtypeStruct((B, Op), jnp.float32),
        grid_spec=pltpu.PrefetchScalarGridSpec(
            num_scalar_prefetch=0,
            grid=(B // Bt, T // Tc),
            in_specs=in_specs,
            out_specs=pl.BlockSpec((Bt, Op), lambda b, t: (b, 0)),
            scratch_shapes=[
                pltpu.VMEM((L, Bt, Hp), jnp.float32),        # h state per layer
                pltpu.VMEM((L, Bt, Hp), jnp.float32),        # c state per layer
                pltpu.VMEM((Tc * Bt, Hp), jnp.float32),      # layer output sequence
                pltpu.VMEM((Tc * Bt, 4 * Hp), jnp.float32),  # hoisted input projection
            ],
        ),
        compiler_params=pltpu.CompilerParams(
            dimension_semantics=("parallel", "arbitrary"),
            vmem_limit_bytes=vmem_limit,
        ),
    )(*kernel_inputs)

    return out_padded[:, :O]


def _reference_forward(x, lstm_params, fc_w, fc_b):
    """Pure-JAX reference mirroring torch.nn.LSTM (batch_first) + Linear + sigmoid."""
    B, T, _ = x.shape
    H = lstm_params[0][1].shape[1]
    L = len(lstm_params)
    h = jnp.zeros((L, B, H), jnp.float32)
    c = jnp.zeros((L, B, H), jnp.float32)
    for t in range(T):
        inp = x[:, t, :]
        for l, (w_ih, w_hh, b_ih, b_hh) in enumerate(lstm_params):
            z = inp @ w_ih.T + h[l] @ w_hh.T + b_ih + b_hh
            i_g = jax.nn.sigmoid(z[:, 0:H])
            f_g = jax.nn.sigmoid(z[:, H:2 * H])
            g_g = jnp.tanh(z[:, 2 * H:3 * H])
            o_g = jax.nn.sigmoid(z[:, 3 * H:4 * H])
            c_new = f_g * c[l] + i_g * g_g
            h_new = o_g * jnp.tanh(c_new)
            h = h.at[l].set(h_new)
            c = c.at[l].set(c_new)
            inp = h_new
    return jax.nn.sigmoid(inp @ fc_w.T + fc_b)


if __name__ == "__main__":
    # Small shapes consistent with the module: x is (batch, seq, input_dim).
    B, T, I, H, L, O = 8, 8, 16, 32, 2, 4

    key = jax.random.PRNGKey(0)
    keys = jax.random.split(key, 4 * L + 3)
    bound = 1.0 / math.sqrt(H)  # PyTorch default uniform init bound

    lstm_params = []
    ki = 0
    for layer in range(L):
        in_l = I if layer == 0 else H
        w_ih = jax.random.uniform(keys[ki], (4 * H, in_l), jnp.float32, -bound, bound); ki += 1
        w_hh = jax.random.uniform(keys[ki], (4 * H, H), jnp.float32, -bound, bound); ki += 1
        b_ih = jax.random.uniform(keys[ki], (4 * H,), jnp.float32, -bound, bound); ki += 1
        b_hh = jax.random.uniform(keys[ki], (4 * H,), jnp.float32, -bound, bound); ki += 1
        lstm_params.append((w_ih, w_hh, b_ih, b_hh))

    fc_w = jax.random.uniform(keys[ki], (O, H), jnp.float32, -bound, bound); ki += 1
    fc_b = jax.random.uniform(keys[ki], (O,), jnp.float32, -bound, bound); ki += 1
    x = jax.random.normal(keys[ki], (B, T, I), jnp.float32)

    ref = _reference_forward(x, lstm_params, fc_w, fc_b)

    # 1) Whole sequence in a single grid step (default), f32 matmul operands.
    out = lstm_classifier_forward(x, lstm_params, fc_w, fc_b)
    out = jax.block_until_ready(out)
    np.testing.assert_allclose(np.asarray(out), np.asarray(ref), rtol=1e-5, atol=1e-5)

    # 2) Chunked time + batch tiling (exercises grid=(2,2), state carry across chunks,
    #    and the "parallel" batch axis used by v7x's second TensorCore).
    B2 = 16
    x2 = jax.random.normal(jax.random.PRNGKey(1), (B2, T, I), jnp.float32)
    ref2 = _reference_forward(x2, lstm_params, fc_w, fc_b)
    out2 = lstm_classifier_forward(x2, lstm_params, fc_w, fc_b,
                                   time_chunk=4, batch_tile=8)
    out2 = jax.block_until_ready(out2)
    np.testing.assert_allclose(np.asarray(out2), np.asarray(ref2), rtol=1e-5, atol=1e-5)

    # 3) bf16 MXU operands / f32 accumulate + f32 state (v6e/v7x path), looser tolerance.
    out_bf16 = lstm_classifier_forward(x, lstm_params, fc_w, fc_b,
                                       matmul_dtype=jnp.bfloat16)
    out_bf16 = jax.block_until_ready(out_bf16)
    np.testing.assert_allclose(np.asarray(out_bf16), np.asarray(ref), rtol=5e-2, atol=5e-2)

    print("KERNEL_OK")
</pallas_src>

<mosaic_0001>
module attributes {stable_mosaic.version = 11 : i64} {
  func.func @_lstm_cls_kernel(%arg0: i32, %arg1: i32, %arg2: memref<1x64x16xf32, #tpu.memory_space<vmem>>, %arg3: memref<16x512xf32, #tpu.memory_space<vmem>>, %arg4: memref<128x512xf32, #tpu.memory_space<vmem>>, %arg5: memref<1x512xf32, #tpu.memory_space<vmem>>, %arg6: memref<128x512xf32, #tpu.memory_space<vmem>>, %arg7: memref<128x512xf32, #tpu.memory_space<vmem>>, %arg8: memref<1x512xf32, #tpu.memory_space<vmem>>, %arg9: memref<128x128xf32, #tpu.memory_space<vmem>>, %arg10: memref<1x128xf32, #tpu.memory_space<vmem>>, %arg11: memref<8x128xf32, #tpu.memory_space<vmem>>, %arg12: memref<2x8x128xf32, #tpu.memory_space<vmem>>, %arg13: memref<2x8x128xf32, #tpu.memory_space<vmem>>, %arg14: memref<64x128xf32, #tpu.memory_space<vmem>>, %arg15: memref<64x512xf32, #tpu.memory_space<vmem>>) attributes {dimension_semantics = [#tpu.dimension_semantics<parallel>, #tpu.dimension_semantics<arbitrary>], iteration_bounds = array<i64: 1, 1>, scalar_prefetch = 0 : i64, scratch_operands = 4 : i64, tpu.core_type = #tpu.core_type<tc>, window_params = [{transform_indices = @transform_0, window_bounds = array<i64: 1, 64, 16>}, {pipeline_mode = #tpu.pipeline_mode<synchronous>, transform_indices = @transform_1, window_bounds = array<i64: 16, 512>}, {pipeline_mode = #tpu.pipeline_mode<synchronous>, transform_indices = @transform_2, window_bounds = array<i64: 128, 512>}, {pipeline_mode = #tpu.pipeline_mode<synchronous>, transform_indices = @transform_3, window_bounds = array<i64: 1, 512>}, {pipeline_mode = #tpu.pipeline_mode<synchronous>, transform_indices = @transform_4, window_bounds = array<i64: 128, 512>}, {pipeline_mode = #tpu.pipeline_mode<synchronous>, transform_indices = @transform_5, window_bounds = array<i64: 128, 512>}, {pipeline_mode = #tpu.pipeline_mode<synchronous>, transform_indices = @transform_6, window_bounds = array<i64: 1, 512>}, {pipeline_mode = #tpu.pipeline_mode<synchronous>, transform_indices = @transform_7, window_bounds = array<i64: 128, 128>}, {pipeline_mode = #tpu.pipeline_mode<synchronous>, transform_indices = @transform_8, window_bounds = array<i64: 1, 128>}, {transform_indices = @transform_9, window_bounds = array<i64: 8, 128>}]} {
    %c0_i32 = arith.constant 0 : i32
    %0 = arith.cmpi eq, %arg1, %c0_i32 : i32
    %1 = arith.extui %0 : i1 to i32
    %c0_i32_0 = arith.constant 0 : i32
    %2 = arith.cmpi ne, %1, %c0_i32_0 : i32
    scf.if %2 {
      %cst_161 = arith.constant 0.000000e+00 : f32
      %555 = vector.broadcast %cst_161 : f32 to vector<2x8x128xf32>
      %c0_162 = arith.constant 0 : index
      %c0_163 = arith.constant 0 : index
      %c0_164 = arith.constant 0 : index
      %556 = vector.load %arg12[%c0_162, %c0_163, %c0_164] : memref<2x8x128xf32, #tpu.memory_space<vmem>>, vector<2x8x128xf32>
      tpu.vector_store %arg12[%c0_162, %c0_163, %c0_164], %555 {strides = array<i32>} : memref<2x8x128xf32, #tpu.memory_space<vmem>>, vector<2x8x128xf32>,
      %cst_165 = arith.constant 0.000000e+00 : f32
      %557 = vector.broadcast %cst_165 : f32 to vector<2x8x128xf32>
      %c0_166 = arith.constant 0 : index
      %c0_167 = arith.constant 0 : index
      %c0_168 = arith.constant 0 : index
      %558 = vector.load %arg13[%c0_166, %c0_167, %c0_168] : memref<2x8x128xf32, #tpu.memory_space<vmem>>, vector<2x8x128xf32>
      tpu.vector_store %arg13[%c0_166, %c0_167, %c0_168], %557 {strides = array<i32>} : memref<2x8x128xf32, #tpu.memory_space<vmem>>, vector<2x8x128xf32>,
    } else {
    }
    %c0 = arith.constant 0 : index
    %c0_1 = arith.constant 0 : index
    %3 = vector.load %arg3[%c0, %c0_1] : memref<16x512xf32, #tpu.memory_space<vmem>>, vector<16x512xf32>
    %c0_2 = arith.constant 0 : index
    %c0_3 = arith.constant 0 : index
    %4 = vector.load %arg4[%c0_2, %c0_3] : memref<128x512xf32, #tpu.memory_space<vmem>>, vector<128x512xf32>
    %c0_4 = arith.constant 0 : index
    %c0_5 = arith.constant 0 : index
    %5 = vector.load %arg5[%c0_4, %c0_5] : memref<1x512xf32, #tpu.memory_space<vmem>>, vector<1x512xf32>
    %c0_6 = arith.constant 0 : index
    %c0_7 = arith.constant 0 : index
    %c0_8 = arith.constant 0 : index
    %6 = vector.load %arg2[%c0_6, %c0_7, %c0_8] : memref<1x64x16xf32, #tpu.memory_space<vmem>>, vector<1x64x16xf32>
    %7 = vector.shape_cast %6 : vector<1x64x16xf32> to vector<64x16xf32>
    %cst = arith.constant dense<0.000000e+00> : vector<64x512xf32>
    %8 = tpu.matmul %7, %3, %cst {dimension_numbers = #tpu.dot_dimension_numbers<[1], [0], [0], [1], [0, 0, 1, 1], [], []>} : vector<64x16xf32>, vector<16x512xf32>, vector<64x512xf32> -> vector<64x512xf32>
    %9 = vector.broadcast %5 : vector<1x512xf32> to vector<64x512xf32>
    %10 = arith.addf %8, %9 : vector<64x512xf32>
    %c0_9 = arith.constant 0 : index
    %c0_10 = arith.constant 0 : index
    %11 = vector.load %arg15[%c0_9, %c0_10] : memref<64x512xf32, #tpu.memory_space<vmem>>, vector<64x512xf32>
    tpu.vector_store %arg15[%c0_9, %c0_10], %10 {strides = array<i32>} : memref<64x512xf32, #tpu.memory_space<vmem>>, vector<64x512xf32>,
    %c0_11 = arith.constant 0 : index
    %c0_12 = arith.constant 0 : index
    %c0_13 = arith.constant 0 : index
    %12 = vector.load %arg12[%c0_11, %c0_12, %c0_13] : memref<2x8x128xf32, #tpu.memory_space<vmem>>, vector<1x8x128xf32>
    %13 = vector.shape_cast %12 : vector<1x8x128xf32> to vector<8x128xf32>
    %c0_14 = arith.constant 0 : index
    %c0_15 = arith.constant 0 : index
    %c0_16 = arith.constant 0 : index
    %14 = vector.load %arg13[%c0_14, %c0_15, %c0_16] : memref<2x8x128xf32, #tpu.memory_space<vmem>>, vector<1x8x128xf32>
    %15 = vector.shape_cast %14 : vector<1x8x128xf32> to vector<8x128xf32>
    %c0_i32_17 = arith.constant 0 : i32
    %c8_i32 = arith.constant 8 : i32
    %16 = arith.muli %c0_i32_17, %c8_i32 : i32
    %17 = tpu.assume_multiple %16, 8 : i32
    %18 = arith.index_cast %17 : i32 to index
    %c0_18 = arith.constant 0 : index
    %19 = vector.load %arg15[%18, %c0_18] : memref<64x512xf32, #tpu.memory_space<vmem>>, vector<8x512xf32>
    %cst_19 = arith.constant dense<0.000000e+00> : vector<8x512xf32>
    %20 = tpu.matmul %13, %4, %cst_19 {dimension_numbers = #tpu.dot_dimension_numbers<[1], [0], [0], [1], [0, 0, 1, 1], [], []>} : vector<8x128xf32>, vector<128x512xf32>, vector<8x512xf32> -> vector<8x512xf32>
    %21 = arith.addf %19, %20 : vector<8x512xf32>
    %22 = vector.extract_strided_slice %21 {offsets = [0, 0], sizes = [8, 128], strides = [1, 1]} : vector<8x512xf32> to vector<8x128xf32>
    %23 = arith.negf %22 : vector<8x128xf32>
    %24 = math.exp %23 : vector<8x128xf32>
    %cst_20 = arith.constant 1.000000e+00 : f32
    %25 = vector.broadcast %cst_20 : f32 to vector<8x128xf32>
    %26 = arith.addf %25, %24 : vector<8x128xf32>
    %27 = arith.divf %25, %26 : vector<8x128xf32>
    %28 = vector.extract_strided_slice %21 {offsets = [0, 128], sizes = [8, 128], strides = [1, 1]} : vector<8x512xf32> to vector<8x128xf32>
    %29 = arith.negf %28 : vector<8x128xf32>
    %30 = math.exp %29 : vector<8x128xf32>
    %cst_21 = arith.constant 1.000000e+00 : f32
    %31 = vector.broadcast %cst_21 : f32 to vector<8x128xf32>
    %32 = arith.addf %31, %30 : vector<8x128xf32>
    %33 = arith.divf %31, %32 : vector<8x128xf32>
    %34 = vector.extract_strided_slice %21 {offsets = [0, 256], sizes = [8, 128], strides = [1, 1]} : vector<8x512xf32> to vector<8x128xf32>
    %35 = math.tanh %34 : vector<8x128xf32>
    %36 = vector.extract_strided_slice %21 {offsets = [0, 384], sizes = [8, 128], strides = [1, 1]} : vector<8x512xf32> to vector<8x128xf32>
    %37 = arith.negf %36 : vector<8x128xf32>
    %38 = math.exp %37 : vector<8x128xf32>
    %cst_22 = arith.constant 1.000000e+00 : f32
    %39 = vector.broadcast %cst_22 : f32 to vector<8x128xf32>
    %40 = arith.addf %39, %38 : vector<8x128xf32>
    %41 = arith.divf %39, %40 : vector<8x128xf32>
    %42 = arith.mulf %33, %15 : vector<8x128xf32>
    %43 = arith.mulf %27, %35 : vector<8x128xf32>
    %44 = arith.addf %42, %43 : vector<8x128xf32>
    %45 = math.tanh %44 : vector<8x128xf32>
    %46 = arith.mulf %41, %45 : vector<8x128xf32>
    %47 = arith.index_cast %17 : i32 to index
    %c0_23 = arith.constant 0 : index
    %48 = vector.load %arg14[%47, %c0_23] : memref<64x128xf32, #tpu.memory_space<vmem>>, vector<8x128xf32>
    tpu.vector_store %arg14[%47, %c0_23], %46 {strides = array<i32>} : memref<64x128xf32, #tpu.memory_space<vmem>>, vector<8x128xf32>,
    %c1_i32 = arith.constant 1 : i32
    %c8_i32_24 = arith.constant 8 : i32
    %49 = arith.muli %c1_i32, %c8_i32_24 : i32
    %50 = tpu.assume_multiple %49, 8 : i32
    %51 = arith.index_cast %50 : i32 to index
    %c0_25 = arith.constant 0 : index
    %52 = vector.load %arg15[%51, %c0_25] : memref<64x512xf32, #tpu.memory_space<vmem>>, vector<8x512xf32>
    %cst_26 = arith.constant dense<0.000000e+00> : vector<8x512xf32>
    %53 = tpu.matmul %46, %4, %cst_26 {dimension_numbers = #tpu.dot_dimension_numbers<[1], [0], [0], [1], [0, 0, 1, 1], [], []>} : vector<8x128xf32>, vector<128x512xf32>, vector<8x512xf32> -> vector<8x512xf32>
    %54 = arith.addf %52, %53 : vector<8x512xf32>
    %55 = vector.extract_strided_slice %54 {offsets = [0, 0], sizes = [8, 128], strides = [1, 1]} : vector<8x512xf32> to vector<8x128xf32>
    %56 = arith.negf %55 : vector<8x128xf32>
    %57 = math.exp %56 : vector<8x128xf32>
    %cst_27 = arith.constant 1.000000e+00 : f32
    %58 = vector.broadcast %cst_27 : f32 to vector<8x128xf32>
    %59 = arith.addf %58, %57 : vector<8x128xf32>
    %60 = arith.divf %58, %59 : vector<8x128xf32>
    %61 = vector.extract_strided_slice %54 {offsets = [0, 128], sizes = [8, 128], strides = [1, 1]} : vector<8x512xf32> to vector<8x128xf32>
    %62 = arith.negf %61 : vector<8x128xf32>
    %63 = math.exp %62 : vector<8x128xf32>
    %cst_28 = arith.constant 1.000000e+00 : f32
    %64 = vector.broadcast %cst_28 : f32 to vector<8x128xf32>
    %65 = arith.addf %64, %63 : vector<8x128xf32>
    %66 = arith.divf %64, %65 : vector<8x128xf32>
    %67 = vector.extract_strided_slice %54 {offsets = [0, 256], sizes = [8, 128], strides = [1, 1]} : vector<8x512xf32> to vector<8x128xf32>
    %68 = math.tanh %67 : vector<8x128xf32>
    %69 = vector.extract_strided_slice %54 {offsets = [0, 384], sizes = [8, 128], strides = [1, 1]} : vector<8x512xf32> to vector<8x128xf32>
    %70 = arith.negf %69 : vector<8x128xf32>
    %71 = math.exp %70 : vector<8x128xf32>
    %cst_29 = arith.constant 1.000000e+00 : f32
    %72 = vector.broadcast %cst_29 : f32 to vector<8x128xf32>
    %73 = arith.addf %72, %71 : vector<8x128xf32>
    %74 = arith.divf %72, %73 : vector<8x128xf32>
    %75 = arith.mulf %66, %44 : vector<8x128xf32>
    %76 = arith.mulf %60, %68 : vector<8x128xf32>
    %77 = arith.addf %75, %76 : vector<8x128xf32>
    %78 = math.tanh %77 : vector<8x128xf32>
    %79 = arith.mulf %74, %78 : vector<8x128xf32>
    %80 = arith.index_cast %50 : i32 to index
    %c0_30 = arith.constant 0 : index
    %81 = vector.load %arg14[%80, %c0_30] : memref<64x128xf32, #tpu.memory_space<vmem>>, vector<8x128xf32>
    tpu.vector_store %arg14[%80, %c0_30], %79 {strides = array<i32>} : memref<64x128xf32, #tpu.memory_space<vmem>>, vector<8x128xf32>,
    %c2_i32 = arith.constant 2 : i32
    %c8_i32_31 = arith.constant 8 : i32
    %82 = arith.muli %c2_i32, %c8_i32_31 : i32
    %83 = tpu.assume_multiple %82, 8 : i32
    %84 = arith.index_cast %83 : i32 to index
    %c0_32 = arith.constant 0 : index
    %85 = vector.load %arg15[%84, %c0_32] : memref<64x512xf32, #tpu.memory_space<vmem>>, vector<8x512xf32>
    %cst_33 = arith.constant dense<0.000000e+00> : vector<8x512xf32>
    %86 = tpu.matmul %79, %4, %cst_33 {dimension_numbers = #tpu.dot_dimension_numbers<[1], [0], [0], [1], [0, 0, 1, 1], [], []>} : vector<8x128xf32>, vector<128x512xf32>, vector<8x512xf32> -> vector<8x512xf32>
    %87 = arith.addf %85, %86 : vector<8x512xf32>
    %88 = vector.extract_strided_slice %87 {offsets = [0, 0], sizes = [8, 128], strides = [1, 1]} : vector<8x512xf32> to vector<8x128xf32>
    %89 = arith.negf %88 : vector<8x128xf32>
    %90 = math.exp %89 : vector<8x128xf32>
    %cst_34 = arith.constant 1.000000e+00 : f32
    %91 = vector.broadcast %cst_34 : f32 to vector<8x128xf32>
    %92 = arith.addf %91, %90 : vector<8x128xf32>
    %93 = arith.divf %91, %92 : vector<8x128xf32>
    %94 = vector.extract_strided_slice %87 {offsets = [0, 128], sizes = [8, 128], strides = [1, 1]} : vector<8x512xf32> to vector<8x128xf32>
    %95 = arith.negf %94 : vector<8x128xf32>
    %96 = math.exp %95 : vector<8x128xf32>
    %cst_35 = arith.constant 1.000000e+00 : f32
    %97 = vector.broadcast %cst_35 : f32 to vector<8x128xf32>
    %98 = arith.addf %97, %96 : vector<8x128xf32>
    %99 = arith.divf %97, %98 : vector<8x128xf32>
    %100 = vector.extract_strided_slice %87 {offsets = [0, 256], sizes = [8, 128], strides = [1, 1]} : vector<8x512xf32> to vector<8x128xf32>
    %101 = math.tanh %100 : vector<8x128xf32>
    %102 = vector.extract_strided_slice %87 {offsets = [0, 384], sizes = [8, 128], strides = [1, 1]} : vector<8x512xf32> to vector<8x128xf32>
    %103 = arith.negf %102 : vector<8x128xf32>
    %104 = math.exp %103 : vector<8x128xf32>
    %cst_36 = arith.constant 1.000000e+00 : f32
    %105 = vector.broadcast %cst_36 : f32 to vector<8x128xf32>
    %106 = arith.addf %105, %104 : vector<8x128xf32>
    %107 = arith.divf %105, %106 : vector<8x128xf32>
    %108 = arith.mulf %99, %77 : vector<8x128xf32>
    %109 = arith.mulf %93, %101 : vector<8x128xf32>
    %110 = arith.addf %108, %109 : vector<8x128xf32>
    %111 = math.tanh %110 : vector<8x128xf32>
    %112 = arith.mulf %107, %111 : vector<8x128xf32>
    %113 = arith.index_cast %83 : i32 to index
    %c0_37 = arith.constant 0 : index
    %114 = vector.load %arg14[%113, %c0_37] : memref<64x128xf32, #tpu.memory_space<vmem>>, vector<8x128xf32>
    tpu.vector_store %arg14[%113, %c0_37], %112 {strides = array<i32>} : memref<64x128xf32, #tpu.memory_space<vmem>>, vector<8x128xf32>,
    %c3_i32 = arith.constant 3 : i32
    %c8_i32_38 = arith.constant 8 : i32
    %115 = arith.muli %c3_i32, %c8_i32_38 : i32
    %116 = tpu.assume_multiple %115, 8 : i32
    %117 = arith.index_cast %116 : i32 to index
    %c0_39 = arith.constant 0 : index
    %118 = vector.load %arg15[%117, %c0_39] : memref<64x512xf32, #tpu.memory_space<vmem>>, vector<8x512xf32>
    %cst_40 = arith.constant dense<0.000000e+00> : vector<8x512xf32>
    %119 = tpu.matmul %112, %4, %cst_40 {dimension_numbers = #tpu.dot_dimension_numbers<[1], [0], [0], [1], [0, 0, 1, 1], [], []>} : vector<8x128xf32>, vector<128x512xf32>, vector<8x512xf32> -> vector<8x512xf32>
    %120 = arith.addf %118, %119 : vector<8x512xf32>
    %121 = vector.extract_strided_slice %120 {offsets = [0, 0], sizes = [8, 128], strides = [1, 1]} : vector<8x512xf32> to vector<8x128xf32>
    %122 = arith.negf %121 : vector<8x128xf32>
    %123 = math.exp %122 : vector<8x128xf32>
    %cst_41 = arith.constant 1.000000e+00 : f32
    %124 = vector.broadcast %cst_41 : f32 to vector<8x128xf32>
    %125 = arith.addf %124, %123 : vector<8x128xf32>
    %126 = arith.divf %124, %125 : vector<8x128xf32>
    %127 = vector.extract_strided_slice %120 {offsets = [0, 128], sizes = [8, 128], strides = [1, 1]} : vector<8x512xf32> to vector<8x128xf32>
    %128 = arith.negf %127 : vector<8x128xf32>
    %129 = math.exp %128 : vector<8x128xf32>
    %cst_42 = arith.constant 1.000000e+00 : f32
    %130 = vector.broadcast %cst_42 : f32 to vector<8x128xf32>
    %131 = arith.addf %130, %129 : vector<8x128xf32>
    %132 = arith.divf %130, %131 : vector<8x128xf32>
    %133 = vector.extract_strided_slice %120 {offsets = [0, 256], sizes = [8, 128], strides = [1, 1]} : vector<8x512xf32> to vector<8x128xf32>
    %134 = math.tanh %133 : vector<8x128xf32>
    %135 = vector.extract_strided_slice %120 {offsets = [0, 384], sizes = [8, 128], strides = [1, 1]} : vector<8x512xf32> to vector<8x128xf32>
    %136 = arith.negf %135 : vector<8x128xf32>
    %137 = math.exp %136 : vector<8x128xf32>
    %cst_43 = arith.constant 1.000000e+00 : f32
    %138 = vector.broadcast %cst_43 : f32 to vector<8x128xf32>
    %139 = arith.addf %138, %137 : vector<8x128xf32>
    %140 = arith.divf %138, %139 : vector<8x128xf32>
    %141 = arith.mulf %132, %110 : vector<8x128xf32>
    %142 = arith.mulf %126, %134 : vector<8x128xf32>
    %143 = arith.addf %141, %142 : vector<8x128xf32>
    %144 = math.tanh %143 : vector<8x128xf32>
    %145 = arith.mulf %140, %144 : vector<8x128xf32>
    %146 = arith.index_cast %116 : i32 to index
    %c0_44 = arith.constant 0 : index
    %147 = vector.load %arg14[%146, %c0_44] : memref<64x128xf32, #tpu.memory_space<vmem>>, vector<8x128xf32>
    tpu.vector_store %arg14[%146, %c0_44], %145 {strides = array<i32>} : memref<64x128xf32, #tpu.memory_space<vmem>>, vector<8x128xf32>,
    %c4_i32 = arith.constant 4 : i32
    %c8_i32_45 = arith.constant 8 : i32
    %148 = arith.muli %c4_i32, %c8_i32_45 : i32
    %149 = tpu.assume_multiple %148, 8 : i32
    %150 = arith.index_cast %149 : i32 to index
    %c0_46 = arith.constant 0 : index
    %151 = vector.load %arg15[%150, %c0_46] : memref<64x512xf32, #tpu.memory_space<vmem>>, vector<8x512xf32>
    %cst_47 = arith.constant dense<0.000000e+00> : vector<8x512xf32>
    %152 = tpu.matmul %145, %4, %cst_47 {dimension_numbers = #tpu.dot_dimension_numbers<[1], [0], [0], [1], [0, 0, 1, 1], [], []>} : vector<8x128xf32>, vector<128x512xf32>, vector<8x512xf32> -> vector<8x512xf32>
    %153 = arith.addf %151, %152 : vector<8x512xf32>
    %154 = vector.extract_strided_slice %153 {offsets = [0, 0], sizes = [8, 128], strides = [1, 1]} : vector<8x512xf32> to vector<8x128xf32>
    %155 = arith.negf %154 : vector<8x128xf32>
    %156 = math.exp %155 : vector<8x128xf32>
    %cst_48 = arith.constant 1.000000e+00 : f32
    %157 = vector.broadcast %cst_48 : f32 to vector<8x128xf32>
    %158 = arith.addf %157, %156 : vector<8x128xf32>
    %159 = arith.divf %157, %158 : vector<8x128xf32>
    %160 = vector.extract_strided_slice %153 {offsets = [0, 128], sizes = [8, 128], strides = [1, 1]} : vector<8x512xf32> to vector<8x128xf32>
    %161 = arith.negf %160 : vector<8x128xf32>
    %162 = math.exp %161 : vector<8x128xf32>
    %cst_49 = arith.constant 1.000000e+00 : f32
    %163 = vector.broadcast %cst_49 : f32 to vector<8x128xf32>
    %164 = arith.addf %163, %162 : vector<8x128xf32>
    %165 = arith.divf %163, %164 : vector<8x128xf32>
    %166 = vector.extract_strided_slice %153 {offsets = [0, 256], sizes = [8, 128], strides = [1, 1]} : vector<8x512xf32> to vector<8x128xf32>
    %167 = math.tanh %166 : vector<8x128xf32>
    %168 = vector.extract_strided_slice %153 {offsets = [0, 384], sizes = [8, 128], strides = [1, 1]} : vector<8x512xf32> to vector<8x128xf32>
    %169 = arith.negf %168 : vector<8x128xf32>
    %170 = math.exp %169 : vector<8x128xf32>
    %cst_50 = arith.constant 1.000000e+00 : f32
    %171 = vector.broadcast %cst_50 : f32 to vector<8x128xf32>
    %172 = arith.addf %171, %170 : vector<8x128xf32>
    %173 = arith.divf %171, %172 : vector<8x128xf32>
    %174 = arith.mulf %165, %143 : vector<8x128xf32>
    %175 = arith.mulf %159, %167 : vector<8x128xf32>
    %176 = arith.addf %174, %175 : vector<8x128xf32>
    %177 = math.tanh %176 : vector<8x128xf32>
    %178 = arith.mulf %173, %177 : vector<8x128xf32>
    %179 = arith.index_cast %149 : i32 to index
    %c0_51 = arith.constant 0 : index
    %180 = vector.load %arg14[%179, %c0_51] : memref<64x128xf32, #tpu.memory_space<vmem>>, vector<8x128xf32>
    tpu.vector_store %arg14[%179, %c0_51], %178 {strides = array<i32>} : memref<64x128xf32, #tpu.memory_space<vmem>>, vector<8x128xf32>,
    %c5_i32 = arith.constant 5 : i32
    %c8_i32_52 = arith.constant 8 : i32
    %181 = arith.muli %c5_i32, %c8_i32_52 : i32
    %182 = tpu.assume_multiple %181, 8 : i32
    %183 = arith.index_cast %182 : i32 to index
    %c0_53 = arith.constant 0 : index
    %184 = vector.load %arg15[%183, %c0_53] : memref<64x512xf32, #tpu.memory_space<vmem>>, vector<8x512xf32>
    %cst_54 = arith.constant dense<0.000000e+00> : vector<8x512xf32>
    %185 = tpu.matmul %178, %4, %cst_54 {dimension_numbers = #tpu.dot_dimension_numbers<[1], [0], [0], [1], [0, 0, 1, 1], [], []>} : vector<8x128xf32>, vector<128x512xf32>, vector<8x512xf32> -> vector<8x512xf32>
    %186 = arith.addf %184, %185 : vector<8x512xf32>
    %187 = vector.extract_strided_slice %186 {offsets = [0, 0], sizes = [8, 128], strides = [1, 1]} : vector<8x512xf32> to vector<8x128xf32>
    %188 = arith.negf %187 : vector<8x128xf32>
    %189 = math.exp %188 : vector<8x128xf32>
    %cst_55 = arith.constant 1.000000e+00 : f32
    %190 = vector.broadcast %cst_55 : f32 to vector<8x128xf32>
    %191 = arith.addf %190, %189 : vector<8x128xf32>
    %192 = arith.divf %190, %191 : vector<8x128xf32>
    %193 = vector.extract_strided_slice %186 {offsets = [0, 128], sizes = [8, 128], strides = [1, 1]} : vector<8x512xf32> to vector<8x128xf32>
    %194 = arith.negf %193 : vector<8x128xf32>
    %195 = math.exp %194 : vector<8x128xf32>
    %cst_56 = arith.constant 1.000000e+00 : f32
    %196 = vector.broadcast %cst_56 : f32 to vector<8x128xf32>
    %197 = arith.addf %196, %195 : vector<8x128xf32>
    %198 = arith.divf %196, %197 : vector<8x128xf32>
    %199 = vector.extract_strided_slice %186 {offsets = [0, 256], sizes = [8, 128], strides = [1, 1]} : vector<8x512xf32> to vector<8x128xf32>
    %200 = math.tanh %199 : vector<8x128xf32>
    %201 = vector.extract_strided_slice %186 {offsets = [0, 384], sizes = [8, 128], strides = [1, 1]} : vector<8x512xf32> to vector<8x128xf32>
    %202 = arith.negf %201 : vector<8x128xf32>
    %203 = math.exp %202 : vector<8x128xf32>
    %cst_57 = arith.constant 1.000000e+00 : f32
    %204 = vector.broadcast %cst_57 : f32 to vector<8x128xf32>
    %205 = arith.addf %204, %203 : vector<8x128xf32>
    %206 = arith.divf %204, %205 : vector<8x128xf32>
    %207 = arith.mulf %198, %176 : vector<8x128xf32>
    %208 = arith.mulf %192, %200 : vector<8x128xf32>
    %209 = arith.addf %207, %208 : vector<8x128xf32>
    %210 = math.tanh %209 : vector<8x128xf32>
    %211 = arith.mulf %206, %210 : vector<8x128xf32>
    %212 = arith.index_cast %182 : i32 to index
    %c0_58 = arith.constant 0 : index
    %213 = vector.load %arg14[%212, %c0_58] : memref<64x128xf32, #tpu.memory_space<vmem>>, vector<8x128xf32>
    tpu.vector_store %arg14[%212, %c0_58], %211 {strides = array<i32>} : memref<64x128xf32, #tpu.memory_space<vmem>>, vector<8x128xf32>,
    %c6_i32 = arith.constant 6 : i32
    %c8_i32_59 = arith.constant 8 : i32
    %214 = arith.muli %c6_i32, %c8_i32_59 : i32
    %215 = tpu.assume_multiple %214, 8 : i32
    %216 = arith.index_cast %215 : i32 to index
    %c0_60 = arith.constant 0 : index
    %217 = vector.load %arg15[%216, %c0_60] : memref<64x512xf32, #tpu.memory_space<vmem>>, vector<8x512xf32>
    %cst_61 = arith.constant dense<0.000000e+00> : vector<8x512xf32>
    %218 = tpu.matmul %211, %4, %cst_61 {dimension_numbers = #tpu.dot_dimension_numbers<[1], [0], [0], [1], [0, 0, 1, 1], [], []>} : vector<8x128xf32>, vector<128x512xf32>, vector<8x512xf32> -> vector<8x512xf32>
    %219 = arith.addf %217, %218 : vector<8x512xf32>
    %220 = vector.extract_strided_slice %219 {offsets = [0, 0], sizes = [8, 128], strides = [1, 1]} : vector<8x512xf32> to vector<8x128xf32>
    %221 = arith.negf %220 : vector<8x128xf32>
    %222 = math.exp %221 : vector<8x128xf32>
    %cst_62 = arith.constant 1.000000e+00 : f32
    %223 = vector.broadcast %cst_62 : f32 to vector<8x128xf32>
    %224 = arith.addf %223, %222 : vector<8x128xf32>
    %225 = arith.divf %223, %224 : vector<8x128xf32>
    %226 = vector.extract_strided_slice %219 {offsets = [0, 128], sizes = [8, 128], strides = [1, 1]} : vector<8x512xf32> to vector<8x128xf32>
    %227 = arith.negf %226 : vector<8x128xf32>
    %228 = math.exp %227 : vector<8x128xf32>
    %cst_63 = arith.constant 1.000000e+00 : f32
    %229 = vector.broadcast %cst_63 : f32 to vector<8x128xf32>
    %230 = arith.addf %229, %228 : vector<8x128xf32>
    %231 = arith.divf %229, %230 : vector<8x128xf32>
    %232 = vector.extract_strided_slice %219 {offsets = [0, 256], sizes = [8, 128], strides = [1, 1]} : vector<8x512xf32> to vector<8x128xf32>
    %233 = math.tanh %232 : vector<8x128xf32>
    %234 = vector.extract_strided_slice %219 {offsets = [0, 384], sizes = [8, 128], strides = [1, 1]} : vector<8x512xf32> to vector<8x128xf32>
    %235 = arith.negf %234 : vector<8x128xf32>
    %236 = math.exp %235 : vector<8x128xf32>
    %cst_64 = arith.constant 1.000000e+00 : f32
    %237 = vector.broadcast %cst_64 : f32 to vector<8x128xf32>
    %238 = arith.addf %237, %236 : vector<8x128xf32>
    %239 = arith.divf %237, %238 : vector<8x128xf32>
    %240 = arith.mulf %231, %209 : vector<8x128xf32>
    %241 = arith.mulf %225, %233 : vector<8x128xf32>
    %242 = arith.addf %240, %241 : vector<8x128xf32>
    %243 = math.tanh %242 : vector<8x128xf32>
    %244 = arith.mulf %239, %243 : vector<8x128xf32>
    %245 = arith.index_cast %215 : i32 to index
    %c0_65 = arith.constant 0 : index
    %246 = vector.load %arg14[%245, %c0_65] : memref<64x128xf32, #tpu.memory_space<vmem>>, vector<8x128xf32>
    tpu.vector_store %arg14[%245, %c0_65], %244 {strides = array<i32>} : memref<64x128xf32, #tpu.memory_space<vmem>>, vector<8x128xf32>,
    %c7_i32 = arith.constant 7 : i32
    %c8_i32_66 = arith.constant 8 : i32
    %247 = arith.muli %c7_i32, %c8_i32_66 : i32
    %248 = tpu.assume_multiple %247, 8 : i32
    %249 = arith.index_cast %248 : i32 to index
    %c0_67 = arith.constant 0 : index
    %250 = vector.load %arg15[%249, %c0_67] : memref<64x512xf32, #tpu.memory_space<vmem>>, vector<8x512xf32>
    %cst_68 = arith.constant dense<0.000000e+00> : vector<8x512xf32>
    %251 = tpu.matmul %244, %4, %cst_68 {dimension_numbers = #tpu.dot_dimension_numbers<[1], [0], [0], [1], [0, 0, 1, 1], [], []>} : vector<8x128xf32>, vector<128x512xf32>, vector<8x512xf32> -> vector<8x512xf32>
    %252 = arith.addf %250, %251 : vector<8x512xf32>
    %253 = vector.extract_strided_slice %252 {offsets = [0, 0], sizes = [8, 128], strides = [1, 1]} : vector<8x512xf32> to vector<8x128xf32>
    %254 = arith.negf %253 : vector<8x128xf32>
    %255 = math.exp %254 : vector<8x128xf32>
    %cst_69 = arith.constant 1.000000e+00 : f32
    %256 = vector.broadcast %cst_69 : f32 to vector<8x128xf32>
    %257 = arith.addf %256, %255 : vector<8x128xf32>
    %258 = arith.divf %256, %257 : vector<8x128xf32>
    %259 = vector.extract_strided_slice %252 {offsets = [0, 128], sizes = [8, 128], strides = [1, 1]} : vector<8x512xf32> to vector<8x128xf32>
    %260 = arith.negf %259 : vector<8x128xf32>
    %261 = math.exp %260 : vector<8x128xf32>
    %cst_70 = arith.constant 1.000000e+00 : f32
    %262 = vector.broadcast %cst_70 : f32 to vector<8x128xf32>
    %263 = arith.addf %262, %261 : vector<8x128xf32>
    %264 = arith.divf %262, %263 : vector<8x128xf32>
    %265 = vector.extract_strided_slice %252 {offsets = [0, 256], sizes = [8, 128], strides = [1, 1]} : vector<8x512xf32> to vector<8x128xf32>
    %266 = math.tanh %265 : vector<8x128xf32>
    %267 = vector.extract_strided_slice %252 {offsets = [0, 384], sizes = [8, 128], strides = [1, 1]} : vector<8x512xf32> to vector<8x128xf32>
    %268 = arith.negf %267 : vector<8x128xf32>
    %269 = math.exp %268 : vector<8x128xf32>
    %cst_71 = arith.constant 1.000000e+00 : f32
    %270 = vector.broadcast %cst_71 : f32 to vector<8x128xf32>
    %271 = arith.addf %270, %269 : vector<8x128xf32>
    %272 = arith.divf %270, %271 : vector<8x128xf32>
    %273 = arith.mulf %264, %242 : vector<8x128xf32>
    %274 = arith.mulf %258, %266 : vector<8x128xf32>
    %275 = arith.addf %273, %274 : vector<8x128xf32>
    %276 = math.tanh %275 : vector<8x128xf32>
    %277 = arith.mulf %272, %276 : vector<8x128xf32>
    %278 = arith.index_cast %248 : i32 to index
    %c0_72 = arith.constant 0 : index
    %279 = vector.load %arg14[%278, %c0_72] : memref<64x128xf32, #tpu.memory_space<vmem>>, vector<8x128xf32>
    tpu.vector_store %arg14[%278, %c0_72], %277 {strides = array<i32>} : memref<64x128xf32, #tpu.memory_space<vmem>>, vector<8x128xf32>,
    %c8_i32_73 = arith.constant 8 : i32
    %c0_74 = arith.constant 0 : index
    %c0_75 = arith.constant 0 : index
    %c0_76 = arith.constant 0 : index
    %280 = vector.load %arg12[%c0_74, %c0_75, %c0_76] : memref<2x8x128xf32, #tpu.memory_space<vmem>>, vector<1x8x128xf32>
    %281 = vector.shape_cast %280 : vector<1x8x128xf32> to vector<8x128xf32>
    %282 = vector.shape_cast %277 : vector<8x128xf32> to vector<1x8x128xf32>
    tpu.vector_store %arg12[%c0_74, %c0_75, %c0_76], %282 {strides = array<i32>} : memref<2x8x128xf32, #tpu.memory_space<vmem>>, vector<1x8x128xf32>,
    %c0_77 = arith.constant 0 : index
    %c0_78 = arith.constant 0 : index
    %c0_79 = arith.constant 0 : index
    %283 = vector.load %arg13[%c0_77, %c0_78, %c0_79] : memref<2x8x128xf32, #tpu.memory_space<vmem>>, vector<1x8x128xf32>
    %284 = vector.shape_cast %283 : vector<1x8x128xf32> to vector<8x128xf32>
    %285 = vector.shape_cast %275 : vector<8x128xf32> to vector<1x8x128xf32>
    tpu.vector_store %arg13[%c0_77, %c0_78, %c0_79], %285 {strides = array<i32>} : memref<2x8x128xf32, #tpu.memory_space<vmem>>, vector<1x8x128xf32>,
    %c0_80 = arith.constant 0 : index
    %c0_81 = arith.constant 0 : index
    %286 = vector.load %arg6[%c0_80, %c0_81] : memref<128x512xf32, #tpu.memory_space<vmem>>, vector<128x512xf32>
    %c0_82 = arith.constant 0 : index
    %c0_83 = arith.constant 0 : index
    %287 = vector.load %arg7[%c0_82, %c0_83] : memref<128x512xf32, #tpu.memory_space<vmem>>, vector<128x512xf32>
    %c0_84 = arith.constant 0 : index
    %c0_85 = arith.constant 0 : index
    %288 = vector.load %arg8[%c0_84, %c0_85] : memref<1x512xf32, #tpu.memory_space<vmem>>, vector<1x512xf32>
    %c0_86 = arith.constant 0 : index
    %c0_87 = arith.constant 0 : index
    %289 = vector.load %arg14[%c0_86, %c0_87] : memref<64x128xf32, #tpu.memory_space<vmem>>, vector<64x128xf32>
    %cst_88 = arith.constant dense<0.000000e+00> : vector<64x512xf32>
    %290 = tpu.matmul %289, %286, %cst_88 {dimension_numbers = #tpu.dot_dimension_numbers<[1], [0], [0], [1], [0, 0, 1, 1], [], []>} : vector<64x128xf32>, vector<128x512xf32>, vector<64x512xf32> -> vector<64x512xf32>
    %291 = vector.broadcast %288 : vector<1x512xf32> to vector<64x512xf32>
    %292 = arith.addf %290, %291 : vector<64x512xf32>
    %c0_89 = arith.constant 0 : index
    %c0_90 = arith.constant 0 : index
    %293 = vector.load %arg15[%c0_89, %c0_90] : memref<64x512xf32, #tpu.memory_space<vmem>>, vector<64x512xf32>
    tpu.vector_store %arg15[%c0_89, %c0_90], %292 {strides = array<i32>} : memref<64x512xf32, #tpu.memory_space<vmem>>, vector<64x512xf32>,
    %c1 = arith.constant 1 : index
    %c0_91 = arith.constant 0 : index
    %c0_92 = arith.constant 0 : index
    %294 = vector.load %arg12[%c1, %c0_91, %c0_92] : memref<2x8x128xf32, #tpu.memory_space<vmem>>, vector<1x8x128xf32>
    %295 = vector.shape_cast %294 : vector<1x8x128xf32> to vector<8x128xf32>
    %c1_93 = arith.constant 1 : index
    %c0_94 = arith.constant 0 : index
    %c0_95 = arith.constant 0 : index
    %296 = vector.load %arg13[%c1_93, %c0_94, %c0_95] : memref<2x8x128xf32, #tpu.memory_space<vmem>>, vector<1x8x128xf32>
    %297 = vector.shape_cast %296 : vector<1x8x128xf32> to vector<8x128xf32>
    %c0_i32_96 = arith.constant 0 : i32
    %c8_i32_97 = arith.constant 8 : i32
    %298 = arith.muli %c0_i32_96, %c8_i32_97 : i32
    %299 = tpu.assume_multiple %298, 8 : i32
    %300 = arith.index_cast %299 : i32 to index
    %c0_98 = arith.constant 0 : index
    %301 = vector.load %arg15[%300, %c0_98] : memref<64x512xf32, #tpu.memory_space<vmem>>, vector<8x512xf32>
    %cst_99 = arith.constant dense<0.000000e+00> : vector<8x512xf32>
    %302 = tpu.matmul %295, %287, %cst_99 {dimension_numbers = #tpu.dot_dimension_numbers<[1], [0], [0], [1], [0, 0, 1, 1], [], []>} : vector<8x128xf32>, vector<128x512xf32>, vector<8x512xf32> -> vector<8x512xf32>
    %303 = arith.addf %301, %302 : vector<8x512xf32>
    %304 = vector.extract_strided_slice %303 {offsets = [0, 0], sizes = [8, 128], strides = [1, 1]} : vector<8x512xf32> to vector<8x128xf32>
    %305 = arith.negf %304 : vector<8x128xf32>
    %306 = math.exp %305 : vector<8x128xf32>
    %cst_100 = arith.constant 1.000000e+00 : f32
    %307 = vector.broadcast %cst_100 : f32 to vector<8x128xf32>
    %308 = arith.addf %307, %306 : vector<8x128xf32>
    %309 = arith.divf %307, %308 : vector<8x128xf32>
    %310 = vector.extract_strided_slice %303 {offsets = [0, 128], sizes = [8, 128], strides = [1, 1]} : vector<8x512xf32> to vector<8x128xf32>
    %311 = arith.negf %310 : vector<8x128xf32>
    %312 = math.exp %311 : vector<8x128xf32>
    %cst_101 = arith.constant 1.000000e+00 : f32
    %313 = vector.broadcast %cst_101 : f32 to vector<8x128xf32>
    %314 = arith.addf %313, %312 : vector<8x128xf32>
    %315 = arith.divf %313, %314 : vector<8x128xf32>
    %316 = vector.extract_strided_slice %303 {offsets = [0, 256], sizes = [8, 128], strides = [1, 1]} : vector<8x512xf32> to vector<8x128xf32>
    %317 = math.tanh %316 : vector<8x128xf32>
    %318 = vector.extract_strided_slice %303 {offsets = [0, 384], sizes = [8, 128], strides = [1, 1]} : vector<8x512xf32> to vector<8x128xf32>
    %319 = arith.negf %318 : vector<8x128xf32>
    %320 = math.exp %319 : vector<8x128xf32>
    %cst_102 = arith.constant 1.000000e+00 : f32
    %321 = vector.broadcast %cst_102 : f32 to vector<8x128xf32>
    %322 = arith.addf %321, %320 : vector<8x128xf32>
    %323 = arith.divf %321, %322 : vector<8x128xf32>
    %324 = arith.mulf %315, %297 : vector<8x128xf32>
    %325 = arith.mulf %309, %317 : vector<8x128xf32>
    %326 = arith.addf %324, %325 : vector<8x128xf32>
    %327 = math.tanh %326 : vector<8x128xf32>
    %328 = arith.mulf %323, %327 : vector<8x128xf32>
    %c1_i32_103 = arith.constant 1 : i32
    %c8_i32_104 = arith.constant 8 : i32
    %329 = arith.muli %c1_i32_103, %c8_i32_104 : i32
    %330 = tpu.assume_multiple %329, 8 : i32
    %331 = arith.index_cast %330 : i32 to index
    %c0_105 = arith.constant 0 : index
    %332 = vector.load %arg15[%331, %c0_105] : memref<64x512xf32, #tpu.memory_space<vmem>>, vector<8x512xf32>
    %cst_106 = arith.constant dense<0.000000e+00> : vector<8x512xf32>
    %333 = tpu.matmul %328, %287, %cst_106 {dimension_numbers = #tpu.dot_dimension_numbers<[1], [0], [0], [1], [0, 0, 1, 1], [], []>} : vector<8x128xf32>, vector<128x512xf32>, vector<8x512xf32> -> vector<8x512xf32>
    %334 = arith.addf %332, %333 : vector<8x512xf32>
    %335 = vector.extract_strided_slice %334 {offsets = [0, 0], sizes = [8, 128], strides = [1, 1]} : vector<8x512xf32> to vector<8x128xf32>
    %336 = arith.negf %335 : vector<8x128xf32>
    %337 = math.exp %336 : vector<8x128xf32>
    %cst_107 = arith.constant 1.000000e+00 : f32
    %338 = vector.broadcast %cst_107 : f32 to vector<8x128xf32>
    %339 = arith.addf %338, %337 : vector<8x128xf32>
    %340 = arith.divf %338, %339 : vector<8x128xf32>
    %341 = vector.extract_strided_slice %334 {offsets = [0, 128], sizes = [8, 128], strides = [1, 1]} : vector<8x512xf32> to vector<8x128xf32>
    %342 = arith.negf %341 : vector<8x128xf32>
    %343 = math.exp %342 : vector<8x128xf32>
    %cst_108 = arith.constant 1.000000e+00 : f32
    %344 = vector.broadcast %cst_108 : f32 to vector<8x128xf32>
    %345 = arith.addf %344, %343 : vector<8x128xf32>
    %346 = arith.divf %344, %345 : vector<8x128xf32>
    %347 = vector.extract_strided_slice %334 {offsets = [0, 256], sizes = [8, 128], strides = [1, 1]} : vector<8x512xf32> to vector<8x128xf32>
    %348 = math.tanh %347 : vector<8x128xf32>
    %349 = vector.extract_strided_slice %334 {offsets = [0, 384], sizes = [8, 128], strides = [1, 1]} : vector<8x512xf32> to vector<8x128xf32>
    %350 = arith.negf %349 : vector<8x128xf32>
    %351 = math.exp %350 : vector<8x128xf32>
    %cst_109 = arith.constant 1.000000e+00 : f32
    %352 = vector.broadcast %cst_109 : f32 to vector<8x128xf32>
    %353 = arith.addf %352, %351 : vector<8x128xf32>
    %354 = arith.divf %352, %353 : vector<8x128xf32>
    %355 = arith.mulf %346, %326 : vector<8x128xf32>
    %356 = arith.mulf %340, %348 : vector<8x128xf32>
    %357 = arith.addf %355, %356 : vector<8x128xf32>
    %358 = math.tanh %357 : vector<8x128xf32>
    %359 = arith.mulf %354, %358 : vector<8x128xf32>
    %c2_i32_110 = arith.constant 2 : i32
    %c8_i32_111 = arith.constant 8 : i32
    %360 = arith.muli %c2_i32_110, %c8_i32_111 : i32
    %361 = tpu.assume_multiple %360, 8 : i32
    %362 = arith.index_cast %361 : i32 to index
    %c0_112 = arith.constant 0 : index
    %363 = vector.load %arg15[%362, %c0_112] : memref<64x512xf32, #tpu.memory_space<vmem>>, vector<8x512xf32>
    %cst_113 = arith.constant dense<0.000000e+00> : vector<8x512xf32>
    %364 = tpu.matmul %359, %287, %cst_113 {dimension_numbers = #tpu.dot_dimension_numbers<[1], [0], [0], [1], [0, 0, 1, 1], [], []>} : vector<8x128xf32>, vector<128x512xf32>, vector<8x512xf32> -> vector<8x512xf32>
    %365 = arith.addf %363, %364 : vector<8x512xf32>
    %366 = vector.extract_strided_slice %365 {offsets = [0, 0], sizes = [8, 128], strides = [1, 1]} : vector<8x512xf32> to vector<8x128xf32>
    %367 = arith.negf %366 : vector<8x128xf32>
    %368 = math.exp %367 : vector<8x128xf32>
    %cst_114 = arith.constant 1.000000e+00 : f32
    %369 = vector.broadcast %cst_114 : f32 to vector<8x128xf32>
    %370 = arith.addf %369, %368 : vector<8x128xf32>
    %371 = arith.divf %369, %370 : vector<8x128xf32>
    %372 = vector.extract_strided_slice %365 {offsets = [0, 128], sizes = [8, 128], strides = [1, 1]} : vector<8x512xf32> to vector<8x128xf32>
    %373 = arith.negf %372 : vector<8x128xf32>
    %374 = math.exp %373 : vector<8x128xf32>
    %cst_115 = arith.constant 1.000000e+00 : f32
    %375 = vector.broadcast %cst_115 : f32 to vector<8x128xf32>
    %376 = arith.addf %375, %374 : vector<8x128xf32>
    %377 = arith.divf %375, %376 : vector<8x128xf32>
    %378 = vector.extract_strided_slice %365 {offsets = [0, 256], sizes = [8, 128], strides = [1, 1]} : vector<8x512xf32> to vector<8x128xf32>
    %379 = math.tanh %378 : vector<8x128xf32>
    %380 = vector.extract_strided_slice %365 {offsets = [0, 384], sizes = [8, 128], strides = [1, 1]} : vector<8x512xf32> to vector<8x128xf32>
    %381 = arith.negf %380 : vector<8x128xf32>
    %382 = math.exp %381 : vector<8x128xf32>
    %cst_116 = arith.constant 1.000000e+00 : f32
    %383 = vector.broadcast %cst_116 : f32 to vector<8x128xf32>
    %384 = arith.addf %383, %382 : vector<8x128xf32>
    %385 = arith.divf %383, %384 : vector<8x128xf32>
    %386 = arith.mulf %377, %357 : vector<8x128xf32>
    %387 = arith.mulf %371, %379 : vector<8x128xf32>
    %388 = arith.addf %386, %387 : vector<8x128xf32>
    %389 = math.tanh %388 : vector<8x128xf32>
    %390 = arith.mulf %385, %389 : vector<8x128xf32>
    %c3_i32_117 = arith.constant 3 : i32
    %c8_i32_118 = arith.constant 8 : i32
    %391 = arith.muli %c3_i32_117, %c8_i32_118 : i32
    %392 = tpu.assume_multiple %391, 8 : i32
    %393 = arith.index_cast %392 : i32 to index
    %c0_119 = arith.constant 0 : index
    %394 = vector.load %arg15[%393, %c0_119] : memref<64x512xf32, #tpu.memory_space<vmem>>, vector<8x512xf32>
    %cst_120 = arith.constant dense<0.000000e+00> : vector<8x512xf32>
    %395 = tpu.matmul %390, %287, %cst_120 {dimension_numbers = #tpu.dot_dimension_numbers<[1], [0], [0], [1], [0, 0, 1, 1], [], []>} : vector<8x128xf32>, vector<128x512xf32>, vector<8x512xf32> -> vector<8x512xf32>
    %396 = arith.addf %394, %395 : vector<8x512xf32>
    %397 = vector.extract_strided_slice %396 {offsets = [0, 0], sizes = [8, 128], strides = [1, 1]} : vector<8x512xf32> to vector<8x128xf32>
    %398 = arith.negf %397 : vector<8x128xf32>
    %399 = math.exp %398 : vector<8x128xf32>
    %cst_121 = arith.constant 1.000000e+00 : f32
    %400 = vector.broadcast %cst_121 : f32 to vector<8x128xf32>
    %401 = arith.addf %400, %399 : vector<8x128xf32>
    %402 = arith.divf %400, %401 : vector<8x128xf32>
    %403 = vector.extract_strided_slice %396 {offsets = [0, 128], sizes = [8, 128], strides = [1, 1]} : vector<8x512xf32> to vector<8x128xf32>
    %404 = arith.negf %403 : vector<8x128xf32>
    %405 = math.exp %404 : vector<8x128xf32>
    %cst_122 = arith.constant 1.000000e+00 : f32
    %406 = vector.broadcast %cst_122 : f32 to vector<8x128xf32>
    %407 = arith.addf %406, %405 : vector<8x128xf32>
    %408 = arith.divf %406, %407 : vector<8x128xf32>
    %409 = vector.extract_strided_slice %396 {offsets = [0, 256], sizes = [8, 128], strides = [1, 1]} : vector<8x512xf32> to vector<8x128xf32>
    %410 = math.tanh %409 : vector<8x128xf32>
    %411 = vector.extract_strided_slice %396 {offsets = [0, 384], sizes = [8, 128], strides = [1, 1]} : vector<8x512xf32> to vector<8x128xf32>
    %412 = arith.negf %411 : vector<8x128xf32>
    %413 = math.exp %412 : vector<8x128xf32>
    %cst_123 = arith.constant 1.000000e+00 : f32
    %414 = vector.broadcast %cst_123 : f32 to vector<8x128xf32>
    %415 = arith.addf %414, %413 : vector<8x128xf32>
    %416 = arith.divf %414, %415 : vector<8x128xf32>
    %417 = arith.mulf %408, %388 : vector<8x128xf32>
    %418 = arith.mulf %402, %410 : vector<8x128xf32>
    %419 = arith.addf %417, %418 : vector<8x128xf32>
    %420 = math.tanh %419 : vector<8x128xf32>
    %421 = arith.mulf %416, %420 : vector<8x128xf32>
    %c4_i32_124 = arith.constant 4 : i32
    %c8_i32_125 = arith.constant 8 : i32
    %422 = arith.muli %c4_i32_124, %c8_i32_125 : i32
    %423 = tpu.assume_multiple %422, 8 : i32
    %424 = arith.index_cast %423 : i32 to index
    %c0_126 = arith.constant 0 : index
    %425 = vector.load %arg15[%424, %c0_126] : memref<64x512xf32, #tpu.memory_space<vmem>>, vector<8x512xf32>
    %cst_127 = arith.constant dense<0.000000e+00> : vector<8x512xf32>
    %426 = tpu.matmul %421, %287, %cst_127 {dimension_numbers = #tpu.dot_dimension_numbers<[1], [0], [0], [1], [0, 0, 1, 1], [], []>} : vector<8x128xf32>, vector<128x512xf32>, vector<8x512xf32> -> vector<8x512xf32>
    %427 = arith.addf %425, %426 : vector<8x512xf32>
    %428 = vector.extract_strided_slice %427 {offsets = [0, 0], sizes = [8, 128], strides = [1, 1]} : vector<8x512xf32> to vector<8x128xf32>
    %429 = arith.negf %428 : vector<8x128xf32>
    %430 = math.exp %429 : vector<8x128xf32>
    %cst_128 = arith.constant 1.000000e+00 : f32
    %431 = vector.broadcast %cst_128 : f32 to vector<8x128xf32>
    %432 = arith.addf %431, %430 : vector<8x128xf32>
    %433 = arith.divf %431, %432 : vector<8x128xf32>
    %434 = vector.extract_strided_slice %427 {offsets = [0, 128], sizes = [8, 128], strides = [1, 1]} : vector<8x512xf32> to vector<8x128xf32>
    %435 = arith.negf %434 : vector<8x128xf32>
    %436 = math.exp %435 : vector<8x128xf32>
    %cst_129 = arith.constant 1.000000e+00 : f32
    %437 = vector.broadcast %cst_129 : f32 to vector<8x128xf32>
    %438 = arith.addf %437, %436 : vector<8x128xf32>
    %439 = arith.divf %437, %438 : vector<8x128xf32>
    %440 = vector.extract_strided_slice %427 {offsets = [0, 256], sizes = [8, 128], strides = [1, 1]} : vector<8x512xf32> to vector<8x128xf32>
    %441 = math.tanh %440 : vector<8x128xf32>
    %442 = vector.extract_strided_slice %427 {offsets = [0, 384], sizes = [8, 128], strides = [1, 1]} : vector<8x512xf32> to vector<8x128xf32>
    %443 = arith.negf %442 : vector<8x128xf32>
    %444 = math.exp %443 : vector<8x128xf32>
    %cst_130 = arith.constant 1.000000e+00 : f32
    %445 = vector.broadcast %cst_130 : f32 to vector<8x128xf32>
    %446 = arith.addf %445, %444 : vector<8x128xf32>
    %447 = arith.divf %445, %446 : vector<8x128xf32>
    %448 = arith.mulf %439, %419 : vector<8x128xf32>
    %449 = arith.mulf %433, %441 : vector<8x128xf32>
    %450 = arith.addf %448, %449 : vector<8x128xf32>
    %451 = math.tanh %450 : vector<8x128xf32>
    %452 = arith.mulf %447, %451 : vector<8x128xf32>
    %c5_i32_131 = arith.constant 5 : i32
    %c8_i32_132 = arith.constant 8 : i32
    %453 = arith.muli %c5_i32_131, %c8_i32_132 : i32
    %454 = tpu.assume_multiple %453, 8 : i32
    %455 = arith.index_cast %454 : i32 to index
    %c0_133 = arith.constant 0 : index
    %456 = vector.load %arg15[%455, %c0_133] : memref<64x512xf32, #tpu.memory_space<vmem>>, vector<8x512xf32>
    %cst_134 = arith.constant dense<0.000000e+00> : vector<8x512xf32>
    %457 = tpu.matmul %452, %287, %cst_134 {dimension_numbers = #tpu.dot_dimension_numbers<[1], [0], [0], [1], [0, 0, 1, 1], [], []>} : vector<8x128xf32>, vector<128x512xf32>, vector<8x512xf32> -> vector<8x512xf32>
    %458 = arith.addf %456, %457 : vector<8x512xf32>
    %459 = vector.extract_strided_slice %458 {offsets = [0, 0], sizes = [8, 128], strides = [1, 1]} : vector<8x512xf32> to vector<8x128xf32>
    %460 = arith.negf %459 : vector<8x128xf32>
    %461 = math.exp %460 : vector<8x128xf32>
    %cst_135 = arith.constant 1.000000e+00 : f32
    %462 = vector.broadcast %cst_135 : f32 to vector<8x128xf32>
    %463 = arith.addf %462, %461 : vector<8x128xf32>
    %464 = arith.divf %462, %463 : vector<8x128xf32>
    %465 = vector.extract_strided_slice %458 {offsets = [0, 128], sizes = [8, 128], strides = [1, 1]} : vector<8x512xf32> to vector<8x128xf32>
    %466 = arith.negf %465 : vector<8x128xf32>
    %467 = math.exp %466 : vector<8x128xf32>
    %cst_136 = arith.constant 1.000000e+00 : f32
    %468 = vector.broadcast %cst_136 : f32 to vector<8x128xf32>
    %469 = arith.addf %468, %467 : vector<8x128xf32>
    %470 = arith.divf %468, %469 : vector<8x128xf32>
    %471 = vector.extract_strided_slice %458 {offsets = [0, 256], sizes = [8, 128], strides = [1, 1]} : vector<8x512xf32> to vector<8x128xf32>
    %472 = math.tanh %471 : vector<8x128xf32>
    %473 = vector.extract_strided_slice %458 {offsets = [0, 384], sizes = [8, 128], strides = [1, 1]} : vector<8x512xf32> to vector<8x128xf32>
    %474 = arith.negf %473 : vector<8x128xf32>
    %475 = math.exp %474 : vector<8x128xf32>
    %cst_137 = arith.constant 1.000000e+00 : f32
    %476 = vector.broadcast %cst_137 : f32 to vector<8x128xf32>
    %477 = arith.addf %476, %475 : vector<8x128xf32>
    %478 = arith.divf %476, %477 : vector<8x128xf32>
    %479 = arith.mulf %470, %450 : vector<8x128xf32>
    %480 = arith.mulf %464, %472 : vector<8x128xf32>
    %481 = arith.addf %479, %480 : vector<8x128xf32>
    %482 = math.tanh %481 : vector<8x128xf32>
    %483 = arith.mulf %478, %482 : vector<8x128xf32>
    %c6_i32_138 = arith.constant 6 : i32
    %c8_i32_139 = arith.constant 8 : i32
    %484 = arith.muli %c6_i32_138, %c8_i32_139 : i32
    %485 = tpu.assume_multiple %484, 8 : i32
    %486 = arith.index_cast %485 : i32 to index
    %c0_140 = arith.constant 0 : index
    %487 = vector.load %arg15[%486, %c0_140] : memref<64x512xf32, #tpu.memory_space<vmem>>, vector<8x512xf32>
    %cst_141 = arith.constant dense<0.000000e+00> : vector<8x512xf32>
    %488 = tpu.matmul %483, %287, %cst_141 {dimension_numbers = #tpu.dot_dimension_numbers<[1], [0], [0], [1], [0, 0, 1, 1], [], []>} : vector<8x128xf32>, vector<128x512xf32>, vector<8x512xf32> -> vector<8x512xf32>
    %489 = arith.addf %487, %488 : vector<8x512xf32>
    %490 = vector.extract_strided_slice %489 {offsets = [0, 0], sizes = [8, 128], strides = [1, 1]} : vector<8x512xf32> to vector<8x128xf32>
    %491 = arith.negf %490 : vector<8x128xf32>
    %492 = math.exp %491 : vector<8x128xf32>
    %cst_142 = arith.constant 1.000000e+00 : f32
    %493 = vector.broadcast %cst_142 : f32 to vector<8x128xf32>
    %494 = arith.addf %493, %492 : vector<8x128xf32>
    %495 = arith.divf %493, %494 : vector<8x128xf32>
    %496 = vector.extract_strided_slice %489 {offsets = [0, 128], sizes = [8, 128], strides = [1, 1]} : vector<8x512xf32> to vector<8x128xf32>
    %497 = arith.negf %496 : vector<8x128xf32>
    %498 = math.exp %497 : vector<8x128xf32>
    %cst_143 = arith.constant 1.000000e+00 : f32
    %499 = vector.broadcast %cst_143 : f32 to vector<8x128xf32>
    %500 = arith.addf %499, %498 : vector<8x128xf32>
    %501 = arith.divf %499, %500 : vector<8x128xf32>
    %502 = vector.extract_strided_slice %489 {offsets = [0, 256], sizes = [8, 128], strides = [1, 1]} : vector<8x512xf32> to vector<8x128xf32>
    %503 = math.tanh %502 : vector<8x128xf32>
    %504 = vector.extract_strided_slice %489 {offsets = [0, 384], sizes = [8, 128], strides = [1, 1]} : vector<8x512xf32> to vector<8x128xf32>
    %505 = arith.negf %504 : vector<8x128xf32>
    %506 = math.exp %505 : vector<8x128xf32>
    %cst_144 = arith.constant 1.000000e+00 : f32
    %507 = vector.broadcast %cst_144 : f32 to vector<8x128xf32>
    %508 = arith.addf %507, %506 : vector<8x128xf32>
    %509 = arith.divf %507, %508 : vector<8x128xf32>
    %510 = arith.mulf %501, %481 : vector<8x128xf32>
    %511 = arith.mulf %495, %503 : vector<8x128xf32>
    %512 = arith.addf %510, %511 : vector<8x128xf32>
    %513 = math.tanh %512 : vector<8x128xf32>
    %514 = arith.mulf %509, %513 : vector<8x128xf32>
    %c7_i32_145 = arith.constant 7 : i32
    %c8_i32_146 = arith.constant 8 : i32
    %515 = arith.muli %c7_i32_145, %c8_i32_146 : i32
    %516 = tpu.assume_multiple %515, 8 : i32
    %517 = arith.index_cast %516 : i32 to index
    %c0_147 = arith.constant 0 : index
    %518 = vector.load %arg15[%517, %c0_147] : memref<64x512xf32, #tpu.memory_space<vmem>>, vector<8x512xf32>
    %cst_148 = arith.constant dense<0.000000e+00> : vector<8x512xf32>
    %519 = tpu.matmul %514, %287, %cst_148 {dimension_numbers = #tpu.dot_dimension_numbers<[1], [0], [0], [1], [0, 0, 1, 1], [], []>} : vector<8x128xf32>, vector<128x512xf32>, vector<8x512xf32> -> vector<8x512xf32>
    %520 = arith.addf %518, %519 : vector<8x512xf32>
    %521 = vector.extract_strided_slice %520 {offsets = [0, 0], sizes = [8, 128], strides = [1, 1]} : vector<8x512xf32> to vector<8x128xf32>
    %522 = arith.negf %521 : vector<8x128xf32>
    %523 = math.exp %522 : vector<8x128xf32>
    %cst_149 = arith.constant 1.000000e+00 : f32
    %524 = vector.broadcast %cst_149 : f32 to vector<8x128xf32>
    %525 = arith.addf %524, %523 : vector<8x128xf32>
    %526 = arith.divf %524, %525 : vector<8x128xf32>
    %527 = vector.extract_strided_slice %520 {offsets = [0, 128], sizes = [8, 128], strides = [1, 1]} : vector<8x512xf32> to vector<8x128xf32>
    %528 = arith.negf %527 : vector<8x128xf32>
    %529 = math.exp %528 : vector<8x128xf32>
    %cst_150 = arith.constant 1.000000e+00 : f32
    %530 = vector.broadcast %cst_150 : f32 to vector<8x128xf32>
    %531 = arith.addf %530, %529 : vector<8x128xf32>
    %532 = arith.divf %530, %531 : vector<8x128xf32>
    %533 = vector.extract_strided_slice %520 {offsets = [0, 256], sizes = [8, 128], strides = [1, 1]} : vector<8x512xf32> to vector<8x128xf32>
    %534 = math.tanh %533 : vector<8x128xf32>
    %535 = vector.extract_strided_slice %520 {offsets = [0, 384], sizes = [8, 128], strides = [1, 1]} : vector<8x512xf32> to vector<8x128xf32>
    %536 = arith.negf %535 : vector<8x128xf32>
    %537 = math.exp %536 : vector<8x128xf32>
    %cst_151 = arith.constant 1.000000e+00 : f32
    %538 = vector.broadcast %cst_151 : f32 to vector<8x128xf32>
    %539 = arith.addf %538, %537 : vector<8x128xf32>
    %540 = arith.divf %538, %539 : vector<8x128xf32>
    %541 = arith.mulf %532, %512 : vector<8x128xf32>
    %542 = arith.mulf %526, %534 : vector<8x128xf32>
    %543 = arith.addf %541, %542 : vector<8x128xf32>
    %544 = math.tanh %543 : vector<8x128xf32>
    %545 = arith.mulf %540, %544 : vector<8x128xf32>
    %c8_i32_152 = arith.constant 8 : i32
    %c1_153 = arith.constant 1 : index
    %c0_154 = arith.constant 0 : index
    %c0_155 = arith.constant 0 : index
    %546 = vector.load %arg12[%c1_153, %c0_154, %c0_155] : memref<2x8x128xf32, #tpu.memory_space<vmem>>, vector<1x8x128xf32>
    %547 = vector.shape_cast %546 : vector<1x8x128xf32> to vector<8x128xf32>
    %548 = vector.shape_cast %545 : vector<8x128xf32> to vector<1x8x128xf32>
    tpu.vector_store %arg12[%c1_153, %c0_154, %c0_155], %548 {strides = array<i32>} : memref<2x8x128xf32, #tpu.memory_space<vmem>>, vector<1x8x128xf32>,
    %c1_156 = arith.constant 1 : index
    %c0_157 = arith.constant 0 : index
    %c0_158 = arith.constant 0 : index
    %549 = vector.load %arg13[%c1_156, %c0_157, %c0_158] : memref<2x8x128xf32, #tpu.memory_space<vmem>>, vector<1x8x128xf32>
    %550 = vector.shape_cast %549 : vector<1x8x128xf32> to vector<8x128xf32>
    %551 = vector.shape_cast %543 : vector<8x128xf32> to vector<1x8x128xf32>
    tpu.vector_store %arg13[%c1_156, %c0_157, %c0_158], %551 {strides = array<i32>} : memref<2x8x128xf32, #tpu.memory_space<vmem>>, vector<1x8x128xf32>,
    %c0_i32_159 = arith.constant 0 : i32
    %552 = arith.cmpi eq, %arg1, %c0_i32_159 : i32
    %553 = arith.extui %552 : i1 to i32
    %c0_i32_160 = arith.constant 0 : i32
    %554 = arith.cmpi ne, %553, %c0_i32_160 : i32
    scf.if %554 {
      %c0_161 = arith.constant 0 : index
      %c0_162 = arith.constant 0 : index
      %555 = vector.load %arg9[%c0_161, %c0_162] : memref<128x128xf32, #tpu.memory_space<vmem>>, vector<128x128xf32>
      %cst_163 = arith.constant dense<0.000000e+00> : vector<8x128xf32>
      %556 = tpu.matmul %545, %555, %cst_163 {dimension_numbers = #tpu.dot_dimension_numbers<[1], [0], [0], [1], [0, 0, 1, 1], [], []>} : vector<8x128xf32>, vector<128x128xf32>, vector<8x128xf32> -> vector<8x128xf32>
      %c0_164 = arith.constant 0 : index
      %c0_165 = arith.constant 0 : index
      %557 = vector.load %arg10[%c0_164, %c0_165] : memref<1x128xf32, #tpu.memory_space<vmem>>, vector<1x128xf32>
      %558 = vector.broadcast %557 : vector<1x128xf32> to vector<8x128xf32>
      %559 = arith.addf %556, %558 : vector<8x128xf32>
      %560 = arith.negf %559 : vector<8x128xf32>
      %561 = math.exp %560 : vector<8x128xf32>
      %cst_166 = arith.constant 1.000000e+00 : f32
      %562 = vector.broadcast %cst_166 : f32 to vector<8x128xf32>
      %563 = arith.addf %562, %561 : vector<8x128xf32>
      %564 = arith.divf %562, %563 : vector<8x128xf32>
      %c0_167 = arith.constant 0 : index
      %c0_168 = arith.constant 0 : index
      %565 = vector.load %arg11[%c0_167, %c0_168] : memref<8x128xf32, #tpu.memory_space<vmem>>, vector<8x128xf32>
      tpu.vector_store %arg11[%c0_167, %c0_168], %564 {strides = array<i32>} : memref<8x128xf32, #tpu.memory_space<vmem>>, vector<8x128xf32>,
    } else {
    }
    return
  }
  func.func @transform_0(%arg0: i32, %arg1: i32) -> (i32, i32, i32) {
    %c0_i32 = arith.constant 0 : i32
    %c0_i32_0 = arith.constant 0 : i32
    return %arg0, %arg1, %c0_i32 : i32, i32, i32
  }
  func.func @transform_1(%arg0: i32, %arg1: i32) -> (i32, i32) {
    %c0_i32 = arith.constant 0 : i32
    %c0_i32_0 = arith.constant 0 : i32
    %c0_i32_1 = arith.constant 0 : i32
    return %c0_i32, %c0_i32_0 : i32, i32
  }
  func.func @transform_2(%arg0: i32, %arg1: i32) -> (i32, i32) {
    %c0_i32 = arith.constant 0 : i32
    %c0_i32_0 = arith.constant 0 : i32
    %c0_i32_1 = arith.constant 0 : i32
    return %c0_i32, %c0_i32_0 : i32, i32
  }
  func.func @transform_3(%arg0: i32, %arg1: i32) -> (i32, i32) {
    %c0_i32 = arith.constant 0 : i32
    %c0_i32_0 = arith.constant 0 : i32
    %c0_i32_1 = arith.constant 0 : i32
    return %c0_i32, %c0_i32_0 : i32, i32
  }
  func.func @transform_4(%arg0: i32, %arg1: i32) -> (i32, i32) {
    %c0_i32 = arith.constant 0 : i32
    %c0_i32_0 = arith.constant 0 : i32
    %c0_i32_1 = arith.constant 0 : i32
    return %c0_i32, %c0_i32_0 : i32, i32
  }
  func.func @transform_5(%arg0: i32, %arg1: i32) -> (i32, i32) {
    %c0_i32 = arith.constant 0 : i32
    %c0_i32_0 = arith.constant 0 : i32
    %c0_i32_1 = arith.constant 0 : i32
    return %c0_i32, %c0_i32_0 : i32, i32
  }
  func.func @transform_6(%arg0: i32, %arg1: i32) -> (i32, i32) {
    %c0_i32 = arith.constant 0 : i32
    %c0_i32_0 = arith.constant 0 : i32
    %c0_i32_1 = arith.constant 0 : i32
    return %c0_i32, %c0_i32_0 : i32, i32
  }
  func.func @transform_7(%arg0: i32, %arg1: i32) -> (i32, i32) {
    %c0_i32 = arith.constant 0 : i32
    %c0_i32_0 = arith.constant 0 : i32
    %c0_i32_1 = arith.constant 0 : i32
    return %c0_i32, %c0_i32_0 : i32, i32
  }
  func.func @transform_8(%arg0: i32, %arg1: i32) -> (i32, i32) {
    %c0_i32 = arith.constant 0 : i32
    %c0_i32_0 = arith.constant 0 : i32
    %c0_i32_1 = arith.constant 0 : i32
    return %c0_i32, %c0_i32_0 : i32, i32
  }
  func.func @transform_9(%arg0: i32, %arg1: i32) -> (i32, i32) {
    %c0_i32 = arith.constant 0 : i32
    %c0_i32_0 = arith.constant 0 : i32
    return %arg0, %c0_i32 : i32, i32
  }
}

</mosaic_0001>

<llo_original>
// kernel: tpu_custom_call.1
$region0: #{tpu_custom_call.1}
  #allocation0 [shape = 'u32[]', space=smem, size = 0x4, offset = 0x4, fixed_abs, tag = 'smem constant byte address 0x4 - core index']
  #allocation1 [shape = 'u32[144,128]{1,0:T(1,128)}', space=vmem, size = 0x12000, scoped, tag = 'internal scratch']
  #allocation2 [shape = 'f32[2,8,128]{2,1,0:T(8,128)}', space=vmem, size = 0x2000, scoped, tag = 'scratch operand']
  #allocation3 [shape = 'f32[2,8,128]{2,1,0:T(8,128)}', space=vmem, size = 0x2000, scoped, tag = 'scratch operand']
  #allocation4 [shape = 'f32[64,128]{1,0:T(8,128)}', space=vmem, size = 0x8000, scoped, tag = 'scratch operand']
  #allocation5 [shape = 'f32[64,512]{1,0:T(8,128)}', space=vmem, size = 0x20000, scoped, tag = 'scratch operand']
  %s0 = inlined_call_operand.vmem [shape: f32[1,64,16], index: 0, kind: input, shape index: {}]
  %s1 = inlined_call_operand.vmem [shape: f32[16,512], index: 1, kind: input, shape index: {}]
  %s2 = inlined_call_operand.hbm [shape: f32[128,512], index: 2, kind: input, shape index: {}]
  %s3 = inlined_call_operand.vmem [shape: f32[1,512], index: 3, kind: input, shape index: {}]
  %s4 = inlined_call_operand.hbm [shape: f32[128,512], index: 4, kind: input, shape index: {}]
  %s5 = inlined_call_operand.hbm [shape: f32[128,512], index: 5, kind: input, shape index: {}]
  %s6 = inlined_call_operand.vmem [shape: f32[1,512], index: 6, kind: input, shape index: {}]
  %s7 = inlined_call_operand.hbm [shape: f32[128,128], index: 7, kind: input, shape index: {}]
  %s8 = inlined_call_operand.vmem [shape: f32[1,128], index: 8, kind: input, shape index: {}]
  %s9 = inlined_call_operand.hbm [shape: f32[8,128], index: 9, kind: output, shape index: {}]
  %s10 = sld [smem:[#allocation0]]
  $region70: #{tpu_custom_call.1} parent=0
    _
  %s12 = ssub.s32 1, %s10
  %s13 = scalar_select 0, %s12, %s10
  $region1: #{tpu_custom_call.1} parent=0
    #allocation6 [shape = 'u8[262144]{0}', space=vmem, size = 0x40000, scoped, tag = 'input window, operand 2, single buffered']
    #allocation7 [shape = 's32[1]{0}', space=sflag, size = 0x4, scoped, tag = 'scoped memory for tpu_custom_call.1']
    #allocation8 [shape = 's32[1]{0}', space=sflag, size = 0x4, scoped, tag = 'scoped memory for tpu_custom_call.1']
    #allocation9 [shape = 'u8[262144]{0}', space=vmem, size = 0x40000, scoped, tag = 'input window, operand 4, single buffered']
    #allocation10 [shape = 's32[1]{0}', space=sflag, size = 0x4, scoped, tag = 'scoped memory for tpu_custom_call.1']
    #allocation11 [shape = 'u8[262144]{0}', space=vmem, size = 0x40000, scoped, tag = 'input window, operand 5, single buffered']
    #allocation12 [shape = 'u8[65536]{0}', space=vmem, size = 0x10000, scoped, tag = 'input window, operand 7, single buffered']
    #allocation13 [shape = 's32[1]{0}', space=sflag, size = 0x4, scoped, tag = 'scoped memory for tpu_custom_call.1']
    #allocation14 [shape = 'u8[4096]{0}', space=vmem, size = 0x1000, scoped, tag = 'output window, operand 0, single buffered']
    %14 = vsyncpa [#allocation7], 0
    %15 = vsyncpa [#allocation10], 0
    %16 = vsyncpa [#allocation13], 0
    %17 = vsyncpa [#allocation8], 0
    // Predicated region
    $region2: #{tpu_custom_call.1} parent=1 // pred_check
      _
    $region3: #{tpu_custom_call.1} parent=1 // pred_check_branch
      %19 = sbr.rel (0) target = $region5
    $region4: #{tpu_custom_call.1} parent=1 // pred_region
      _
    $region5: #{tpu_custom_call.1} parent=1 // pred_fallthru
      _
    // Predicated region
    $region6: #{tpu_custom_call.1} parent=1 // pred_check
      _
    $region7: #{tpu_custom_call.1} parent=1 // pred_check_branch
      %21 = sbr.rel (0) target = $region9
    $region8: #{tpu_custom_call.1} parent=1 // pred_region
      _
    $region9: #{tpu_custom_call.1} parent=1 // pred_fallthru
      _
    // Predicated region
    $region10: #{tpu_custom_call.1} parent=1 // pred_check
      _
    $region11: #{tpu_custom_call.1} parent=1 // pred_check_branch
      %23 = sbr.rel (0) target = $region13
    $region12: #{tpu_custom_call.1} parent=1 // pred_region
      %s25 = ssub.s32 8192, 8192
      %26 = vsyncadd [#allocation7], %s25
      %s27 = sshll.u32 [#allocation6], 4
      %s28 = int_to_ptr.vmem [resolvable:$true] %s27
      %33 = dma.hbm_to_vmem [thread:$0]  %s2, 8192, %s28, [#allocation7], 512, 512, 32
    $region13: #{tpu_custom_call.1} parent=1 // pred_fallthru
      _
    // Predicated region
    $region14: #{tpu_custom_call.1} parent=1 // pred_check
      _
    $region15: #{tpu_custom_call.1} parent=1 // pred_check_branch
      %35 = sbr.rel (0) target = $region17
    $region16: #{tpu_custom_call.1} parent=1 // pred_region
      _
    $region17: #{tpu_custom_call.1} parent=1 // pred_fallthru
      _
    // Predicated region
    $region18: #{tpu_custom_call.1} parent=1 // pred_check
      _
    $region19: #{tpu_custom_call.1} parent=1 // pred_check_branch
      %37 = sbr.rel (0) target = $region21
    $region20: #{tpu_custom_call.1} parent=1 // pred_region
      %s39 = ssub.s32 8192, 8192
      %40 = vsyncadd [#allocation10], %s39
      %s41 = sshll.u32 [#allocation9], 4
      %s42 = int_to_ptr.vmem [resolvable:$true] %s41
      %47 = dma.hbm_to_vmem [thread:$0]  %s4, 8192, %s42, [#allocation10], 512, 512, 32
    $region21: #{tpu_custom_call.1} parent=1 // pred_fallthru
      _
    // Predicated region
    $region22: #{tpu_custom_call.1} parent=1 // pred_check
      _
    $region23: #{tpu_custom_call.1} parent=1 // pred_check_branch
      %49 = sbr.rel (0) target = $region25
    $region24: #{tpu_custom_call.1} parent=1 // pred_region
      %s51 = ssub.s32 8192, 8192
      %52 = vsyncadd [#allocation10], %s51
      %s53 = sshll.u32 [#allocation11], 4
      %s54 = int_to_ptr.vmem [resolvable:$true] %s53
      %59 = dma.hbm_to_vmem [thread:$0]  %s5, 8192, %s54, [#allocation10], 512, 512, 32
    $region25: #{tpu_custom_call.1} parent=1 // pred_fallthru
      _
    // Predicated region
    $region26: #{tpu_custom_call.1} parent=1 // pred_check
      _
    $region27: #{tpu_custom_call.1} parent=1 // pred_check_branch
      %61 = sbr.rel (0) target = $region29
    $region28: #{tpu_custom_call.1} parent=1 // pred_region
      _
    $region29: #{tpu_custom_call.1} parent=1 // pred_fallthru
      _
    // Predicated region
    $region30: #{tpu_custom_call.1} parent=1 // pred_check
      _
    $region31: #{tpu_custom_call.1} parent=1 // pred_check_branch
      %63 = sbr.rel (0) target = $region33
    $region32: #{tpu_custom_call.1} parent=1 // pred_region
      %s65 = ssub.s32 2048, 2048
      %66 = vsyncadd [#allocation13], %s65
      %s67 = sshll.u32 [#allocation12], 4
      %s68 = int_to_ptr.vmem [resolvable:$true] %s67
      %73 = dma.hbm_to_vmem [thread:$0]  %s7, 2048, %s68, [#allocation13], 128, 128, 8
    $region33: #{tpu_custom_call.1} parent=1 // pred_fallthru
      _
    // Predicated region
    $region34: #{tpu_custom_call.1} parent=1 // pred_check
      _
    $region35: #{tpu_custom_call.1} parent=1 // pred_check_branch
      %75 = sbr.rel (0) target = $region37
    $region36: #{tpu_custom_call.1} parent=1 // pred_region
      _
    $region37: #{tpu_custom_call.1} parent=1 // pred_fallthru
      _
    // Predicated region
    $region38: #{tpu_custom_call.1} parent=1 // pred_check
      _
    $region39: #{tpu_custom_call.1} parent=1 // pred_check_branch
      %77 = sbr.rel (0) target = $region41
    $region40: #{tpu_custom_call.1} parent=1 // pred_region
      %78 = dma.done [#allocation7], 8192
    $region41: #{tpu_custom_call.1} parent=1 // pred_fallthru
      _
    // Predicated region
    $region42: #{tpu_custom_call.1} parent=1 // pred_check
      _
    $region43: #{tpu_custom_call.1} parent=1 // pred_check_branch
      %80 = sbr.rel (0) target = $region45
    $region44: #{tpu_custom_call.1} parent=1 // pred_region
      %81 = dma.done [#allocation10], 8192
    $region45: #{tpu_custom_call.1} parent=1 // pred_fallthru
      _
    // Predicated region
    $region46: #{tpu_custom_call.1} parent=1 // pred_check
      _
    $region47: #{tpu_custom_call.1} parent=1 // pred_check_branch
      %83 = sbr.rel (0) target = $region49
    $region48: #{tpu_custom_call.1} parent=1 // pred_region
      %84 = dma.done [#allocation10], 8192
    $region49: #{tpu_custom_call.1} parent=1 // pred_fallthru
      _
    // Predicated region
    $region50: #{tpu_custom_call.1} parent=1 // pred_check
      _
    $region51: #{tpu_custom_call.1} parent=1 // pred_check_branch
      %86 = sbr.rel (0) target = $region53
    $region52: #{tpu_custom_call.1} parent=1 // pred_region
      %87 = dma.done [#allocation13], 2048
    $region53: #{tpu_custom_call.1} parent=1 // pred_fallthru
      _
    %p88 = scmp.eq.s32.totalorder 0, 0
    // Predicated region
    $region54: #{tpu_custom_call.1} parent=1 // pred_check
      %p89 = pneg %p88
    $region55: #{tpu_custom_call.1} parent=1 // pred_check_branch
      %91 = sbr.rel (%p89) target = $region57
    $region56: #{tpu_custom_call.1} parent=1 // pred_region
      %92 = vst [vmem:[#allocation2] sm:$0xff] 0.0
      %93 = vst [vmem:[#allocation2 + $0x8] sm:$0xff] 0.0
      %94 = vst [vmem:[#allocation3] sm:$0xff] 0.0
      %95 = vst [vmem:[#allocation3 + $0x8] sm:$0xff] 0.0
    $region57: #{tpu_custom_call.1} parent=1 // pred_fallthru
      _
    %v96 = vld [vmem:[%s1] sm:$0xff]
    %v97 = vld [vmem:[%s1 + $0x8] sm:$0xff]
    %v98 = vld [vmem:[%s1 + $0x10] sm:$0xff]
    %v99 = vld [vmem:[%s1 + $0x18] sm:$0xff]
    %v100 = vld [vmem:[%s1 + $0x20] sm:$0xff]
    %v101 = vld [vmem:[%s1 + $0x28] sm:$0xff]
    %v102 = vld [vmem:[%s1 + $0x30] sm:$0xff]
    %v103 = vld [vmem:[%s1 + $0x38] sm:$0xff]
    %v104 = vld [vmem:[#allocation6] sm:$0xff]
    %v105 = vld [vmem:[#allocation6 + $0x8] sm:$0xff]
    %v106 = vld [vmem:[#allocation6 + $0x10] sm:$0xff]
    %v107 = vld [vmem:[#allocation6 + $0x18] sm:$0xff]
    %v108 = vld [vmem:[#allocation6 + $0x20] sm:$0xff]
    %v109 = vld [vmem:[#allocation6 + $0x28] sm:$0xff]
    %v110 = vld [vmem:[#allocation6 + $0x30] sm:$0xff]
    %v111 = vld [vmem:[#allocation6 + $0x38] sm:$0xff]
    %v112 = vld [vmem:[#allocation6 + $0x40] sm:$0xff]
    %v113 = vld [vmem:[#allocation6 + $0x48] sm:$0xff]
    %v114 = vld [vmem:[#allocation6 + $0x50] sm:$0xff]
    %v115 = vld [vmem:[#allocation6 + $0x58] sm:$0xff]
    %v116 = vld [vmem:[#allocation6 + $0x60] sm:$0xff]
    %v117 = vld [vmem:[#allocation6 + $0x68] sm:$0xff]
    %v118 = vld [vmem:[#allocation6 + $0x70] sm:$0xff]
    %v119 = vld [vmem:[#allocation6 + $0x78] sm:$0xff]
    %v120 = vld [vmem:[#allocation6 + $0x80] sm:$0xff]
    %v121 = vld [vmem:[#allocation6 + $0x88] sm:$0xff]
    %v122 = vld [vmem:[#allocation6 + $0x90] sm:$0xff]
    %v123 = vld [vmem:[#allocation6 + $0x98] sm:$0xff]
    %v124 = vld [vmem:[#allocation6 + $0xa0] sm:$0xff]
    %v125 = vld [vmem:[#allocation6 + $0xa8] sm:$0xff]
    %v126 = vld [vmem:[#allocation6 + $0xb0] sm:$0xff]
    %v127 = vld [vmem:[#allocation6 + $0xb8] sm:$0xff]
    %v128 = vld [vmem:[#allocation6 + $0xc0] sm:$0xff]
    %v129 = vld [vmem:[#allocation6 + $0xc8] sm:$0xff]
    %v130 = vld [vmem:[#allocation6 + $0xd0] sm:$0xff]
    %v131 = vld [vmem:[#allocation6 + $0xd8] sm:$0xff]
    %v132 = vld [vmem:[#allocation6 + $0xe0] sm:$0xff]
    %v133 = vld [vmem:[#allocation6 + $0xe8] sm:$0xff]
    %v134 = vld [vmem:[#allocation6 + $0xf0] sm:$0xff]
    %v135 = vld [vmem:[#allocation6 + $0xf8] sm:$0xff]
    %v136 = vld [vmem:[#allocation6 + $0x100] sm:$0xff]
    %v137 = vld [vmem:[#allocation6 + $0x108] sm:$0xff]
    %v138 = vld [vmem:[#allocation6 + $0x110] sm:$0xff]
    %v139 = vld [vmem:[#allocation6 + $0x118] sm:$0xff]
    %v140 = vld [vmem:[#allocation6 + $0x120] sm:$0xff]
    %v141 = vld [vmem:[#allocation6 + $0x128] sm:$0xff]
    %v142 = vld [vmem:[#allocation6 + $0x130] sm:$0xff]
    %v143 = vld [vmem:[#allocation6 + $0x138] sm:$0xff]
    %v144 = vld [vmem:[#allocation6 + $0x140] sm:$0xff]
    %v145 = vld [vmem:[#allocation6 + $0x148] sm:$0xff]
    %v146 = vld [vmem:[#allocation6 + $0x150] sm:$0xff]
    %v147 = vld [vmem:[#allocation6 + $0x158] sm:$0xff]
    %v148 = vld [vmem:[#allocation6 + $0x160] sm:$0xff]
    %v149 = vld [vmem:[#allocation6 + $0x168] sm:$0xff]
    %v150 = vld [vmem:[#allocation6 + $0x170] sm:$0xff]
    %v151 = vld [vmem:[#allocation6 + $0x178] sm:$0xff]
    %v152 = vld [vmem:[#allocation6 + $0x180] sm:$0xff]
    %v153 = vld [vmem:[#allocation6 + $0x188] sm:$0xff]
    %v154 = vld [vmem:[#allocation6 + $0x190] sm:$0xff]
    %v155 = vld [vmem:[#allocation6 + $0x198] sm:$0xff]
    %v156 = vld [vmem:[#allocation6 + $0x1a0] sm:$0xff]
    %v157 = vld [vmem:[#allocation6 + $0x1a8] sm:$0xff]
    %v158 = vld [vmem:[#allocation6 + $0x1b0] sm:$0xff]
    %v159 = vld [vmem:[#allocation6 + $0x1b8] sm:$0xff]
    %v160 = vld [vmem:[#allocation6 + $0x1c0] sm:$0xff]
    %v161 = vld [vmem:[#allocation6 + $0x1c8] sm:$0xff]
    %v162 = vld [vmem:[#allocation6 + $0x1d0] sm:$0xff]
    %v163 = vld [vmem:[#allocation6 + $0x1d8] sm:$0xff]
    %v164 = vld [vmem:[#allocation6 + $0x1e0] sm:$0xff]
    %v165 = vld [vmem:[#allocation6 + $0x1e8] sm:$0xff]
    %v166 = vld [vmem:[#allocation6 + $0x1f0] sm:$0xff]
    %v167 = vld [vmem:[#allocation6 + $0x1f8] sm:$0xff]
    %v168 = vld [vmem:[%s3] sm:$0xf]
    %v169 = vld [vmem:[%s0] sm:$0xff]
    %v170 = vld [vmem:[%s0 + $0x8] sm:$0xff]
    %v171 = vld [vmem:[%s0 + $0x10] sm:$0xff]
    %v172 = vld [vmem:[%s0 + $0x18] sm:$0xff]
    %v173 = vld [vmem:[%s0 + $0x20] sm:$0xff]
    %v174 = vld [vmem:[%s0 + $0x28] sm:$0xff]
    %v175 = vld [vmem:[%s0 + $0x30] sm:$0xff]
    %v176 = vld [vmem:[%s0 + $0x38] sm:$0xff]
    %v178 = vlaneseq
    %v179 = vshrl.u32 %v178, 7
    %v180 = vsub.s32 0, %v179
    %v181 = vrot.slane %v168, %v180
    %v182 = vlaneseq
    %v183 = vshrl.u32 %v182, 7
    %v184 = vsub.s32 1, %v183
    %v185 = vrot.slane %v168, %v184
    %v186 = vlaneseq
    %v187 = vshrl.u32 %v186, 7
    %v188 = vsub.s32 2, %v187
    %v189 = vrot.slane %v168, %v188
    %v190 = vlaneseq
    %v191 = vshrl.u32 %v190, 7
    %v192 = vsub.s32 3, %v191
    %v193 = vrot.slane %v168, %v192
    %vm198 = vcmask 130048
    %v200 = vsel %vm198, %v169, 0
    %v203 = vsel %vm198, %v170, 0
    %v206 = vsel %vm198, %v171, 0
    %v209 = vsel %vm198, %v172, 0
    %v212 = vsel %vm198, %v173, 0
    %v215 = vsel %vm198, %v174, 0
    %v218 = vsel %vm198, %v175, 0
    %v221 = vsel %vm198, %v176, 0
    %223 = vmatprep.subr.mxu0 %v97
    %224 = vmatpush1.msra.mxu0 %v96
    %225 = vmatprep.subr.mxu0 %v101
    %226 = vmatpush1.msra.mxu0 %v100
    %227 = vmatprep.subr.mxu0 0.0
    %228 = vmatpush1.msra.mxu0 0.0
    %229 = vmatprep.subr.mxu0 0.0
    %230 = vmatpush1.msra.mxu0 0.0
    %231 = vmatprep.subr.mxu0 0.0
    %232 = vmatpush1.msra.mxu0 0.0
    %233 = vmatprep.subr.mxu0 0.0
    %234 = vmatpush1.msra.mxu0 0.0
    %235 = vmatprep.subr.mxu0 0.0
    %236 = vmatpush1.msra.mxu0 0.0
    %237 = vmatprep.subr.mxu0 0.0
    %238 = vmatpush1.msra.mxu0 0.0
    %239 = vmatprep.subr.mxu0 0.0
    %240 = vmatpush1.msra.mxu0 0.0
    %241 = vmatprep.subr.mxu0 0.0
    %242 = vmatpush1.msra.mxu0 0.0
    %243 = vmatprep.subr.mxu0 0.0
    %244 = vmatpush1.msra.mxu0 0.0
    %245 = vmatprep.subr.mxu0 0.0
    %246 = vmatpush1.msra.mxu0 0.0
    %247 = vmatprep.subr.mxu0 0.0
    %248 = vmatpush1.msra.mxu0 0.0
    %249 = vmatprep.subr.mxu0 0.0
    %250 = vmatpush1.msra.mxu0 0.0
    %251 = vmatprep.subr.mxu0 0.0
    %252 = vmatpush1.msra.mxu0 0.0
    %253 = vmatprep.subr.mxu0 0.0
    %254 = vmatpush1.msra.mxu0 0.0
    %255 = vmatprep.subr.mxu0 0.0
    %256 = vmatpush1.msra.mxu0 0.0
    %257 = vmatprep.subr.mxu0 0.0
    %258 = vmatpush1.msra.mxu0 0.0
    %259 = vmatprep.subr.mxu0 0.0
    %260 = vmatpush1.msra.mxu0 0.0
    %261 = vmatprep.subr.mxu0 0.0
    %262 = vmatpush1.msra.mxu0 0.0
    %263 = vmatprep.subr.mxu0 0.0
    %264 = vmatpush1.msra.mxu0 0.0
    %265 = vmatprep.subr.mxu0 0.0
    %266 = vmatpush1.msra.mxu0 0.0
    %267 = vmatprep.subr.mxu0 0.0
    %268 = vmatpush1.msra.mxu0 0.0
    %269 = vmatprep.subr.mxu0 0.0
    %270 = vmatpush1.msra.mxu0 0.0
    %271 = vmatprep.subr.mxu0 0.0
    %272 = vmatpush1.msra.mxu0 0.0
    %273 = vmatprep.subr.mxu0 0.0
    %274 = vmatpush1.msra.mxu0 0.0
    %275 = vmatprep.subr.mxu0 0.0
    %276 = vmatpush1.msra.mxu0 0.0
    %277 = vmatprep.subr.mxu0 0.0
    %278 = vmatpush1.msra.mxu0 0.0
    %279 = vmatprep.subr.mxu0 0.0
    %280 = vmatpush1.msra.mxu0 0.0
    %281 = vmatprep.subr.mxu0 0.0
    %282 = vmatpush1.msra.mxu0 0.0
    %283 = vmatprep.subr.mxu0 0.0
    %284 = vmatpush1.msra.mxu0 0.0
    %285 = vmatprep.subr.mxu0 0.0
    %286 = vmatpush1.msra.mxu0 0.0
    %287 = vmatprep.mubr.f32.mxu0 0.0
    %288 = vmatmul.mubr.f32.gmra.mrb[0].mxu0 %v200
    %v289 = vpop.f32.mrb[0].mxu0
    %v290 = vadd.f32 %v181, %v289
    %v291 = vpop.f32.mrb[0].mxu0
    %v292 = vadd.f32 %v185, %v291
    %293 = vmatprep.mubr.f32.mxu0 0.0
    %294 = vmatmul.mubr.f32.gmra.mrb[0].mxu0 %v203
    %v295 = vpop.f32.mrb[0].mxu0
    %v296 = vadd.f32 %v181, %v295
    %v297 = vpop.f32.mrb[0].mxu0
    %v298 = vadd.f32 %v185, %v297
    %299 = vmatprep.mubr.f32.mxu0 0.0
    %300 = vmatmul.mubr.f32.gmra.mrb[0].mxu0 %v206
    %v301 = vpop.f32.mrb[0].mxu0
    %v302 = vadd.f32 %v181, %v301
    %v303 = vpop.f32.mrb[0].mxu0
    %v304 = vadd.f32 %v185, %v303
    %305 = vmatprep.mubr.f32.mxu0 0.0
    %306 = vmatmul.mubr.f32.gmra.mrb[0].mxu0 %v209
    %v307 = vpop.f32.mrb[0].mxu0
    %v308 = vadd.f32 %v181, %v307
    %v309 = vpop.f32.mrb[0].mxu0
    %v310 = vadd.f32 %v185, %v309
    %311 = vmatprep.mubr.f32.mxu0 0.0
    %312 = vmatmul.mubr.f32.gmra.mrb[0].mxu0 %v212
    %v313 = vpop.f32.mrb[0].mxu0
    %v314 = vadd.f32 %v181, %v313
    %v315 = vpop.f32.mrb[0].mxu0
    %v316 = vadd.f32 %v185, %v315
    %317 = vmatprep.mubr.f32.mxu0 0.0
    %318 = vmatmul.mubr.f32.gmra.mrb[0].mxu0 %v215
    %v319 = vpop.f32.mrb[0].mxu0
    %v320 = vadd.f32 %v181, %v319
    %v321 = vpop.f32.mrb[0].mxu0
    %v322 = vadd.f32 %v185, %v321
    %323 = vmatprep.mubr.f32.mxu0 0.0
    %324 = vmatmul.mubr.f32.gmra.mrb[0].mxu0 %v218
    %v325 = vpop.f32.mrb[0].mxu0
    %v326 = vadd.f32 %v181, %v325
    %v327 = vpop.f32.mrb[0].mxu0
    %v328 = vadd.f32 %v185, %v327
    %329 = vmatprep.mubr.f32.mxu0 0.0
    %330 = vmatmul.mubr.f32.gmra.mrb[0].mxu0 %v221
    %v331 = vpop.f32.mrb[0].mxu0
    %v332 = vadd.f32 %v181, %v331
    %v333 = vpop.f32.mrb[0].mxu0
    %v334 = vadd.f32 %v185, %v333
    %335 = vdwg.mxu0
    %336 = vmatprep.subr.mxu0 %v99
    %337 = vmatpush1.msra.mxu0 %v98
    %338 = vmatprep.subr.mxu0 %v103
    %339 = vmatpush1.msra.mxu0 %v102
    %340 = vmatprep.subr.mxu0 0.0
    %341 = vmatpush1.msra.mxu0 0.0
    %342 = vmatprep.subr.mxu0 0.0
    %343 = vmatpush1.msra.mxu0 0.0
    %344 = vmatprep.subr.mxu0 0.0
    %345 = vmatpush1.msra.mxu0 0.0
    %346 = vmatprep.subr.mxu0 0.0
    %347 = vmatpush1.msra.mxu0 0.0
    %348 = vmatprep.subr.mxu0 0.0
    %349 = vmatpush1.msra.mxu0 0.0
    %350 = vmatprep.subr.mxu0 0.0
    %351 = vmatpush1.msra.mxu0 0.0
    %352 = vmatprep.subr.mxu0 0.0
    %353 = vmatpush1.msra.mxu0 0.0
    %354 = vmatprep.subr.mxu0 0.0
    %355 = vmatpush1.msra.mxu0 0.0
    %356 = vmatprep.subr.mxu0 0.0
    %357 = vmatpush1.msra.mxu0 0.0
    %358 = vmatprep.subr.mxu0 0.0
    %359 = vmatpush1.msra.mxu0 0.0
    %360 = vmatprep.subr.mxu0 0.0
    %361 = vmatpush1.msra.mxu0 0.0
    %362 = vmatprep.subr.mxu0 0.0
    %363 = vmatpush1.msra.mxu0 0.0
    %364 = vmatprep.subr.mxu0 0.0
    %365 = vmatpush1.msra.mxu0 0.0
    %366 = vmatprep.subr.mxu0 0.0
    %367 = vmatpush1.msra.mxu0 0.0
    %368 = vmatprep.subr.mxu0 0.0
    %369 = vmatpush1.msra.mxu0 0.0
    %370 = vmatprep.subr.mxu0 0.0
    %371 = vmatpush1.msra.mxu0 0.0
    %372 = vmatprep.subr.mxu0 0.0
    %373 = vmatpush1.msra.mxu0 0.0
    %374 = vmatprep.subr.mxu0 0.0
    %375 = vmatpush1.msra.mxu0 0.0
    %376 = vmatprep.subr.mxu0 0.0
    %377 = vmatpush1.msra.mxu0 0.0
    %378 = vmatprep.subr.mxu0 0.0
    %379 = vmatpush1.msra.mxu0 0.0
    %380 = vmatprep.subr.mxu0 0.0
    %381 = vmatpush1.msra.mxu0 0.0
    %382 = vmatprep.subr.mxu0 0.0
    %383 = vmatpush1.msra.mxu0 0.0
    %384 = vmatprep.subr.mxu0 0.0
    %385 = vmatpush1.msra.mxu0 0.0
    %386 = vmatprep.subr.mxu0 0.0
    %387 = vmatpush1.msra.mxu0 0.0
    %388 = vmatprep.subr.mxu0 0.0
    %389 = vmatpush1.msra.mxu0 0.0
    %390 = vmatprep.subr.mxu0 0.0
    %391 = vmatpush1.msra.mxu0 0.0
    %392 = vmatprep.subr.mxu0 0.0
    %393 = vmatpush1.msra.mxu0 0.0
    %394 = vmatprep.subr.mxu0 0.0
    %395 = vmatpush1.msra.mxu0 0.0
    %396 = vmatprep.subr.mxu0 0.0
    %397 = vmatpush1.msra.mxu0 0.0
    %398 = vmatprep.subr.mxu0 0.0
    %399 = vmatpush1.msra.mxu0 0.0
    %400 = vmatprep.mubr.f32.mxu0 0.0
    %401 = vmatmul.mubr.f32.gmra.mrb[0].mxu0 %v200
    %v402 = vpop.f32.mrb[0].mxu0
    %v403 = vadd.f32 %v189, %v402
    %v404 = vpop.f32.mrb[0].mxu0
    %v405 = vadd.f32 %v193, %v404
    %406 = vmatprep.mubr.f32.mxu0 0.0
    %407 = vmatmul.mubr.f32.gmra.mrb[0].mxu0 %v203
    %v408 = vpop.f32.mrb[0].mxu0
    %v409 = vadd.f32 %v189, %v408
    %v410 = vpop.f32.mrb[0].mxu0
    %v411 = vadd.f32 %v193, %v410
    %412 = vmatprep.mubr.f32.mxu0 0.0
    %413 = vmatmul.mubr.f32.gmra.mrb[0].mxu0 %v206
    %v414 = vpop.f32.mrb[0].mxu0
    %v415 = vadd.f32 %v189, %v414
    %v416 = vpop.f32.mrb[0].mxu0
    %v417 = vadd.f32 %v193, %v416
    %418 = vmatprep.mubr.f32.mxu0 0.0
    %419 = vmatmul.mubr.f32.gmra.mrb[0].mxu0 %v209
    %v420 = vpop.f32.mrb[0].mxu0
    %v421 = vadd.f32 %v189, %v420
    %v422 = vpop.f32.mrb[0].mxu0
    %v423 = vadd.f32 %v193, %v422
    %424 = vmatprep.mubr.f32.mxu0 0.0
    %425 = vmatmul.mubr.f32.gmra.mrb[0].mxu0 %v212
    %v426 = vpop.f32.mrb[0].mxu0
    %v427 = vadd.f32 %v189, %v426
    %v428 = vpop.f32.mrb[0].mxu0
    %v429 = vadd.f32 %v193, %v428
    %430 = vmatprep.mubr.f32.mxu0 0.0
    %431 = vmatmul.mubr.f32.gmra.mrb[0].mxu0 %v215
    %v432 = vpop.f32.mrb[0].mxu0
    %v433 = vadd.f32 %v189, %v432
    %v434 = vpop.f32.mrb[0].mxu0
    %v435 = vadd.f32 %v193, %v434
    %436 = vmatprep.mubr.f32.mxu0 0.0
    %437 = vmatmul.mubr.f32.gmra.mrb[0].mxu0 %v218
    %v438 = vpop.f32.mrb[0].mxu0
    %v439 = vadd.f32 %v189, %v438
    %v440 = vpop.f32.mrb[0].mxu0
    %v441 = vadd.f32 %v193, %v440
    %442 = vmatprep.mubr.f32.mxu0 0.0
    %443 = vmatmul.mubr.f32.gmra.mrb[0].mxu0 %v221
    %v444 = vpop.f32.mrb[0].mxu0
    %v445 = vadd.f32 %v189, %v444
    %v446 = vpop.f32.mrb[0].mxu0
    %v447 = vadd.f32 %v193, %v446
    %448 = vdwg.mxu0
    %449 = vst [vmem:[#allocation5] sm:$0xff] %v290
    %450 = vst [vmem:[#allocation5 + $0x8] sm:$0xff] %v292
    %451 = vst [vmem:[#allocation5 + $0x10] sm:$0xff] %v403
    %452 = vst [vmem:[#allocation5 + $0x18] sm:$0xff] %v405
    %453 = vst [vmem:[#allocation5 + $0x20] sm:$0xff] %v296
    %454 = vst [vmem:[#allocation5 + $0x28] sm:$0xff] %v298
    %455 = vst [vmem:[#allocation5 + $0x30] sm:$0xff] %v409
    %456 = vst [vmem:[#allocation5 + $0x38] sm:$0xff] %v411
    %457 = vst [vmem:[#allocation5 + $0x40] sm:$0xff] %v302
    %458 = vst [vmem:[#allocation5 + $0x48] sm:$0xff] %v304
    %459 = vst [vmem:[#allocation5 + $0x50] sm:$0xff] %v415
    %460 = vst [vmem:[#allocation5 + $0x58] sm:$0xff] %v417
    %461 = vst [vmem:[#allocation5 + $0x60] sm:$0xff] %v308
    %462 = vst [vmem:[#allocation5 + $0x68] sm:$0xff] %v310
    %463 = vst [vmem:[#allocation5 + $0x70] sm:$0xff] %v421
    %464 = vst [vmem:[#allocation5 + $0x78] sm:$0xff] %v423
    %465 = vst [vmem:[#allocation5 + $0x80] sm:$0xff] %v314
    %466 = vst [vmem:[#allocation5 + $0x88] sm:$0xff] %v316
    %467 = vst [vmem:[#allocation5 + $0x90] sm:$0xff] %v427
    %468 = vst [vmem:[#allocation5 + $0x98] sm:$0xff] %v429
    %469 = vst [vmem:[#allocation5 + $0xa0] sm:$0xff] %v320
    %470 = vst [vmem:[#allocation5 + $0xa8] sm:$0xff] %v322
    %471 = vst [vmem:[#allocation5 + $0xb0] sm:$0xff] %v433
    %472 = vst [vmem:[#allocation5 + $0xb8] sm:$0xff] %v435
    %473 = vst [vmem:[#allocation5 + $0xc0] sm:$0xff] %v326
    %474 = vst [vmem:[#allocation5 + $0xc8] sm:$0xff] %v328
    %475 = vst [vmem:[#allocation5 + $0xd0] sm:$0xff] %v439
    %476 = vst [vmem:[#allocation5 + $0xd8] sm:$0xff] %v441
    %477 = vst [vmem:[#allocation5 + $0xe0] sm:$0xff] %v332
    %478 = vst [vmem:[#allocation5 + $0xe8] sm:$0xff] %v334
    %479 = vst [vmem:[#allocation5 + $0xf0] sm:$0xff] %v445
    %480 = vst [vmem:[#allocation5 + $0xf8] sm:$0xff] %v447
    %v481 = vld [vmem:[#allocation2] sm:$0xff]
    %v482 = vld [vmem:[#allocation3] sm:$0xff]
    %s483 = smul.u32 0, 4
    %s484 = smul.addr %s483, 8
    %s485 = scalar_lea.vmem [#allocation5], %s484
    %v486 = vld [vmem:[%s485] sm:$0xff]
    %v487 = vld [vmem:[%s485 + $0x8] sm:$0xff]
    %v488 = vld [vmem:[%s485 + $0x10] sm:$0xff]
    %v489 = vld [vmem:[%s485 + $0x18] sm:$0xff]
    %490 = vmatprep.subr.mxu0 %v105
    %491 = vmatpush1.msra.mxu0 %v104
    %492 = vmatprep.subr.mxu0 %v109
    %493 = vmatpush1.msra.mxu0 %v108
    %494 = vmatprep.subr.mxu0 %v113
    %495 = vmatpush1.msra.mxu0 %v112
    %496 = vmatprep.subr.mxu0 %v117
    %497 = vmatpush1.msra.mxu0 %v116
    %498 = vmatprep.subr.mxu0 %v121
    %499 = vmatpush1.msra.mxu0 %v120
    %500 = vmatprep.subr.mxu0 %v125
    %501 = vmatpush1.msra.mxu0 %v124
    %502 = vmatprep.subr.mxu0 %v129
    %503 = vmatpush1.msra.mxu0 %v128
    %504 = vmatprep.subr.mxu0 %v133
    %505 = vmatpush1.msra.mxu0 %v132
    %506 = vmatprep.subr.mxu0 %v137
    %507 = vmatpush1.msra.mxu0 %v136
    %508 = vmatprep.subr.mxu0 %v141
    %509 = vmatpush1.msra.mxu0 %v140
    %510 = vmatprep.subr.mxu0 %v145
    %511 = vmatpush1.msra.mxu0 %v144
    %512 = vmatprep.subr.mxu0 %v149
    %513 = vmatpush1.msra.mxu0 %v148
    %514 = vmatprep.subr.mxu0 %v153
    %515 = vmatpush1.msra.mxu0 %v152
    %516 = vmatprep.subr.mxu0 %v157
    %517 = vmatpush1.msra.mxu0 %v156
    %518 = vmatprep.subr.mxu0 %v161
    %519 = vmatpush1.msra.mxu0 %v160
    %520 = vmatprep.subr.mxu0 %v165
    %521 = vmatpush1.msra.mxu0 %v164
    %522 = vmatprep.subr.mxu0 0.0
    %523 = vmatpush1.msra.mxu0 0.0
    %524 = vmatprep.subr.mxu0 0.0
    %525 = vmatpush1.msra.mxu0 0.0
    %526 = vmatprep.subr.mxu0 0.0
    %527 = vmatpush1.msra.mxu0 0.0
    %528 = vmatprep.subr.mxu0 0.0
    %529 = vmatpush1.msra.mxu0 0.0
    %530 = vmatprep.subr.mxu0 0.0
    %531 = vmatpush1.msra.mxu0 0.0
    %532 = vmatprep.subr.mxu0 0.0
    %533 = vmatpush1.msra.mxu0 0.0
    %534 = vmatprep.subr.mxu0 0.0
    %535 = vmatpush1.msra.mxu0 0.0
    %536 = vmatprep.subr.mxu0 0.0
    %537 = vmatpush1.msra.mxu0 0.0
    %538 = vmatprep.subr.mxu0 0.0
    %539 = vmatpush1.msra.mxu0 0.0
    %540 = vmatprep.subr.mxu0 0.0
    %541 = vmatpush1.msra.mxu0 0.0
    %542 = vmatprep.subr.mxu0 0.0
    %543 = vmatpush1.msra.mxu0 0.0
    %544 = vmatprep.subr.mxu0 0.0
    %545 = vmatpush1.msra.mxu0 0.0
    %546 = vmatprep.subr.mxu0 0.0
    %547 = vmatpush1.msra.mxu0 0.0
    %548 = vmatprep.subr.mxu0 0.0
    %549 = vmatpush1.msra.mxu0 0.0
    %550 = vmatprep.subr.mxu0 0.0
    %551 = vmatpush1.msra.mxu0 0.0
    %552 = vmatprep.subr.mxu0 0.0
    %553 = vmatpush1.msra.mxu0 0.0
    %554 = vmatprep.mubr.f32.mxu0 0.0
    %555 = vmatmul.mubr.f32.gmra.mrb[0].mxu0 %v481
    %v556 = vpop.f32.mrb[0].mxu0
    %v557 = vadd.f32 0.0, %v556
    %v558 = vpop.f32.mrb[0].mxu0
    %v559 = vadd.f32 0.0, %v558
    %560 = vdwg.mxu0
    %561 = vmatprep.subr.mxu0 %v107
    %562 = vmatpush1.msra.mxu0 %v106
    %563 = vmatprep.subr.mxu0 %v111
    %564 = vmatpush1.msra.mxu0 %v110
    %565 = vmatprep.subr.mxu0 %v115
    %566 = vmatpush1.msra.mxu0 %v114
    %567 = vmatprep.subr.mxu0 %v119
    %568 = vmatpush1.msra.mxu0 %v118
    %569 = vmatprep.subr.mxu0 %v123
    %570 = vmatpush1.msra.mxu0 %v122
    %571 = vmatprep.subr.mxu0 %v127
    %572 = vmatpush1.msra.mxu0 %v126
    %573 = vmatprep.subr.mxu0 %v131
    %574 = vmatpush1.msra.mxu0 %v130
    %575 = vmatprep.subr.mxu0 %v135
    %576 = vmatpush1.msra.mxu0 %v134
    %577 = vmatprep.subr.mxu0 %v139
    %578 = vmatpush1.msra.mxu0 %v138
    %579 = vmatprep.subr.mxu0 %v143
    %580 = vmatpush1.msra.mxu0 %v142
    %581 = vmatprep.subr.mxu0 %v147
    %582 = vmatpush1.msra.mxu0 %v146
    %583 = vmatprep.subr.mxu0 %v151
    %584 = vmatpush1.msra.mxu0 %v150
    %585 = vmatprep.subr.mxu0 %v155
    %586 = vmatpush1.msra.mxu0 %v154
    %587 = vmatprep.subr.mxu0 %v159
    %588 = vmatpush1.msra.mxu0 %v158
    %589 = vmatprep.subr.mxu0 %v163
    %590 = vmatpush1.msra.mxu0 %v162
    %591 = vmatprep.subr.mxu0 %v167
    %592 = vmatpush1.msra.mxu0 %v166
    %593 = vmatprep.subr.mxu0 0.0
    %594 = vmatpush1.msra.mxu0 0.0
    %595 = vmatprep.subr.mxu0 0.0
    %596 = vmatpush1.msra.mxu0 0.0
    %597 = vmatprep.subr.mxu0 0.0
    %598 = vmatpush1.msra.mxu0 0.0
    %599 = vmatprep.subr.mxu0 0.0
    %600 = vmatpush1.msra.mxu0 0.0
    %601 = vmatprep.subr.mxu0 0.0
    %602 = vmatpush1.msra.mxu0 0.0
    %603 = vmatprep.subr.mxu0 0.0
    %604 = vmatpush1.msra.mxu0 0.0
    %605 = vmatprep.subr.mxu0 0.0
    %606 = vmatpush1.msra.mxu0 0.0
    %607 = vmatprep.subr.mxu0 0.0
    %608 = vmatpush1.msra.mxu0 0.0
    %609 = vmatprep.subr.mxu0 0.0
    %610 = vmatpush1.msra.mxu0 0.0
    %611 = vmatprep.subr.mxu0 0.0
    %612 = vmatpush1.msra.mxu0 0.0
    %613 = vmatprep.subr.mxu0 0.0
    %614 = vmatpush1.msra.mxu0 0.0
    %615 = vmatprep.subr.mxu0 0.0
    %616 = vmatpush1.msra.mxu0 0.0
    %617 = vmatprep.subr.mxu0 0.0
    %618 = vmatpush1.msra.mxu0 0.0
    %619 = vmatprep.subr.mxu0 0.0
    %620 = vmatpush1.msra.mxu0 0.0
    %621 = vmatprep.subr.mxu0 0.0
    %622 = vmatpush1.msra.mxu0 0.0
    %623 = vmatprep.subr.mxu0 0.0
    %624 = vmatpush1.msra.mxu0 0.0
    %625 = vmatprep.mubr.f32.mxu0 0.0
    %626 = vmatmul.mubr.f32.gmra.mrb[0].mxu0 %v481
    %v627 = vpop.f32.mrb[0].mxu0
    %v628 = vadd.f32 0.0, %v627
    %v629 = vpop.f32.mrb[0].mxu0
    %v630 = vadd.f32 0.0, %v629
    %631 = vdwg.mxu0
    %v632 = vadd.f32 %v486, %v557
    %v633 = vadd.f32 %v487, %v559
    %v634 = vadd.f32 %v488, %v628
    %v635 = vadd.f32 %v489, %v630
    %v636 = vxor.u32 %v632, 2147483648
    %v637 = vmul.f32 %v636, 1.442695
    %v638 = vpow.pop %v637
    %v639 = vadd.f32 %v638, 1.0
    %v640 = vrcp.pop %v639
    %v641 = vmul.f32 1.0, %v640
    %v642 = vxor.u32 %v633, 2147483648
    %v643 = vmul.f32 %v642, 1.442695
    %v644 = vpow.pop %v643
    %v645 = vadd.f32 %v644, 1.0
    %v646 = vrcp.pop %v645
    %v647 = vmul.f32 1.0, %v646
    %v648 = vtanh.pop %v634
    %v649 = vxor.u32 %v635, 2147483648
    %v650 = vmul.f32 %v649, 1.442695
    %v651 = vpow.pop %v650
    %v652 = vadd.f32 %v651, 1.0
    %v653 = vrcp.pop %v652
    %v654 = vmul.f32 1.0, %v653
    %v655 = vmul.f32 %v647, %v482
    %v656 = vmul.f32 %v641, %v648
    %v657 = vadd.f32 %v655, %v656
    %v658 = vtanh.pop %v657
    %v659 = vmul.f32 %v654, %v658
    %660 = vst [vmem:[#allocation4] sm:$0xff] %v659
    %s661 = smul.u32 1, 4
    %s662 = smul.addr %s661, 8
    %s663 = scalar_lea.vmem [#allocation5], %s662
    %v664 = vld [vmem:[%s663] sm:$0xff]
    %v665 = vld [vmem:[%s663 + $0x8] sm:$0xff]
    %v666 = vld [vmem:[%s663 + $0x10] sm:$0xff]
    %v667 = vld [vmem:[%s663 + $0x18] sm:$0xff]
    %668 = vmatprep.subr.mxu0 %v105
    %669 = vmatpush1.msra.mxu0 %v104
    %670 = vmatprep.subr.mxu0 %v109
    %671 = vmatpush1.msra.mxu0 %v108
    %672 = vmatprep.subr.mxu0 %v113
    %673 = vmatpush1.msra.mxu0 %v112
    %674 = vmatprep.subr.mxu0 %v117
    %675 = vmatpush1.msra.mxu0 %v116
    %676 = vmatprep.subr.mxu0 %v121
    %677 = vmatpush1.msra.mxu0 %v120
    %678 = vmatprep.subr.mxu0 %v125
    %679 = vmatpush1.msra.mxu0 %v124
    %680 = vmatprep.subr.mxu0 %v129
    %681 = vmatpush1.msra.mxu0 %v128
    %682 = vmatprep.subr.mxu0 %v133
    %683 = vmatpush1.msra.mxu0 %v132
    %684 = vmatprep.subr.mxu0 %v137
    %685 = vmatpush1.msra.mxu0 %v136
    %686 = vmatprep.subr.mxu0 %v141
    %687 = vmatpush1.msra.mxu0 %v140
    %688 = vmatprep.subr.mxu0 %v145
    %689 = vmatpush1.msra.mxu0 %v144
    %690 = vmatprep.subr.mxu0 %v149
    %691 = vmatpush1.msra.mxu0 %v148
    %692 = vmatprep.subr.mxu0 %v153
    %693 = vmatpush1.msra.mxu0 %v152
    %694 = vmatprep.subr.mxu0 %v157
    %695 = vmatpush1.msra.mxu0 %v156
    %696 = vmatprep.subr.mxu0 %v161
    %697 = vmatpush1.msra.mxu0 %v160
    %698 = vmatprep.subr.mxu0 %v165
    %699 = vmatpush1.msra.mxu0 %v164
    %700 = vmatprep.subr.mxu0 0.0
    %701 = vmatpush1.msra.mxu0 0.0
    %702 = vmatprep.subr.mxu0 0.0
    %703 = vmatpush1.msra.mxu0 0.0
    %704 = vmatprep.subr.mxu0 0.0
    %705 = vmatpush1.msra.mxu0 0.0
    %706 = vmatprep.subr.mxu0 0.0
    %707 = vmatpush1.msra.mxu0 0.0
    %708 = vmatprep.subr.mxu0 0.0
    %709 = vmatpush1.msra.mxu0 0.0
    %710 = vmatprep.subr.mxu0 0.0
    %711 = vmatpush1.msra.mxu0 0.0
    %712 = vmatprep.subr.mxu0 0.0
    %713 = vmatpush1.msra.mxu0 0.0
    %714 = vmatprep.subr.mxu0 0.0
    %715 = vmatpush1.msra.mxu0 0.0
    %716 = vmatprep.subr.mxu0 0.0
    %717 = vmatpush1.msra.mxu0 0.0
    %718 = vmatprep.subr.mxu0 0.0
    %719 = vmatpush1.msra.mxu0 0.0
    %720 = vmatprep.subr.mxu0 0.0
    %721 = vmatpush1.msra.mxu0 0.0
    %722 = vmatprep.subr.mxu0 0.0
    %723 = vmatpush1.msra.mxu0 0.0
    %724 = vmatprep.subr.mxu0 0.0
    %725 = vmatpush1.msra.mxu0 0.0
    %726 = vmatprep.subr.mxu0 0.0
    %727 = vmatpush1.msra.mxu0 0.0
    %728 = vmatprep.subr.mxu0 0.0
    %729 = vmatpush1.msra.mxu0 0.0
    %730 = vmatprep.subr.mxu0 0.0
    %731 = vmatpush1.msra.mxu0 0.0
    %732 = vmatprep.mubr.f32.mxu0 0.0
    %733 = vmatmul.mubr.f32.gmra.mrb[0].mxu0 %v659
    %v734 = vpop.f32.mrb[0].mxu0
    %v735 = vadd.f32 0.0, %v734
    %v736 = vpop.f32.mrb[0].mxu0
    %v737 = vadd.f32 0.0, %v736
    %738 = vdwg.mxu0
    %739 = vmatprep.subr.mxu0 %v107
    %740 = vmatpush1.msra.mxu0 %v106
    %741 = vmatprep.subr.mxu0 %v111
    %742 = vmatpush1.msra.mxu0 %v110
    %743 = vmatprep.subr.mxu0 %v115
    %744 = vmatpush1.msra.mxu0 %v114
    %745 = vmatprep.subr.mxu0 %v119
    %746 = vmatpush1.msra.mxu0 %v118
    %747 = vmatprep.subr.mxu0 %v123
    %748 = vmatpush1.msra.mxu0 %v122
    %749 = vmatprep.subr.mxu0 %v127
    %750 = vmatpush1.msra.mxu0 %v126
    %751 = vmatprep.subr.mxu0 %v131
    %752 = vmatpush1.msra.mxu0 %v130
    %753 = vmatprep.subr.mxu0 %v135
    %754 = vmatpush1.msra.mxu0 %v134
    %755 = vmatprep.subr.mxu0 %v139
    %756 = vmatpush1.msra.mxu0 %v138
    %757 = vmatprep.subr.mxu0 %v143
    %758 = vmatpush1.msra.mxu0 %v142
    %759 = vmatprep.subr.mxu0 %v147
    %760 = vmatpush1.msra.mxu0 %v146
    %761 = vmatprep.subr.mxu0 %v151
    %762 = vmatpush1.msra.mxu0 %v150
    %763 = vmatprep.subr.mxu0 %v155
    %764 = vmatpush1.msra.mxu0 %v154
    %765 = vmatprep.subr.mxu0 %v159
    %766 = vmatpush1.msra.mxu0 %v158
    %767 = vmatprep.subr.mxu0 %v163
    %768 = vmatpush1.msra.mxu0 %v162
    %769 = vmatprep.subr.mxu0 %v167
    %770 = vmatpush1.msra.mxu0 %v166
    %771 = vmatprep.subr.mxu0 0.0
    %772 = vmatpush1.msra.mxu0 0.0
    %773 = vmatprep.subr.mxu0 0.0
    %774 = vmatpush1.msra.mxu0 0.0
    %775 = vmatprep.subr.mxu0 0.0
    %776 = vmatpush1.msra.mxu0 0.0
    %777 = vmatprep.subr.mxu0 0.0
    %778 = vmatpush1.msra.mxu0 0.0
    %779 = vmatprep.subr.mxu0 0.0
    %780 = vmatpush1.msra.mxu0 0.0
    %781 = vmatprep.subr.mxu0 0.0
    %782 = vmatpush1.msra.mxu0 0.0
    %783 = vmatprep.subr.mxu0 0.0
    %784 = vmatpush1.msra.mxu0 0.0
    %785 = vmatprep.subr.mxu0 0.0
    %786 = vmatpush1.msra.mxu0 0.0
    %787 = vmatprep.subr.mxu0 0.0
    %788 = vmatpush1.msra.mxu0 0.0
    %789 = vmatprep.subr.mxu0 0.0
    %790 = vmatpush1.msra.mxu0 0.0
    %791 = vmatprep.subr.mxu0 0.0
    %792 = vmatpush1.msra.mxu0 0.0
    %793 = vmatprep.subr.mxu0 0.0
    %794 = vmatpush1.msra.mxu0 0.0
    %795 = vmatprep.subr.mxu0 0.0
    %796 = vmatpush1.msra.mxu0 0.0
    %797 = vmatprep.subr.mxu0 0.0
    %798 = vmatpush1.msra.mxu0 0.0
    %799 = vmatprep.subr.mxu0 0.0
    %800 = vmatpush1.msra.mxu0 0.0
    %801 = vmatprep.subr.mxu0 0.0
    %802 = vmatpush1.msra.mxu0 0.0
    %803 = vmatprep.mubr.f32.mxu0 0.0
    %804 = vmatmul.mubr.f32.gmra.mrb[0].mxu0 %v659
    %v805 = vpop.f32.mrb[0].mxu0
    %v806 = vadd.f32 0.0, %v805
    %v807 = vpop.f32.mrb[0].mxu0
    %v808 = vadd.f32 0.0, %v807
    %809 = vdwg.mxu0
    %v810 = vadd.f32 %v664, %v735
    %v811 = vadd.f32 %v665, %v737
    %v812 = vadd.f32 %v666, %v806
    %v813 = vadd.f32 %v667, %v808
    %v814 = vxor.u32 %v810, 2147483648
    %v815 = vmul.f32 %v814, 1.442695
    %v816 = vpow.pop %v815
    %v817 = vadd.f32 %v816, 1.0
    %v818 = vrcp.pop %v817
    %v819 = vmul.f32 1.0, %v818
    %v820 = vxor.u32 %v811, 2147483648
    %v821 = vmul.f32 %v820, 1.442695
    %v822 = vpow.pop %v821
    %v823 = vadd.f32 %v822, 1.0
    %v824 = vrcp.pop %v823
    %v825 = vmul.f32 1.0, %v824
    %v826 = vtanh.pop %v812
    %v827 = vxor.u32 %v813, 2147483648
    %v828 = vmul.f32 %v827, 1.442695
    %v829 = vpow.pop %v828
    %v830 = vadd.f32 %v829, 1.0
    %v831 = vrcp.pop %v830
    %v832 = vmul.f32 1.0, %v831
    %v833 = vmul.f32 %v825, %v657
    %v834 = vmul.f32 %v819, %v826
    %v835 = vadd.f32 %v833, %v834
    %v836 = vtanh.pop %v835
    %v837 = vmul.f32 %v832, %v836
    %s838 = scalar_lea.vmem [#allocation4], 8
    %839 = vst [vmem:[%s838] sm:$0xff] %v837
    %s840 = smul.u32 2, 4
    %s841 = smul.addr %s840, 8
    %s842 = scalar_lea.vmem [#allocation5], %s841
    %v843 = vld [vmem:[%s842] sm:$0xff]
    %v844 = vld [vmem:[%s842 + $0x8] sm:$0xff]
    %v845 = vld [vmem:[%s842 + $0x10] sm:$0xff]
    %v846 = vld [vmem:[%s842 + $0x18] sm:$0xff]
    %847 = vmatprep.subr.mxu0 %v105
    %848 = vmatpush1.msra.mxu0 %v104
    %849 = vmatprep.subr.mxu0 %v109
    %850 = vmatpush1.msra.mxu0 %v108
    %851 = vmatprep.subr.mxu0 %v113
    %852 = vmatpush1.msra.mxu0 %v112
    %853 = vmatprep.subr.mxu0 %v117
    %854 = vmatpush1.msra.mxu0 %v116
    %855 = vmatprep.subr.mxu0 %v121
    %856 = vmatpush1.msra.mxu0 %v120
    %857 = vmatprep.subr.mxu0 %v125
    %858 = vmatpush1.msra.mxu0 %v124
    %859 = vmatprep.subr.mxu0 %v129
    %860 = vmatpush1.msra.mxu0 %v128
    %861 = vmatprep.subr.mxu0 %v133
    %862 = vmatpush1.msra.mxu0 %v132
    %863 = vmatprep.subr.mxu0 %v137
    %864 = vmatpush1.msra.mxu0 %v136
    %865 = vmatprep.subr.mxu0 %v141
    %866 = vmatpush1.msra.mxu0 %v140
    %867 = vmatprep.subr.mxu0 %v145
    %868 = vmatpush1.msra.mxu0 %v144
    %869 = vmatprep.subr.mxu0 %v149
    %870 = vmatpush1.msra.mxu0 %v148
    %871 = vmatprep.subr.mxu0 %v153
    %872 = vmatpush1.msra.mxu0 %v152
    %873 = vmatprep.subr.mxu0 %v157
    %874 = vmatpush1.msra.mxu0 %v156
    %875 = vmatprep.subr.mxu0 %v161
    %876 = vmatpush1.msra.mxu0 %v160
    %877 = vmatprep.subr.mxu0 %v165
    %878 = vmatpush1.msra.mxu0 %v164
    %879 = vmatprep.subr.mxu0 0.0
    %880 = vmatpush1.msra.mxu0 0.0
    %881 = vmatprep.subr.mxu0 0.0
    %882 = vmatpush1.msra.mxu0 0.0
    %883 = vmatprep.subr.mxu0 0.0
    %884 = vmatpush1.msra.mxu0 0.0
    %885 = vmatprep.subr.mxu0 0.0
    %886 = vmatpush1.msra.mxu0 0.0
    %887 = vmatprep.subr.mxu0 0.0
    %888 = vmatpush1.msra.mxu0 0.0
    %889 = vmatprep.subr.mxu0 0.0
    %890 = vmatpush1.msra.mxu0 0.0
    %891 = vmatprep.subr.mxu0 0.0
    %892 = vmatpush1.msra.mxu0 0.0
    %893 = vmatprep.subr.mxu0 0.0
    %894 = vmatpush1.msra.mxu0 0.0
    %895 = vmatprep.subr.mxu0 0.0
    %896 = vmatpush1.msra.mxu0 0.0
    %897 = vmatprep.subr.mxu0 0.0
    %898 = vmatpush1.msra.mxu0 0.0
    %899 = vmatprep.subr.mxu0 0.0
    %900 = vmatpush1.msra.mxu0 0.0
    %901 = vmatprep.subr.mxu0 0.0
    %902 = vmatpush1.msra.mxu0 0.0
    %903 = vmatprep.subr.mxu0 0.0
    %904 = vmatpush1.msra.mxu0 0.0
    %905 = vmatprep.subr.mxu0 0.0
    %906 = vmatpush1.msra.mxu0 0.0
    %907 = vmatprep.subr.mxu0 0.0
    %908 = vmatpush1.msra.mxu0 0.0
    %909 = vmatprep.subr.mxu0 0.0
    %910 = vmatpush1.msra.mxu0 0.0
    %911 = vmatprep.mubr.f32.mxu0 0.0
    %912 = vmatmul.mubr.f32.gmra.mrb[0].mxu0 %v837
    %v913 = vpop.f32.mrb[0].mxu0
    %v914 = vadd.f32 0.0, %v913
    %v915 = vpop.f32.mrb[0].mxu0
    %v916 = vadd.f32 0.0, %v915
    %917 = vdwg.mxu0
    %918 = vmatprep.subr.mxu0 %v107
    %919 = vmatpush1.msra.mxu0 %v106
    %920 = vmatprep.subr.mxu0 %v111
    %921 = vmatpush1.msra.mxu0 %v110
    %922 = vmatprep.subr.mxu0 %v115
    %923 = vmatpush1.msra.mxu0 %v114
    %924 = vmatprep.subr.mxu0 %v119
    %925 = vmatpush1.msra.mxu0 %v118
    %926 = vmatprep.subr.mxu0 %v123
    %927 = vmatpush1.msra.mxu0 %v122
    %928 = vmatprep.subr.mxu0 %v127
    %929 = vmatpush1.msra.mxu0 %v126
    %930 = vmatprep.subr.mxu0 %v131
    %931 = vmatpush1.msra.mxu0 %v130
    %932 = vmatprep.subr.mxu0 %v135
    %933 = vmatpush1.msra.mxu0 %v134
    %934 = vmatprep.subr.mxu0 %v139
    %935 = vmatpush1.msra.mxu0 %v138
    %936 = vmatprep.subr.mxu0 %v143
    %937 = vmatpush1.msra.mxu0 %v142
    %938 = vmatprep.subr.mxu0 %v147
    %939 = vmatpush1.msra.mxu0 %v146
    %940 = vmatprep.subr.mxu0 %v151
    %941 = vmatpush1.msra.mxu0 %v150
    %942 = vmatprep.subr.mxu0 %v155
    %943 = vmatpush1.msra.mxu0 %v154
    %944 = vmatprep.subr.mxu0 %v159
    %945 = vmatpush1.msra.mxu0 %v158
    %946 = vmatprep.subr.mxu0 %v163
    %947 = vmatpush1.msra.mxu0 %v162
    %948 = vmatprep.subr.mxu0 %v167
    %949 = vmatpush1.msra.mxu0 %v166
    %950 = vmatprep.subr.mxu0 0.0
    %951 = vmatpush1.msra.mxu0 0.0
    %952 = vmatprep.subr.mxu0 0.0
    %953 = vmatpush1.msra.mxu0 0.0
    %954 = vmatprep.subr.mxu0 0.0
    %955 = vmatpush1.msra.mxu0 0.0
    %956 = vmatprep.subr.mxu0 0.0
    %957 = vmatpush1.msra.mxu0 0.0
    %958 = vmatprep.subr.mxu0 0.0
    %959 = vmatpush1.msra.mxu0 0.0
    %960 = vmatprep.subr.mxu0 0.0
    %961 = vmatpush1.msra.mxu0 0.0
    %962 = vmatprep.subr.mxu0 0.0
    %963 = vmatpush1.msra.mxu0 0.0
    %964 = vmatprep.subr.mxu0 0.0
    %965 = vmatpush1.msra.mxu0 0.0
    %966 = vmatprep.subr.mxu0 0.0
    %967 = vmatpush1.msra.mxu0 0.0
    %968 = vmatprep.subr.mxu0 0.0
    %969 = vmatpush1.msra.mxu0 0.0
    %970 = vmatprep.subr.mxu0 0.0
    %971 = vmatpush1.msra.mxu0 0.0
    %972 = vmatprep.subr.mxu0 0.0
    %973 = vmatpush1.msra.mxu0 0.0
    %974 = vmatprep.subr.mxu0 0.0
    %975 = vmatpush1.msra.mxu0 0.0
    %976 = vmatprep.subr.mxu0 0.0
    %977 = vmatpush1.msra.mxu0 0.0
    %978 = vmatprep.subr.mxu0 0.0
    %979 = vmatpush1.msra.mxu0 0.0
    %980 = vmatprep.subr.mxu0 0.0
    %981 = vmatpush1.msra.mxu0 0.0
    %982 = vmatprep.mubr.f32.mxu0 0.0
    %983 = vmatmul.mubr.f32.gmra.mrb[0].mxu0 %v837
    %v984 = vpop.f32.mrb[0].mxu0
    %v985 = vadd.f32 0.0, %v984
    %v986 = vpop.f32.mrb[0].mxu0
    %v987 = vadd.f32 0.0, %v986
    %988 = vdwg.mxu0
    %v989 = vadd.f32 %v843, %v914
    %v990 = vadd.f32 %v844, %v916
    %v991 = vadd.f32 %v845, %v985
    %v992 = vadd.f32 %v846, %v987
    %v993 = vxor.u32 %v989, 2147483648
    %v994 = vmul.f32 %v993, 1.442695
    %v995 = vpow.pop %v994
    %v996 = vadd.f32 %v995, 1.0
    %v997 = vrcp.pop %v996
    %v998 = vmul.f32 1.0, %v997
    %v999 = vxor.u32 %v990, 2147483648
    %v1000 = vmul.f32 %v999, 1.442695
    %v1001 = vpow.pop %v1000
    %v1002 = vadd.f32 %v1001, 1.0
    %v1003 = vrcp.pop %v1002
    %v1004 = vmul.f32 1.0, %v1003
    %v1005 = vtanh.pop %v991
    %v1006 = vxor.u32 %v992, 2147483648
    %v1007 = vmul.f32 %v1006, 1.442695
    %v1008 = vpow.pop %v1007
    %v1009 = vadd.f32 %v1008, 1.0
    %v1010 = vrcp.pop %v1009
    %v1011 = vmul.f32 1.0, %v1010
    %v1012 = vmul.f32 %v1004, %v835
    %v1013 = vmul.f32 %v998, %v1005
    %v1014 = vadd.f32 %v1012, %v1013
    %v1015 = vtanh.pop %v1014
    %v1016 = vmul.f32 %v1011, %v1015
    %s1017 = scalar_lea.vmem [#allocation4], 16
    %1018 = vst [vmem:[%s1017] sm:$0xff] %v1016
    %s1019 = smul.u32 3, 4
    %s1020 = smul.addr %s1019, 8
    %s1021 = scalar_lea.vmem [#allocation5], %s1020
    %v1022 = vld [vmem:[%s1021] sm:$0xff]
    %v1023 = vld [vmem:[%s1021 + $0x8] sm:$0xff]
    %v1024 = vld [vmem:[%s1021 + $0x10] sm:$0xff]
    %v1025 = vld [vmem:[%s1021 + $0x18] sm:$0xff]
    %1026 = vmatprep.subr.mxu0 %v105
    %1027 = vmatpush1.msra.mxu0 %v104
    %1028 = vmatprep.subr.mxu0 %v109
    %1029 = vmatpush1.msra.mxu0 %v108
    %1030 = vmatprep.subr.mxu0 %v113
    %1031 = vmatpush1.msra.mxu0 %v112
    %1032 = vmatprep.subr.mxu0 %v117
    %1033 = vmatpush1.msra.mxu0 %v116
    %1034 = vmatprep.subr.mxu0 %v121
    %1035 = vmatpush1.msra.mxu0 %v120
    %1036 = vmatprep.subr.mxu0 %v125
    %1037 = vmatpush1.msra.mxu0 %v124
    %1038 = vmatprep.subr.mxu0 %v129
    %1039 = vmatpush1.msra.mxu0 %v128
    %1040 = vmatprep.subr.mxu0 %v133
    %1041 = vmatpush1.msra.mxu0 %v132
    %1042 = vmatprep.subr.mxu0 %v137
    %1043 = vmatpush1.msra.mxu0 %v136
    %1044 = vmatprep.subr.mxu0 %v141
    %1045 = vmatpush1.msra.mxu0 %v140
    %1046 = vmatprep.subr.mxu0 %v145
    %1047 = vmatpush1.msra.mxu0 %v144
    %1048 = vmatprep.subr.mxu0 %v149
    %1049 = vmatpush1.msra.mxu0 %v148
    %1050 = vmatprep.subr.mxu0 %v153
    %1051 = vmatpush1.msra.mxu0 %v152
    %1052 = vmatprep.subr.mxu0 %v157
    %1053 = vmatpush1.msra.mxu0 %v156
    %1054 = vmatprep.subr.mxu0 %v161
    %1055 = vmatpush1.msra.mxu0 %v160
    %1056 = vmatprep.subr.mxu0 %v165
    %1057 = vmatpush1.msra.mxu0 %v164
    %1058 = vmatprep.subr.mxu0 0.0
    %1059 = vmatpush1.msra.mxu0 0.0
    %1060 = vmatprep.subr.mxu0 0.0
    %1061 = vmatpush1.msra.mxu0 0.0
    %1062 = vmatprep.subr.mxu0 0.0
    %1063 = vmatpush1.msra.mxu0 0.0
    %1064 = vmatprep.subr.mxu0 0.0
    %1065 = vmatpush1.msra.mxu0 0.0
    %1066 = vmatprep.subr.mxu0 0.0
    %1067 = vmatpush1.msra.mxu0 0.0
    %1068 = vmatprep.subr.mxu0 0.0
    %1069 = vmatpush1.msra.mxu0 0.0
    %1070 = vmatprep.subr.mxu0 0.0
    %1071 = vmatpush1.msra.mxu0 0.0
    %1072 = vmatprep.subr.mxu0 0.0
    %1073 = vmatpush1.msra.mxu0 0.0
    %1074 = vmatprep.subr.mxu0 0.0
    %1075 = vmatpush1.msra.mxu0 0.0
    %1076 = vmatprep.subr.mxu0 0.0
    %1077 = vmatpush1.msra.mxu0 0.0
    %1078 = vmatprep.subr.mxu0 0.0
    %1079 = vmatpush1.msra.mxu0 0.0
    %1080 = vmatprep.subr.mxu0 0.0
    %1081 = vmatpush1.msra.mxu0 0.0
    %1082 = vmatprep.subr.mxu0 0.0
    %1083 = vmatpush1.msra.mxu0 0.0
    %1084 = vmatprep.subr.mxu0 0.0
    %1085 = vmatpush1.msra.mxu0 0.0
    %1086 = vmatprep.subr.mxu0 0.0
    %1087 = vmatpush1.msra.mxu0 0.0
    %1088 = vmatprep.subr.mxu0 0.0
    %1089 = vmatpush1.msra.mxu0 0.0
    %1090 = vmatprep.mubr.f32.mxu0 0.0
    %1091 = vmatmul.mubr.f32.gmra.mrb[0].mxu0 %v1016
    %v1092 = vpop.f32.mrb[0].mxu0
    %v1093 = vadd.f32 0.0, %v1092
    %v1094 = vpop.f32.mrb[0].mxu0
    %v1095 = vadd.f32 0.0, %v1094
    %1096 = vdwg.mxu0
    %1097 = vmatprep.subr.mxu0 %v107
    %1098 = vmatpush1.msra.mxu0 %v106
    %1099 = vmatprep.subr.mxu0 %v111
    %1100 = vmatpush1.msra.mxu0 %v110
    %1101 = vmatprep.subr.mxu0 %v115
    %1102 = vmatpush1.msra.mxu0 %v114
    %1103 = vmatprep.subr.mxu0 %v119
    %1104 = vmatpush1.msra.mxu0 %v118
    %1105 = vmatprep.subr.mxu0 %v123
    %1106 = vmatpush1.msra.mxu0 %v122
    %1107 = vmatprep.subr.mxu0 %v127
    %1108 = vmatpush1.msra.mxu0 %v126
    %1109 = vmatprep.subr.mxu0 %v131
    %1110 = vmatpush1.msra.mxu0 %v130
    %1111 = vmatprep.subr.mxu0 %v135
    %1112 = vmatpush1.msra.mxu0 %v134
    %1113 = vmatprep.subr.mxu0 %v139
    %1114 = vmatpush1.msra.mxu0 %v138
    %1115 = vmatprep.subr.mxu0 %v143
    %1116 = vmatpush1.msra.mxu0 %v142
    %1117 = vmatprep.subr.mxu0 %v147
    %1118 = vmatpush1.msra.mxu0 %v146
    %1119 = vmatprep.subr.mxu0 %v151
    %1120 = vmatpush1.msra.mxu0 %v150
    %1121 = vmatprep.subr.mxu0 %v155
    %1122 = vmatpush1.msra.mxu0 %v154
    %1123 = vmatprep.subr.mxu0 %v159
    %1124 = vmatpush1.msra.mxu0 %v158
    %1125 = vmatprep.subr.mxu0 %v163
    %1126 = vmatpush1.msra.mxu0 %v162
    %1127 = vmatprep.subr.mxu0 %v167
    %1128 = vmatpush1.msra.mxu0 %v166
    %1129 = vmatprep.subr.mxu0 0.0
    %1130 = vmatpush1.msra.mxu0 0.0
    %1131 = vmatprep.subr.mxu0 0.0
    %1132 = vmatpush1.msra.mxu0 0.0
    %1133 = vmatprep.subr.mxu0 0.0
    %1134 = vmatpush1.msra.mxu0 0.0
    %1135 = vmatprep.subr.mxu0 0.0
    %1136 = vmatpush1.msra.mxu0 0.0
    %1137 = vmatprep.subr.mxu0 0.0
    %1138 = vmatpush1.msra.mxu0 0.0
    %1139 = vmatprep.subr.mxu0 0.0
    %1140 = vmatpush1.msra.mxu0 0.0
    %1141 = vmatprep.subr.mxu0 0.0
    %1142 = vmatpush1.msra.mxu0 0.0
    %1143 = vmatprep.subr.mxu0 0.0
    %1144 = vmatpush1.msra.mxu0 0.0
    %1145 = vmatprep.subr.mxu0 0.0
    %1146 = vmatpush1.msra.mxu0 0.0
    %1147 = vmatprep.subr.mxu0 0.0
    %1148 = vmatpush1.msra.mxu0 0.0
    %1149 = vmatprep.subr.mxu0 0.0
    %1150 = vmatpush1.msra.mxu0 0.0
    %1151 = vmatprep.subr.mxu0 0.0
    %1152 = vmatpush1.msra.mxu0 0.0
    %1153 = vmatprep.subr.mxu0 0.0
    %1154 = vmatpush1.msra.mxu0 0.0
    %1155 = vmatprep.subr.mxu0 0.0
    %1156 = vmatpush1.msra.mxu0 0.0
    %1157 = vmatprep.subr.mxu0 0.0
    %1158 = vmatpush1.msra.mxu0 0.0
    %1159 = vmatprep.subr.mxu0 0.0
    %1160 = vmatpush1.msra.mxu0 0.0
    %1161 = vmatprep.mubr.f32.mxu0 0.0
    %1162 = vmatmul.mubr.f32.gmra.mrb[0].mxu0 %v1016
    %v1163 = vpop.f32.mrb[0].mxu0
    %v1164 = vadd.f32 0.0, %v1163
    %v1165 = vpop.f32.mrb[0].mxu0
    %v1166 = vadd.f32 0.0, %v1165
    %1167 = vdwg.mxu0
    %v1168 = vadd.f32 %v1022, %v1093
    %v1169 = vadd.f32 %v1023, %v1095
    %v1170 = vadd.f32 %v1024, %v1164
    %v1171 = vadd.f32 %v1025, %v1166
    %v1172 = vxor.u32 %v1168, 2147483648
    %v1173 = vmul.f32 %v1172, 1.442695
    %v1174 = vpow.pop %v1173
    %v1175 = vadd.f32 %v1174, 1.0
    %v1176 = vrcp.pop %v1175
    %v1177 = vmul.f32 1.0, %v1176
    %v1178 = vxor.u32 %v1169, 2147483648
    %v1179 = vmul.f32 %v1178, 1.442695
    %v1180 = vpow.pop %v1179
    %v1181 = vadd.f32 %v1180, 1.0
    %v1182 = vrcp.pop %v1181
    %v1183 = vmul.f32 1.0, %v1182
    %v1184 = vtanh.pop %v1170
    %v1185 = vxor.u32 %v1171, 2147483648
    %v1186 = vmul.f32 %v1185, 1.442695
    %v1187 = vpow.pop %v1186
    %v1188 = vadd.f32 %v1187, 1.0
    %v1189 = vrcp.pop %v1188
    %v1190 = vmul.f32 1.0, %v1189
    %v1191 = vmul.f32 %v1183, %v1014
    %v1192 = vmul.f32 %v1177, %v1184
    %v1193 = vadd.f32 %v1191, %v1192
    %v1194 = vtanh.pop %v1193
    %v1195 = vmul.f32 %v1190, %v1194
    %s1196 = scalar_lea.vmem [#allocation4], 24
    %1197 = vst [vmem:[%s1196] sm:$0xff] %v1195
    %s1198 = smul.u32 4, 4
    %s1199 = smul.addr %s1198, 8
    %s1200 = scalar_lea.vmem [#allocation5], %s1199
    %v1201 = vld [vmem:[%s1200] sm:$0xff]
    %v1202 = vld [vmem:[%s1200 + $0x8] sm:$0xff]
    %v1203 = vld [vmem:[%s1200 + $0x10] sm:$0xff]
    %v1204 = vld [vmem:[%s1200 + $0x18] sm:$0xff]
    %1205 = vmatprep.subr.mxu0 %v105
    %1206 = vmatpush1.msra.mxu0 %v104
    %1207 = vmatprep.subr.mxu0 %v109
    %1208 = vmatpush1.msra.mxu0 %v108
    %1209 = vmatprep.subr.mxu0 %v113
    %1210 = vmatpush1.msra.mxu0 %v112
    %1211 = vmatprep.subr.mxu0 %v117
    %1212 = vmatpush1.msra.mxu0 %v116
    %1213 = vmatprep.subr.mxu0 %v121
    %1214 = vmatpush1.msra.mxu0 %v120
    %1215 = vmatprep.subr.mxu0 %v125
    %1216 = vmatpush1.msra.mxu0 %v124
    %1217 = vmatprep.subr.mxu0 %v129
    %1218 = vmatpush1.msra.mxu0 %v128
    %1219 = vmatprep.subr.mxu0 %v133
    %1220 = vmatpush1.msra.mxu0 %v132
    %1221 = vmatprep.subr.mxu0 %v137
    %1222 = vmatpush1.msra.mxu0 %v136
    %1223 = vmatprep.subr.mxu0 %v141
    %1224 = vmatpush1.msra.mxu0 %v140
    %1225 = vmatprep.subr.mxu0 %v145
    %1226 = vmatpush1.msra.mxu0 %v144
    %1227 = vmatprep.subr.mxu0 %v149
    %1228 = vmatpush1.msra.mxu0 %v148
    %1229 = vmatprep.subr.mxu0 %v153
    %1230 = vmatpush1.msra.mxu0 %v152
    %1231 = vmatprep.subr.mxu0 %v157
    %1232 = vmatpush1.msra.mxu0 %v156
    %1233 = vmatprep.subr.mxu0 %v161
    %1234 = vmatpush1.msra.mxu0 %v160
    %1235 = vmatprep.subr.mxu0 %v165
    %1236 = vmatpush1.msra.mxu0 %v164
    %1237 = vmatprep.subr.mxu0 0.0
    %1238 = vmatpush1.msra.mxu0 0.0
    %1239 = vmatprep.subr.mxu0 0.0
    %1240 = vmatpush1.msra.mxu0 0.0
    %1241 = vmatprep.subr.mxu0 0.0
    %1242 = vmatpush1.msra.mxu0 0.0
    %1243 = vmatprep.subr.mxu0 0.0
    %1244 = vmatpush1.msra.mxu0 0.0
    %1245 = vmatprep.subr.mxu0 0.0
    %1246 = vmatpush1.msra.mxu0 0.0
    %1247 = vmatprep.subr.mxu0 0.0
    %1248 = vmatpush1.msra.mxu0 0.0
    %1249 = vmatprep.subr.mxu0 0.0
    %1250 = vmatpush1.msra.mxu0 0.0
    %1251 = vmatprep.subr.mxu0 0.0
    %1252 = vmatpush1.msra.mxu0 0.0
    %1253 = vmatprep.subr.mxu0 0.0
    %1254 = vmatpush1.msra.mxu0 0.0
    %1255 = vmatprep.subr.mxu0 0.0
    %1256 = vmatpush1.msra.mxu0 0.0
    %1257 = vmatprep.subr.mxu0 0.0
    %1258 = vmatpush1.msra.mxu0 0.0
    %1259 = vmatprep.subr.mxu0 0.0
    %1260 = vmatpush1.msra.mxu0 0.0
    %1261 = vmatprep.subr.mxu0 0.0
    %1262 = vmatpush1.msra.mxu0 0.0
    %1263 = vmatprep.subr.mxu0 0.0
    %1264 = vmatpush1.msra.mxu0 0.0
    %1265 = vmatprep.subr.mxu0 0.0
    %1266 = vmatpush1.msra.mxu0 0.0
    %1267 = vmatprep.subr.mxu0 0.0
    %1268 = vmatpush1.msra.mxu0 0.0
    %1269 = vmatprep.mubr.f32.mxu0 0.0
    %1270 = vmatmul.mubr.f32.gmra.mrb[0].mxu0 %v1195
    %v1271 = vpop.f32.mrb[0].mxu0
    %v1272 = vadd.f32 0.0, %v1271
    %v1273 = vpop.f32.mrb[0].mxu0
    %v1274 = vadd.f32 0.0, %v1273
    %1275 = vdwg.mxu0
    %1276 = vmatprep.subr.mxu0 %v107
    %1277 = vmatpush1.msra.mxu0 %v106
    %1278 = vmatprep.subr.mxu0 %v111
    %1279 = vmatpush1.msra.mxu0 %v110
    %1280 = vmatprep.subr.mxu0 %v115
    %1281 = vmatpush1.msra.mxu0 %v114
    %1282 = vmatprep.subr.mxu0 %v119
    %1283 = vmatpush1.msra.mxu0 %v118
    %1284 = vmatprep.subr.mxu0 %v123
    %1285 = vmatpush1.msra.mxu0 %v122
    %1286 = vmatprep.subr.mxu0 %v127
    %1287 = vmatpush1.msra.mxu0 %v126
    %1288 = vmatprep.subr.mxu0 %v131
    %1289 = vmatpush1.msra.mxu0 %v130
    %1290 = vmatprep.subr.mxu0 %v135
    %1291 = vmatpush1.msra.mxu0 %v134
    %1292 = vmatprep.subr.mxu0 %v139
    %1293 = vmatpush1.msra.mxu0 %v138
    %1294 = vmatprep.subr.mxu0 %v143
    %1295 = vmatpush1.msra.mxu0 %v142
    %1296 = vmatprep.subr.mxu0 %v147
    %1297 = vmatpush1.msra.mxu0 %v146
    %1298 = vmatprep.subr.mxu0 %v151
    %1299 = vmatpush1.msra.mxu0 %v150
    %1300 = vmatprep.subr.mxu0 %v155
    %1301 = vmatpush1.msra.mxu0 %v154
    %1302 = vmatprep.subr.mxu0 %v159
    %1303 = vmatpush1.msra.mxu0 %v158
    %1304 = vmatprep.subr.mxu0 %v163
    %1305 = vmatpush1.msra.mxu0 %v162
    %1306 = vmatprep.subr.mxu0 %v167
    %1307 = vmatpush1.msra.mxu0 %v166
    %1308 = vmatprep.subr.mxu0 0.0
    %1309 = vmatpush1.msra.mxu0 0.0
    %1310 = vmatprep.subr.mxu0 0.0
    %1311 = vmatpush1.msra.mxu0 0.0
    %1312 = vmatprep.subr.mxu0 0.0
    %1313 = vmatpush1.msra.mxu0 0.0
    %1314 = vmatprep.subr.mxu0 0.0
    %1315 = vmatpush1.msra.mxu0 0.0
    %1316 = vmatprep.subr.mxu0 0.0
    %1317 = vmatpush1.msra.mxu0 0.0
    %1318 = vmatprep.subr.mxu0 0.0
    %1319 = vmatpush1.msra.mxu0 0.0
    %1320 = vmatprep.subr.mxu0 0.0
    %1321 = vmatpush1.msra.mxu0 0.0
    %1322 = vmatprep.subr.mxu0 0.0
    %1323 = vmatpush1.msra.mxu0 0.0
    %1324 = vmatprep.subr.mxu0 0.0
    %1325 = vmatpush1.msra.mxu0 0.0
    %1326 = vmatprep.subr.mxu0 0.0
    %1327 = vmatpush1.msra.mxu0 0.0
    %1328 = vmatprep.subr.mxu0 0.0
    %1329 = vmatpush1.msra.mxu0 0.0
    %1330 = vmatprep.subr.mxu0 0.0
    %1331 = vmatpush1.msra.mxu0 0.0
    %1332 = vmatprep.subr.mxu0 0.0
    %1333 = vmatpush1.msra.mxu0 0.0
    %1334 = vmatprep.subr.mxu0 0.0
    %1335 = vmatpush1.msra.mxu0 0.0
    %1336 = vmatprep.subr.mxu0 0.0
    %1337 = vmatpush1.msra.mxu0 0.0
    %1338 = vmatprep.subr.mxu0 0.0
    %1339 = vmatpush1.msra.mxu0 0.0
    %1340 = vmatprep.mubr.f32.mxu0 0.0
    %1341 = vmatmul.mubr.f32.gmra.mrb[0].mxu0 %v1195
    %v1342 = vpop.f32.mrb[0].mxu0
    %v1343 = vadd.f32 0.0, %v1342
    %v1344 = vpop.f32.mrb[0].mxu0
    %v1345 = vadd.f32 0.0, %v1344
    %1346 = vdwg.mxu0
    %v1347 = vadd.f32 %v1201, %v1272
    %v1348 = vadd.f32 %v1202, %v1274
    %v1349 = vadd.f32 %v1203, %v1343
    %v1350 = vadd.f32 %v1204, %v1345
    %v1351 = vxor.u32 %v1347, 2147483648
    %v1352 = vmul.f32 %v1351, 1.442695
    %v1353 = vpow.pop %v1352
    %v1354 = vadd.f32 %v1353, 1.0
    %v1355 = vrcp.pop %v1354
    %v1356 = vmul.f32 1.0, %v1355
    %v1357 = vxor.u32 %v1348, 2147483648
    %v1358 = vmul.f32 %v1357, 1.442695
    %v1359 = vpow.pop %v1358
    %v1360 = vadd.f32 %v1359, 1.0
    %v1361 = vrcp.pop %v1360
    %v1362 = vmul.f32 1.0, %v1361
    %v1363 = vtanh.pop %v1349
    %v1364 = vxor.u32 %v1350, 2147483648
    %v1365 = vmul.f32 %v1364, 1.442695
    %v1366 = vpow.pop %v1365
    %v1367 = vadd.f32 %v1366, 1.0
    %v1368 = vrcp.pop %v1367
    %v1369 = vmul.f32 1.0, %v1368
    %v1370 = vmul.f32 %v1362, %v1193
    %v1371 = vmul.f32 %v1356, %v1363
    %v1372 = vadd.f32 %v1370, %v1371
    %v1373 = vtanh.pop %v1372
    %v1374 = vmul.f32 %v1369, %v1373
    %s1375 = scalar_lea.vmem [#allocation4], 32
    %1376 = vst [vmem:[%s1375] sm:$0xff] %v1374
    %s1377 = smul.u32 5, 4
    %s1378 = smul.addr %s1377, 8
    %s1379 = scalar_lea.vmem [#allocation5], %s1378
    %v1380 = vld [vmem:[%s1379] sm:$0xff]
    %v1381 = vld [vmem:[%s1379 + $0x8] sm:$0xff]
    %v1382 = vld [vmem:[%s1379 + $0x10] sm:$0xff]
    %v1383 = vld [vmem:[%s1379 + $0x18] sm:$0xff]
    %1384 = vmatprep.subr.mxu0 %v105
    %1385 = vmatpush1.msra.mxu0 %v104
    %1386 = vmatprep.subr.mxu0 %v109
    %1387 = vmatpush1.msra.mxu0 %v108
    %1388 = vmatprep.subr.mxu0 %v113
    %1389 = vmatpush1.msra.mxu0 %v112
    %1390 = vmatprep.subr.mxu0 %v117
    %1391 = vmatpush1.msra.mxu0 %v116
    %1392 = vmatprep.subr.mxu0 %v121
    %1393 = vmatpush1.msra.mxu0 %v120
    %1394 = vmatprep.subr.mxu0 %v125
    %1395 = vmatpush1.msra.mxu0 %v124
    %1396 = vmatprep.subr.mxu0 %v129
    %1397 = vmatpush1.msra.mxu0 %v128
    %1398 = vmatprep.subr.mxu0 %v133
    %1399 = vmatpush1.msra.mxu0 %v132
    %1400 = vmatprep.subr.mxu0 %v137
    %1401 = vmatpush1.msra.mxu0 %v136
    %1402 = vmatprep.subr.mxu0 %v141
    %1403 = vmatpush1.msra.mxu0 %v140
    %1404 = vmatprep.subr.mxu0 %v145
    %1405 = vmatpush1.msra.mxu0 %v144
    %1406 = vmatprep.subr.mxu0 %v149
    %1407 = vmatpush1.msra.mxu0 %v148
    %1408 = vmatprep.subr.mxu0 %v153
    %1409 = vmatpush1.msra.mxu0 %v152
    %1410 = vmatprep.subr.mxu0 %v157
    %1411 = vmatpush1.msra.mxu0 %v156
    %1412 = vmatprep.subr.mxu0 %v161
    %1413 = vmatpush1.msra.mxu0 %v160
    %1414 = vmatprep.subr.mxu0 %v165
    %1415 = vmatpush1.msra.mxu0 %v164
    %1416 = vmatprep.subr.mxu0 0.0
    %1417 = vmatpush1.msra.mxu0 0.0
    %1418 = vmatprep.subr.mxu0 0.0
    %1419 = vmatpush1.msra.mxu0 0.0
    %1420 = vmatprep.subr.mxu0 0.0
    %1421 = vmatpush1.msra.mxu0 0.0
    %1422 = vmatprep.subr.mxu0 0.0
    %1423 = vmatpush1.msra.mxu0 0.0
    %1424 = vmatprep.subr.mxu0 0.0
    %1425 = vmatpush1.msra.mxu0 0.0
    %1426 = vmatprep.subr.mxu0 0.0
    %1427 = vmatpush1.msra.mxu0 0.0
    %1428 = vmatprep.subr.mxu0 0.0
    %1429 = vmatpush1.msra.mxu0 0.0
    %1430 = vmatprep.subr.mxu0 0.0
    %1431 = vmatpush1.msra.mxu0 0.0
    %1432 = vmatprep.subr.mxu0 0.0
    %1433 = vmatpush1.msra.mxu0 0.0
    %1434 = vmatprep.subr.mxu0 0.0
    %1435 = vmatpush1.msra.mxu0 0.0
    %1436 = vmatprep.subr.mxu0 0.0
    %1437 = vmatpush1.msra.mxu0 0.0
    %1438 = vmatprep.subr.mxu0 0.0
    %1439 = vmatpush1.msra.mxu0 0.0
    %1440 = vmatprep.subr.mxu0 0.0
    %1441 = vmatpush1.msra.mxu0 0.0
    %1442 = vmatprep.subr.mxu0 0.0
    %1443 = vmatpush1.msra.mxu0 0.0
    %1444 = vmatprep.subr.mxu0 0.0
    %1445 = vmatpush1.msra.mxu0 0.0
    %1446 = vmatprep.subr.mxu0 0.0
    %1447 = vmatpush1.msra.mxu0 0.0
    %1448 = vmatprep.mubr.f32.mxu0 0.0
    %1449 = vmatmul.mubr.f32.gmra.mrb[0].mxu0 %v1374
    %v1450 = vpop.f32.mrb[0].mxu0
    %v1451 = vadd.f32 0.0, %v1450
    %v1452 = vpop.f32.mrb[0].mxu0
    %v1453 = vadd.f32 0.0, %v1452
    %1454 = vdwg.mxu0
    %1455 = vmatprep.subr.mxu0 %v107
    %1456 = vmatpush1.msra.mxu0 %v106
    %1457 = vmatprep.subr.mxu0 %v111
    %1458 = vmatpush1.msra.mxu0 %v110
    %1459 = vmatprep.subr.mxu0 %v115
    %1460 = vmatpush1.msra.mxu0 %v114
    %1461 = vmatprep.subr.mxu0 %v119
    %1462 = vmatpush1.msra.mxu0 %v118
    %1463 = vmatprep.subr.mxu0 %v123
    %1464 = vmatpush1.msra.mxu0 %v122
    %1465 = vmatprep.subr.mxu0 %v127
    %1466 = vmatpush1.msra.mxu0 %v126
    %1467 = vmatprep.subr.mxu0 %v131
    %1468 = vmatpush1.msra.mxu0 %v130
    %1469 = vmatprep.subr.mxu0 %v135
    %1470 = vmatpush1.msra.mxu0 %v134
    %1471 = vmatprep.subr.mxu0 %v139
    %1472 = vmatpush1.msra.mxu0 %v138
    %1473 = vmatprep.subr.mxu0 %v143
    %1474 = vmatpush1.msra.mxu0 %v142
    %1475 = vmatprep.subr.mxu0 %v147
    %1476 = vmatpush1.msra.mxu0 %v146
    %1477 = vmatprep.subr.mxu0 %v151
    %1478 = vmatpush1.msra.mxu0 %v150
    %1479 = vmatprep.subr.mxu0 %v155
    %1480 = vmatpush1.msra.mxu0 %v154
    %1481 = vmatprep.subr.mxu0 %v159
    %1482 = vmatpush1.msra.mxu0 %v158
    %1483 = vmatprep.subr.mxu0 %v163
    %1484 = vmatpush1.msra.mxu0 %v162
    %1485 = vmatprep.subr.mxu0 %v167
    %1486 = vmatpush1.msra.mxu0 %v166
    %1487 = vmatprep.subr.mxu0 0.0
    %1488 = vmatpush1.msra.mxu0 0.0
    %1489 = vmatprep.subr.mxu0 0.0
    %1490 = vmatpush1.msra.mxu0 0.0
    %1491 = vmatprep.subr.mxu0 0.0
    %1492 = vmatpush1.msra.mxu0 0.0
    %1493 = vmatprep.subr.mxu0 0.0
    %1494 = vmatpush1.msra.mxu0 0.0
    %1495 = vmatprep.subr.mxu0 0.0
    %1496 = vmatpush1.msra.mxu0 0.0
    %1497 = vmatprep.subr.mxu0 0.0
    %1498 = vmatpush1.msra.mxu0 0.0
    %1499 = vmatprep.subr.mxu0 0.0
    %1500 = vmatpush1.msra.mxu0 0.0
    %1501 = vmatprep.subr.mxu0 0.0
    %1502 = vmatpush1.msra.mxu0 0.0
    %1503 = vmatprep.subr.mxu0 0.0
    %1504 = vmatpush1.msra.mxu0 0.0
    %1505 = vmatprep.subr.mxu0 0.0
    %1506 = vmatpush1.msra.mxu0 0.0
    %1507 = vmatprep.subr.mxu0 0.0
    %1508 = vmatpush1.msra.mxu0 0.0
    %1509 = vmatprep.subr.mxu0 0.0
    %1510 = vmatpush1.msra.mxu0 0.0
    %1511 = vmatprep.subr.mxu0 0.0
    %1512 = vmatpush1.msra.mxu0 0.0
    %1513 = vmatprep.subr.mxu0 0.0
    %1514 = vmatpush1.msra.mxu0 0.0
    %1515 = vmatprep.subr.mxu0 0.0
    %1516 = vmatpush1.msra.mxu0 0.0
    %1517 = vmatprep.subr.mxu0 0.0
    %1518 = vmatpush1.msra.mxu0 0.0
    %1519 = vmatprep.mubr.f32.mxu0 0.0
    %1520 = vmatmul.mubr.f32.gmra.mrb[0].mxu0 %v1374
    %v1521 = vpop.f32.mrb[0].mxu0
    %v1522 = vadd.f32 0.0, %v1521
    %v1523 = vpop.f32.mrb[0].mxu0
    %v1524 = vadd.f32 0.0, %v1523
    %1525 = vdwg.mxu0
    %v1526 = vadd.f32 %v1380, %v1451
    %v1527 = vadd.f32 %v1381, %v1453
    %v1528 = vadd.f32 %v1382, %v1522
    %v1529 = vadd.f32 %v1383, %v1524
    %v1530 = vxor.u32 %v1526, 2147483648
    %v1531 = vmul.f32 %v1530, 1.442695
    %v1532 = vpow.pop %v1531
    %v1533 = vadd.f32 %v1532, 1.0
    %v1534 = vrcp.pop %v1533
    %v1535 = vmul.f32 1.0, %v1534
    %v1536 = vxor.u32 %v1527, 2147483648
    %v1537 = vmul.f32 %v1536, 1.442695
    %v1538 = vpow.pop %v1537
    %v1539 = vadd.f32 %v1538, 1.0
    %v1540 = vrcp.pop %v1539
    %v1541 = vmul.f32 1.0, %v1540
    %v1542 = vtanh.pop %v1528
    %v1543 = vxor.u32 %v1529, 2147483648
    %v1544 = vmul.f32 %v1543, 1.442695
    %v1545 = vpow.pop %v1544
    %v1546 = vadd.f32 %v1545, 1.0
    %v1547 = vrcp.pop %v1546
    %v1548 = vmul.f32 1.0, %v1547
    %v1549 = vmul.f32 %v1541, %v1372
    %v1550 = vmul.f32 %v1535, %v1542
    %v1551 = vadd.f32 %v1549, %v1550
    %v1552 = vtanh.pop %v1551
    %v1553 = vmul.f32 %v1548, %v1552
    %s1554 = scalar_lea.vmem [#allocation4], 40
    %1555 = vst [vmem:[%s1554] sm:$0xff] %v1553
    %s1556 = smul.u32 6, 4
    %s1557 = smul.addr %s1556, 8
    %s1558 = scalar_lea.vmem [#allocation5], %s1557
    %v1559 = vld [vmem:[%s1558] sm:$0xff]
    %v1560 = vld [vmem:[%s1558 + $0x8] sm:$0xff]
    %v1561 = vld [vmem:[%s1558 + $0x10] sm:$0xff]
    %v1562 = vld [vmem:[%s1558 + $0x18] sm:$0xff]
    %1563 = vmatprep.subr.mxu0 %v105
    %1564 = vmatpush1.msra.mxu0 %v104
    %1565 = vmatprep.subr.mxu0 %v109
    %1566 = vmatpush1.msra.mxu0 %v108
    %1567 = vmatprep.subr.mxu0 %v113
    %1568 = vmatpush1.msra.mxu0 %v112
    %1569 = vmatprep.subr.mxu0 %v117
    %1570 = vmatpush1.msra.mxu0 %v116
    %1571 = vmatprep.subr.mxu0 %v121
    %1572 = vmatpush1.msra.mxu0 %v120
    %1573 = vmatprep.subr.mxu0 %v125
    %1574 = vmatpush1.msra.mxu0 %v124
    %1575 = vmatprep.subr.mxu0 %v129
    %1576 = vmatpush1.msra.mxu0 %v128
    %1577 = vmatprep.subr.mxu0 %v133
    %1578 = vmatpush1.msra.mxu0 %v132
    %1579 = vmatprep.subr.mxu0 %v137
    %1580 = vmatpush1.msra.mxu0 %v136
    %1581 = vmatprep.subr.mxu0 %v141
    %1582 = vmatpush1.msra.mxu0 %v140
    %1583 = vmatprep.subr.mxu0 %v145
    %1584 = vmatpush1.msra.mxu0 %v144
    %1585 = vmatprep.subr.mxu0 %v149
    %1586 = vmatpush1.msra.mxu0 %v148
    %1587 = vmatprep.subr.mxu0 %v153
    %1588 = vmatpush1.msra.mxu0 %v152
    %1589 = vmatprep.subr.mxu0 %v157
    %1590 = vmatpush1.msra.mxu0 %v156
    %1591 = vmatprep.subr.mxu0 %v161
    %1592 = vmatpush1.msra.mxu0 %v160
    %1593 = vmatprep.subr.mxu0 %v165
    %1594 = vmatpush1.msra.mxu0 %v164
    %1595 = vmatprep.subr.mxu0 0.0
    %1596 = vmatpush1.msra.mxu0 0.0
    %1597 = vmatprep.subr.mxu0 0.0
    %1598 = vmatpush1.msra.mxu0 0.0
    %1599 = vmatprep.subr.mxu0 0.0
    %1600 = vmatpush1.msra.mxu0 0.0
    %1601 = vmatprep.subr.mxu0 0.0
    %1602 = vmatpush1.msra.mxu0 0.0
    %1603 = vmatprep.subr.mxu0 0.0
    %1604 = vmatpush1.msra.mxu0 0.0
    %1605 = vmatprep.subr.mxu0 0.0
    %1606 = vmatpush1.msra.mxu0 0.0
    %1607 = vmatprep.subr.mxu0 0.0
    %1608 = vmatpush1.msra.mxu0 0.0
    %1609 = vmatprep.subr.mxu0 0.0
    %1610 = vmatpush1.msra.mxu0 0.0
    %1611 = vmatprep.subr.mxu0 0.0
    %1612 = vmatpush1.msra.mxu0 0.0
    %1613 = vmatprep.subr.mxu0 0.0
    %1614 = vmatpush1.msra.mxu0 0.0
    %1615 = vmatprep.subr.mxu0 0.0
    %1616 = vmatpush1.msra.mxu0 0.0
    %1617 = vmatprep.subr.mxu0 0.0
    %1618 = vmatpush1.msra.mxu0 0.0
    %1619 = vmatprep.subr.mxu0 0.0
    %1620 = vmatpush1.msra.mxu0 0.0
    %1621 = vmatprep.subr.mxu0 0.0
    %1622 = vmatpush1.msra.mxu0 0.0
    %1623 = vmatprep.subr.mxu0 0.0
    %1624 = vmatpush1.msra.mxu0 0.0
    %1625 = vmatprep.subr.mxu0 0.0
    %1626 = vmatpush1.msra.mxu0 0.0
    %1627 = vmatprep.mubr.f32.mxu0 0.0
    %1628 = vmatmul.mubr.f32.gmra.mrb[0].mxu0 %v1553
    %v1629 = vpop.f32.mrb[0].mxu0
    %v1630 = vadd.f32 0.0, %v1629
    %v1631 = vpop.f32.mrb[0].mxu0
    %v1632 = vadd.f32 0.0, %v1631
    %1633 = vdwg.mxu0
    %1634 = vmatprep.subr.mxu0 %v107
    %1635 = vmatpush1.msra.mxu0 %v106
    %1636 = vmatprep.subr.mxu0 %v111
    %1637 = vmatpush1.msra.mxu0 %v110
    %1638 = vmatprep.subr.mxu0 %v115
    %1639 = vmatpush1.msra.mxu0 %v114
    %1640 = vmatprep.subr.mxu0 %v119
    %1641 = vmatpush1.msra.mxu0 %v118
    %1642 = vmatprep.subr.mxu0 %v123
    %1643 = vmatpush1.msra.mxu0 %v122
    %1644 = vmatprep.subr.mxu0 %v127
    %1645 = vmatpush1.msra.mxu0 %v126
    %1646 = vmatprep.subr.mxu0 %v131
    %1647 = vmatpush1.msra.mxu0 %v130
    %1648 = vmatprep.subr.mxu0 %v135
    %1649 = vmatpush1.msra.mxu0 %v134
    %1650 = vmatprep.subr.mxu0 %v139
    %1651 = vmatpush1.msra.mxu0 %v138
    %1652 = vmatprep.subr.mxu0 %v143
    %1653 = vmatpush1.msra.mxu0 %v142
    %1654 = vmatprep.subr.mxu0 %v147
    %1655 = vmatpush1.msra.mxu0 %v146
    %1656 = vmatprep.subr.mxu0 %v151
    %1657 = vmatpush1.msra.mxu0 %v150
    %1658 = vmatprep.subr.mxu0 %v155
    %1659 = vmatpush1.msra.mxu0 %v154
    %1660 = vmatprep.subr.mxu0 %v159
    %1661 = vmatpush1.msra.mxu0 %v158
    %1662 = vmatprep.subr.mxu0 %v163
    %1663 = vmatpush1.msra.mxu0 %v162
    %1664 = vmatprep.subr.mxu0 %v167
    %1665 = vmatpush1.msra.mxu0 %v166
    %1666 = vmatprep.subr.mxu0 0.0
    %1667 = vmatpush1.msra.mxu0 0.0
    %1668 = vmatprep.subr.mxu0 0.0
    %1669 = vmatpush1.msra.mxu0 0.0
    %1670 = vmatprep.subr.mxu0 0.0
    %1671 = vmatpush1.msra.mxu0 0.0
    %1672 = vmatprep.subr.mxu0 0.0
    %1673 = vmatpush1.msra.mxu0 0.0
    %1674 = vmatprep.subr.mxu0 0.0
    %1675 = vmatpush1.msra.mxu0 0.0
    %1676 = vmatprep.subr.mxu0 0.0
    %1677 = vmatpush1.msra.mxu0 0.0
    %1678 = vmatprep.subr.mxu0 0.0
    %1679 = vmatpush1.msra.mxu0 0.0
    %1680 = vmatprep.subr.mxu0 0.0
    %1681 = vmatpush1.msra.mxu0 0.0
    %1682 = vmatprep.subr.mxu0 0.0
    %1683 = vmatpush1.msra.mxu0 0.0
    %1684 = vmatprep.subr.mxu0 0.0
    %1685 = vmatpush1.msra.mxu0 0.0
    %1686 = vmatprep.subr.mxu0 0.0
    %1687 = vmatpush1.msra.mxu0 0.0
    %1688 = vmatprep.subr.mxu0 0.0
    %1689 = vmatpush1.msra.mxu0 0.0
    %1690 = vmatprep.subr.mxu0 0.0
    %1691 = vmatpush1.msra.mxu0 0.0
    %1692 = vmatprep.subr.mxu0 0.0
    %1693 = vmatpush1.msra.mxu0 0.0
    %1694 = vmatprep.subr.mxu0 0.0
    %1695 = vmatpush1.msra.mxu0 0.0
    %1696 = vmatprep.subr.mxu0 0.0
    %1697 = vmatpush1.msra.mxu0 0.0
    %1698 = vmatprep.mubr.f32.mxu0 0.0
    %1699 = vmatmul.mubr.f32.gmra.mrb[0].mxu0 %v1553
    %v1700 = vpop.f32.mrb[0].mxu0
    %v1701 = vadd.f32 0.0, %v1700
    %v1702 = vpop.f32.mrb[0].mxu0
    %v1703 = vadd.f32 0.0, %v1702
    %1704 = vdwg.mxu0
    %v1705 = vadd.f32 %v1559, %v1630
    %v1706 = vadd.f32 %v1560, %v1632
    %v1707 = vadd.f32 %v1561, %v1701
    %v1708 = vadd.f32 %v1562, %v1703
    %v1709 = vxor.u32 %v1705, 2147483648
    %v1710 = vmul.f32 %v1709, 1.442695
    %v1711 = vpow.pop %v1710
    %v1712 = vadd.f32 %v1711, 1.0
    %v1713 = vrcp.pop %v1712
    %v1714 = vmul.f32 1.0, %v1713
    %v1715 = vxor.u32 %v1706, 2147483648
    %v1716 = vmul.f32 %v1715, 1.442695
    %v1717 = vpow.pop %v1716
    %v1718 = vadd.f32 %v1717, 1.0
    %v1719 = vrcp.pop %v1718
    %v1720 = vmul.f32 1.0, %v1719
    %v1721 = vtanh.pop %v1707
    %v1722 = vxor.u32 %v1708, 2147483648
    %v1723 = vmul.f32 %v1722, 1.442695
    %v1724 = vpow.pop %v1723
    %v1725 = vadd.f32 %v1724, 1.0
    %v1726 = vrcp.pop %v1725
    %v1727 = vmul.f32 1.0, %v1726
    %v1728 = vmul.f32 %v1720, %v1551
    %v1729 = vmul.f32 %v1714, %v1721
    %v1730 = vadd.f32 %v1728, %v1729
    %v1731 = vtanh.pop %v1730
    %v1732 = vmul.f32 %v1727, %v1731
    %s1733 = scalar_lea.vmem [#allocation4], 48
    %1734 = vst [vmem:[%s1733] sm:$0xff] %v1732
    %s1735 = smul.u32 7, 4
    %s1736 = smul.addr %s1735, 8
    %s1737 = scalar_lea.vmem [#allocation5], %s1736
    %v1738 = vld [vmem:[%s1737] sm:$0xff]
    %v1739 = vld [vmem:[%s1737 + $0x8] sm:$0xff]
    %v1740 = vld [vmem:[%s1737 + $0x10] sm:$0xff]
    %v1741 = vld [vmem:[%s1737 + $0x18] sm:$0xff]
    %1742 = vmatprep.subr.mxu0 %v105
    %1743 = vmatpush1.msra.mxu0 %v104
    %1744 = vmatprep.subr.mxu0 %v109
    %1745 = vmatpush1.msra.mxu0 %v108
    %1746 = vmatprep.subr.mxu0 %v113
    %1747 = vmatpush1.msra.mxu0 %v112
    %1748 = vmatprep.subr.mxu0 %v117
    %1749 = vmatpush1.msra.mxu0 %v116
    %1750 = vmatprep.subr.mxu0 %v121
    %1751 = vmatpush1.msra.mxu0 %v120
    %1752 = vmatprep.subr.mxu0 %v125
    %1753 = vmatpush1.msra.mxu0 %v124
    %1754 = vmatprep.subr.mxu0 %v129
    %1755 = vmatpush1.msra.mxu0 %v128
    %1756 = vmatprep.subr.mxu0 %v133
    %1757 = vmatpush1.msra.mxu0 %v132
    %1758 = vmatprep.subr.mxu0 %v137
    %1759 = vmatpush1.msra.mxu0 %v136
    %1760 = vmatprep.subr.mxu0 %v141
    %1761 = vmatpush1.msra.mxu0 %v140
    %1762 = vmatprep.subr.mxu0 %v145
    %1763 = vmatpush1.msra.mxu0 %v144
    %1764 = vmatprep.subr.mxu0 %v149
    %1765 = vmatpush1.msra.mxu0 %v148
    %1766 = vmatprep.subr.mxu0 %v153
    %1767 = vmatpush1.msra.mxu0 %v152
    %1768 = vmatprep.subr.mxu0 %v157
    %1769 = vmatpush1.msra.mxu0 %v156
    %1770 = vmatprep.subr.mxu0 %v161
    %1771 = vmatpush1.msra.mxu0 %v160
    %1772 = vmatprep.subr.mxu0 %v165
    %1773 = vmatpush1.msra.mxu0 %v164
    %1774 = vmatprep.subr.mxu0 0.0
    %1775 = vmatpush1.msra.mxu0 0.0
    %1776 = vmatprep.subr.mxu0 0.0
    %1777 = vmatpush1.msra.mxu0 0.0
    %1778 = vmatprep.subr.mxu0 0.0
    %1779 = vmatpush1.msra.mxu0 0.0
    %1780 = vmatprep.subr.mxu0 0.0
    %1781 = vmatpush1.msra.mxu0 0.0
    %1782 = vmatprep.subr.mxu0 0.0
    %1783 = vmatpush1.msra.mxu0 0.0
    %1784 = vmatprep.subr.mxu0 0.0
    %1785 = vmatpush1.msra.mxu0 0.0
    %1786 = vmatprep.subr.mxu0 0.0
    %1787 = vmatpush1.msra.mxu0 0.0
    %1788 = vmatprep.subr.mxu0 0.0
    %1789 = vmatpush1.msra.mxu0 0.0
    %1790 = vmatprep.subr.mxu0 0.0
    %1791 = vmatpush1.msra.mxu0 0.0
    %1792 = vmatprep.subr.mxu0 0.0
    %1793 = vmatpush1.msra.mxu0 0.0
    %1794 = vmatprep.subr.mxu0 0.0
    %1795 = vmatpush1.msra.mxu0 0.0
    %1796 = vmatprep.subr.mxu0 0.0
    %1797 = vmatpush1.msra.mxu0 0.0
    %1798 = vmatprep.subr.mxu0 0.0
    %1799 = vmatpush1.msra.mxu0 0.0
    %1800 = vmatprep.subr.mxu0 0.0
    %1801 = vmatpush1.msra.mxu0 0.0
    %1802 = vmatprep.subr.mxu0 0.0
    %1803 = vmatpush1.msra.mxu0 0.0
    %1804 = vmatprep.subr.mxu0 0.0
    %1805 = vmatpush1.msra.mxu0 0.0
    %1806 = vmatprep.mubr.f32.mxu0 0.0
    %1807 = vmatmul.mubr.f32.gmra.mrb[0].mxu0 %v1732
    %v1808 = vpop.f32.mrb[0].mxu0
    %v1809 = vadd.f32 0.0, %v1808
    %v1810 = vpop.f32.mrb[0].mxu0
    %v1811 = vadd.f32 0.0, %v1810
    %1812 = vdwg.mxu0
    %1813 = vmatprep.subr.mxu0 %v107
    %1814 = vmatpush1.msra.mxu0 %v106
    %1815 = vmatprep.subr.mxu0 %v111
    %1816 = vmatpush1.msra.mxu0 %v110
    %1817 = vmatprep.subr.mxu0 %v115
    %1818 = vmatpush1.msra.mxu0 %v114
    %1819 = vmatprep.subr.mxu0 %v119
    %1820 = vmatpush1.msra.mxu0 %v118
    %1821 = vmatprep.subr.mxu0 %v123
    %1822 = vmatpush1.msra.mxu0 %v122
    %1823 = vmatprep.subr.mxu0 %v127
    %1824 = vmatpush1.msra.mxu0 %v126
    %1825 = vmatprep.subr.mxu0 %v131
    %1826 = vmatpush1.msra.mxu0 %v130
    %1827 = vmatprep.subr.mxu0 %v135
    %1828 = vmatpush1.msra.mxu0 %v134
    %1829 = vmatprep.subr.mxu0 %v139
    %1830 = vmatpush1.msra.mxu0 %v138
    %1831 = vmatprep.subr.mxu0 %v143
    %1832 = vmatpush1.msra.mxu0 %v142
    %1833 = vmatprep.subr.mxu0 %v147
    %1834 = vmatpush1.msra.mxu0 %v146
    %1835 = vmatprep.subr.mxu0 %v151
    %1836 = vmatpush1.msra.mxu0 %v150
    %1837 = vmatprep.subr.mxu0 %v155
    %1838 = vmatpush1.msra.mxu0 %v154
    %1839 = vmatprep.subr.mxu0 %v159
    %1840 = vmatpush1.msra.mxu0 %v158
    %1841 = vmatprep.subr.mxu0 %v163
    %1842 = vmatpush1.msra.mxu0 %v162
    %1843 = vmatprep.subr.mxu0 %v167
    %1844 = vmatpush1.msra.mxu0 %v166
    %1845 = vmatprep.subr.mxu0 0.0
    %1846 = vmatpush1.msra.mxu0 0.0
    %1847 = vmatprep.subr.mxu0 0.0
    %1848 = vmatpush1.msra.mxu0 0.0
    %1849 = vmatprep.subr.mxu0 0.0
    %1850 = vmatpush1.msra.mxu0 0.0
    %1851 = vmatprep.subr.mxu0 0.0
    %1852 = vmatpush1.msra.mxu0 0.0
    %1853 = vmatprep.subr.mxu0 0.0
    %1854 = vmatpush1.msra.mxu0 0.0
    %1855 = vmatprep.subr.mxu0 0.0
    %1856 = vmatpush1.msra.mxu0 0.0
    %1857 = vmatprep.subr.mxu0 0.0
    %1858 = vmatpush1.msra.mxu0 0.0
    %1859 = vmatprep.subr.mxu0 0.0
    %1860 = vmatpush1.msra.mxu0 0.0
    %1861 = vmatprep.subr.mxu0 0.0
    %1862 = vmatpush1.msra.mxu0 0.0
    %1863 = vmatprep.subr.mxu0 0.0
    %1864 = vmatpush1.msra.mxu0 0.0
    %1865 = vmatprep.subr.mxu0 0.0
    %1866 = vmatpush1.msra.mxu0 0.0
    %1867 = vmatprep.subr.mxu0 0.0
    %1868 = vmatpush1.msra.mxu0 0.0
    %1869 = vmatprep.subr.mxu0 0.0
    %1870 = vmatpush1.msra.mxu0 0.0
    %1871 = vmatprep.subr.mxu0 0.0
    %1872 = vmatpush1.msra.mxu0 0.0
    %1873 = vmatprep.subr.mxu0 0.0
    %1874 = vmatpush1.msra.mxu0 0.0
    %1875 = vmatprep.subr.mxu0 0.0
    %1876 = vmatpush1.msra.mxu0 0.0
    %1877 = vmatprep.mubr.f32.mxu0 0.0
    %1878 = vmatmul.mubr.f32.gmra.mrb[0].mxu0 %v1732
    %v1879 = vpop.f32.mrb[0].mxu0
    %v1880 = vadd.f32 0.0, %v1879
    %v1881 = vpop.f32.mrb[0].mxu0
    %v1882 = vadd.f32 0.0, %v1881
    %1883 = vdwg.mxu0
    %v1884 = vadd.f32 %v1738, %v1809
    %v1885 = vadd.f32 %v1739, %v1811
    %v1886 = vadd.f32 %v1740, %v1880
    %v1887 = vadd.f32 %v1741, %v1882
    %v1888 = vxor.u32 %v1884, 2147483648
    %v1889 = vmul.f32 %v1888, 1.442695
    %v1890 = vpow.pop %v1889
    %v1891 = vadd.f32 %v1890, 1.0
    %v1892 = vrcp.pop %v1891
    %v1893 = vmul.f32 1.0, %v1892
    %v1894 = vxor.u32 %v1885, 2147483648
    %v1895 = vmul.f32 %v1894, 1.442695
    %v1896 = vpow.pop %v1895
    %v1897 = vadd.f32 %v1896, 1.0
    %v1898 = vrcp.pop %v1897
    %v1899 = vmul.f32 1.0, %v1898
    %v1900 = vtanh.pop %v1886
    %v1901 = vxor.u32 %v1887, 2147483648
    %v1902 = vmul.f32 %v1901, 1.442695
    %v1903 = vpow.pop %v1902
    %v1904 = vadd.f32 %v1903, 1.0
    %v1905 = vrcp.pop %v1904
    %v1906 = vmul.f32 1.0, %v1905
    %v1907 = vmul.f32 %v1899, %v1730
    %v1908 = vmul.f32 %v1893, %v1900
    %v1909 = vadd.f32 %v1907, %v1908
    %v1910 = vtanh.pop %v1909
    %v1911 = vmul.f32 %v1906, %v1910
    %s1912 = scalar_lea.vmem [#allocation4], 56
    %1913 = vst [vmem:[%s1912] sm:$0xff] %v1911
    %1914 = vst [vmem:[#allocation2] sm:$0xff] %v1911
    %1915 = vst [vmem:[#allocation3] sm:$0xff] %v1909
    %v1916 = vld [vmem:[#allocation9] sm:$0xff]
    %v1917 = vld [vmem:[#allocation9 + $0x8] sm:$0xff]
    %v1918 = vld [vmem:[#allocation9 + $0x10] sm:$0xff]
    %v1919 = vld [vmem:[#allocation9 + $0x18] sm:$0xff]
    %v1920 = vld [vmem:[#allocation9 + $0x20] sm:$0xff]
    %v1921 = vld [vmem:[#allocation9 + $0x28] sm:$0xff]
    %v1922 = vld [vmem:[#allocation9 + $0x30] sm:$0xff]
    %v1923 = vld [vmem:[#allocation9 + $0x38] sm:$0xff]
    %v1924 = vld [vmem:[#allocation9 + $0x40] sm:$0xff]
    %v1925 = vld [vmem:[#allocation9 + $0x48] sm:$0xff]
    %v1926 = vld [vmem:[#allocation9 + $0x50] sm:$0xff]
    %v1927 = vld [vmem:[#allocation9 + $0x58] sm:$0xff]
    %v1928 = vld [vmem:[#allocation9 + $0x60] sm:$0xff]
    %v1929 = vld [vmem:[#allocation9 + $0x68] sm:$0xff]
    %v1930 = vld [vmem:[#allocation9 + $0x70] sm:$0xff]
    %v1931 = vld [vmem:[#allocation9 + $0x78] sm:$0xff]
    %v1932 = vld [vmem:[#allocation9 + $0x80] sm:$0xff]
    %v1933 = vld [vmem:[#allocation9 + $0x88] sm:$0xff]
    %v1934 = vld [vmem:[#allocation9 + $0x90] sm:$0xff]
    %v1935 = vld [vmem:[#allocation9 + $0x98] sm:$0xff]
    %v1936 = vld [vmem:[#allocation9 + $0xa0] sm:$0xff]
    %v1937 = vld [vmem:[#allocation9 + $0xa8] sm:$0xff]
    %v1938 = vld [vmem:[#allocation9 + $0xb0] sm:$0xff]
    %v1939 = vld [vmem:[#allocation9 + $0xb8] sm:$0xff]
    %v1940 = vld [vmem:[#allocation9 + $0xc0] sm:$0xff]
    %v1941 = vld [vmem:[#allocation9 + $0xc8] sm:$0xff]
    %v1942 = vld [vmem:[#allocation9 + $0xd0] sm:$0xff]
    %v1943 = vld [vmem:[#allocation9 + $0xd8] sm:$0xff]
    %v1944 = vld [vmem:[#allocation9 + $0xe0] sm:$0xff]
    %v1945 = vld [vmem:[#allocation9 + $0xe8] sm:$0xff]
    %v1946 = vld [vmem:[#allocation9 + $0xf0] sm:$0xff]
    %v1947 = vld [vmem:[#allocation9 + $0xf8] sm:$0xff]
    %v1948 = vld [vmem:[#allocation9 + $0x100] sm:$0xff]
    %v1949 = vld [vmem:[#allocation9 + $0x108] sm:$0xff]
    %v1950 = vld [vmem:[#allocation9 + $0x110] sm:$0xff]
    %v1951 = vld [vmem:[#allocation9 + $0x118] sm:$0xff]
    %v1952 = vld [vmem:[#allocation9 + $0x120] sm:$0xff]
    %v1953 = vld [vmem:[#allocation9 + $0x128] sm:$0xff]
    %v1954 = vld [vmem:[#allocation9 + $0x130] sm:$0xff]
    %v1955 = vld [vmem:[#allocation9 + $0x138] sm:$0xff]
    %v1956 = vld [vmem:[#allocation9 + $0x140] sm:$0xff]
    %v1957 = vld [vmem:[#allocation9 + $0x148] sm:$0xff]
    %v1958 = vld [vmem:[#allocation9 + $0x150] sm:$0xff]
    %v1959 = vld [vmem:[#allocation9 + $0x158] sm:$0xff]
    %v1960 = vld [vmem:[#allocation9 + $0x160] sm:$0xff]
    %v1961 = vld [vmem:[#allocation9 + $0x168] sm:$0xff]
    %v1962 = vld [vmem:[#allocation9 + $0x170] sm:$0xff]
    %v1963 = vld [vmem:[#allocation9 + $0x178] sm:$0xff]
    %v1964 = vld [vmem:[#allocation9 + $0x180] sm:$0xff]
    %v1965 = vld [vmem:[#allocation9 + $0x188] sm:$0xff]
    %v1966 = vld [vmem:[#allocation9 + $0x190] sm:$0xff]
    %v1967 = vld [vmem:[#allocation9 + $0x198] sm:$0xff]
    %v1968 = vld [vmem:[#allocation9 + $0x1a0] sm:$0xff]
    %v1969 = vld [vmem:[#allocation9 + $0x1a8] sm:$0xff]
    %v1970 = vld [vmem:[#allocation9 + $0x1b0] sm:$0xff]
    %v1971 = vld [vmem:[#allocation9 + $0x1b8] sm:$0xff]
    %v1972 = vld [vmem:[#allocation9 + $0x1c0] sm:$0xff]
    %v1973 = vld [vmem:[#allocation9 + $0x1c8] sm:$0xff]
    %v1974 = vld [vmem:[#allocation9 + $0x1d0] sm:$0xff]
    %v1975 = vld [vmem:[#allocation9 + $0x1d8] sm:$0xff]
    %v1976 = vld [vmem:[#allocation9 + $0x1e0] sm:$0xff]
    %v1977 = vld [vmem:[#allocation9 + $0x1e8] sm:$0xff]
    %v1978 = vld [vmem:[#allocation9 + $0x1f0] sm:$0xff]
    %v1979 = vld [vmem:[#allocation9 + $0x1f8] sm:$0xff]
    %v1980 = vld [vmem:[#allocation11] sm:$0xff]
    %v1981 = vld [vmem:[#allocation11 + $0x8] sm:$0xff]
    %v1982 = vld [vmem:[#allocation11 + $0x10] sm:$0xff]
    %v1983 = vld [vmem:[#allocation11 + $0x18] sm:$0xff]
    %v1984 = vld [vmem:[#allocation11 + $0x20] sm:$0xff]
    %v1985 = vld [vmem:[#allocation11 + $0x28] sm:$0xff]
    %v1986 = vld [vmem:[#allocation11 + $0x30] sm:$0xff]
    %v1987 = vld [vmem:[#allocation11 + $0x38] sm:$0xff]
    %v1988 = vld [vmem:[#allocation11 + $0x40] sm:$0xff]
    %v1989 = vld [vmem:[#allocation11 + $0x48] sm:$0xff]
    %v1990 = vld [vmem:[#allocation11 + $0x50] sm:$0xff]
    %v1991 = vld [vmem:[#allocation11 + $0x58] sm:$0xff]
    %v1992 = vld [vmem:[#allocation11 + $0x60] sm:$0xff]
    %v1993 = vld [vmem:[#allocation11 + $0x68] sm:$0xff]
    %v1994 = vld [vmem:[#allocation11 + $0x70] sm:$0xff]
    %v1995 = vld [vmem:[#allocation11 + $0x78] sm:$0xff]
    %v1996 = vld [vmem:[#allocation11 + $0x80] sm:$0xff]
    %v1997 = vld [vmem:[#allocation11 + $0x88] sm:$0xff]
    %v1998 = vld [vmem:[#allocation11 + $0x90] sm:$0xff]
    %v1999 = vld [vmem:[#allocation11 + $0x98] sm:$0xff]
    %v2000 = vld [vmem:[#allocation11 + $0xa0] sm:$0xff]
    %v2001 = vld [vmem:[#allocation11 + $0xa8] sm:$0xff]
    %v2002 = vld [vmem:[#allocation11 + $0xb0] sm:$0xff]
    %v2003 = vld [vmem:[#allocation11 + $0xb8] sm:$0xff]
    %v2004 = vld [vmem:[#allocation11 + $0xc0] sm:$0xff]
    %v2005 = vld [vmem:[#allocation11 + $0xc8] sm:$0xff]
    %v2006 = vld [vmem:[#allocation11 + $0xd0] sm:$0xff]
    %v2007 = vld [vmem:[#allocation11 + $0xd8] sm:$0xff]
    %v2008 = vld [vmem:[#allocation11 + $0xe0] sm:$0xff]
    %v2009 = vld [vmem:[#allocation11 + $0xe8] sm:$0xff]
    %v2010 = vld [vmem:[#allocation11 + $0xf0] sm:$0xff]
    %v2011 = vld [vmem:[#allocation11 + $0xf8] sm:$0xff]
    %v2012 = vld [vmem:[#allocation11 + $0x100] sm:$0xff]
    %v2013 = vld [vmem:[#allocation11 + $0x108] sm:$0xff]
    %v2014 = vld [vmem:[#allocation11 + $0x110] sm:$0xff]
    %v2015 = vld [vmem:[#allocation11 + $0x118] sm:$0xff]
    %v2016 = vld [vmem:[#allocation11 + $0x120] sm:$0xff]
    %v2017 = vld [vmem:[#allocation11 + $0x128] sm:$0xff]
    %v2018 = vld [vmem:[#allocation11 + $0x130] sm:$0xff]
    %v2019 = vld [vmem:[#allocation11 + $0x138] sm:$0xff]
    %v2020 = vld [vmem:[#allocation11 + $0x140] sm:$0xff]
    %v2021 = vld [vmem:[#allocation11 + $0x148] sm:$0xff]
    %v2022 = vld [vmem:[#allocation11 + $0x150] sm:$0xff]
    %v2023 = vld [vmem:[#allocation11 + $0x158] sm:$0xff]
    %v2024 = vld [vmem:[#allocation11 + $0x160] sm:$0xff]
    %v2025 = vld [vmem:[#allocation11 + $0x168] sm:$0xff]
    %v2026 = vld [vmem:[#allocation11 + $0x170] sm:$0xff]
    %v2027 = vld [vmem:[#allocation11 + $0x178] sm:$0xff]
    %v2028 = vld [vmem:[#allocation11 + $0x180] sm:$0xff]
    %v2029 = vld [vmem:[#allocation11 + $0x188] sm:$0xff]
    %v2030 = vld [vmem:[#allocation11 + $0x190] sm:$0xff]
    %v2031 = vld [vmem:[#allocation11 + $0x198] sm:$0xff]
    %v2032 = vld [vmem:[#allocation11 + $0x1a0] sm:$0xff]
    %v2033 = vld [vmem:[#allocation11 + $0x1a8] sm:$0xff]
    %v2034 = vld [vmem:[#allocation11 + $0x1b0] sm:$0xff]
    %v2035 = vld [vmem:[#allocation11 + $0x1b8] sm:$0xff]
    %v2036 = vld [vmem:[#allocation11 + $0x1c0] sm:$0xff]
    %v2037 = vld [vmem:[#allocation11 + $0x1c8] sm:$0xff]
    %v2038 = vld [vmem:[#allocation11 + $0x1d0] sm:$0xff]
    %v2039 = vld [vmem:[#allocation11 + $0x1d8] sm:$0xff]
    %v2040 = vld [vmem:[#allocation11 + $0x1e0] sm:$0xff]
    %v2041 = vld [vmem:[#allocation11 + $0x1e8] sm:$0xff]
    %v2042 = vld [vmem:[#allocation11 + $0x1f0] sm:$0xff]
    %v2043 = vld [vmem:[#allocation11 + $0x1f8] sm:$0xff]
    %v2044 = vld [vmem:[%s6] sm:$0xf]
    %v2045 = vld [vmem:[#allocation4] sm:$0xff]
    %v2046 = vld [vmem:[#allocation4 + $0x8] sm:$0xff]
    %v2047 = vld [vmem:[#allocation4 + $0x10] sm:$0xff]
    %v2048 = vld [vmem:[#allocation4 + $0x18] sm:$0xff]
    %v2049 = vld [vmem:[#allocation4 + $0x20] sm:$0xff]
    %v2050 = vld [vmem:[#allocation4 + $0x28] sm:$0xff]
    %v2051 = vld [vmem:[#allocation4 + $0x30] sm:$0xff]
    %v2052 = vld [vmem:[#allocation4 + $0x38] sm:$0xff]
    %v2054 = vlaneseq
    %v2055 = vshrl.u32 %v2054, 7
    %v2056 = vsub.s32 0, %v2055
    %v2057 = vrot.slane %v2044, %v2056
    %v2058 = vlaneseq
    %v2059 = vshrl.u32 %v2058, 7
    %v2060 = vsub.s32 1, %v2059
    %v2061 = vrot.slane %v2044, %v2060
    %v2062 = vlaneseq
    %v2063 = vshrl.u32 %v2062, 7
    %v2064 = vsub.s32 2, %v2063
    %v2065 = vrot.slane %v2044, %v2064
    %v2066 = vlaneseq
    %v2067 = vshrl.u32 %v2066, 7
    %v2068 = vsub.s32 3, %v2067
    %v2069 = vrot.slane %v2044, %v2068
    %2074 = vmatprep.subr.mxu0 %v1917
    %2075 = vmatpush1.msra.mxu0 %v1916
    %2076 = vmatprep.subr.mxu0 %v1921
    %2077 = vmatpush1.msra.mxu0 %v1920
    %2078 = vmatprep.subr.mxu0 %v1925
    %2079 = vmatpush1.msra.mxu0 %v1924
    %2080 = vmatprep.subr.mxu0 %v1929
    %2081 = vmatpush1.msra.mxu0 %v1928
    %2082 = vmatprep.subr.mxu0 %v1933
    %2083 = vmatpush1.msra.mxu0 %v1932
    %2084 = vmatprep.subr.mxu0 %v1937
    %2085 = vmatpush1.msra.mxu0 %v1936
    %2086 = vmatprep.subr.mxu0 %v1941
    %2087 = vmatpush1.msra.mxu0 %v1940
    %2088 = vmatprep.subr.mxu0 %v1945
    %2089 = vmatpush1.msra.mxu0 %v1944
    %2090 = vmatprep.subr.mxu0 %v1949
    %2091 = vmatpush1.msra.mxu0 %v1948
    %2092 = vmatprep.subr.mxu0 %v1953
    %2093 = vmatpush1.msra.mxu0 %v1952
    %2094 = vmatprep.subr.mxu0 %v1957
    %2095 = vmatpush1.msra.mxu0 %v1956
    %2096 = vmatprep.subr.mxu0 %v1961
    %2097 = vmatpush1.msra.mxu0 %v1960
    %2098 = vmatprep.subr.mxu0 %v1965
    %2099 = vmatpush1.msra.mxu0 %v1964
    %2100 = vmatprep.subr.mxu0 %v1969
    %2101 = vmatpush1.msra.mxu0 %v1968
    %2102 = vmatprep.subr.mxu0 %v1973
    %2103 = vmatpush1.msra.mxu0 %v1972
    %2104 = vmatprep.subr.mxu0 %v1977
    %2105 = vmatpush1.msra.mxu0 %v1976
    %2106 = vmatprep.subr.mxu0 0.0
    %2107 = vmatpush1.msra.mxu0 0.0
    %2108 = vmatprep.subr.mxu0 0.0
    %2109 = vmatpush1.msra.mxu0 0.0
    %2110 = vmatprep.subr.mxu0 0.0
    %2111 = vmatpush1.msra.mxu0 0.0
    %2112 = vmatprep.subr.mxu0 0.0
    %2113 = vmatpush1.msra.mxu0 0.0
    %2114 = vmatprep.subr.mxu0 0.0
    %2115 = vmatpush1.msra.mxu0 0.0
    %2116 = vmatprep.subr.mxu0 0.0
    %2117 = vmatpush1.msra.mxu0 0.0
    %2118 = vmatprep.subr.mxu0 0.0
    %2119 = vmatpush1.msra.mxu0 0.0
    %2120 = vmatprep.subr.mxu0 0.0
    %2121 = vmatpush1.msra.mxu0 0.0
    %2122 = vmatprep.subr.mxu0 0.0
    %2123 = vmatpush1.msra.mxu0 0.0
    %2124 = vmatprep.subr.mxu0 0.0
    %2125 = vmatpush1.msra.mxu0 0.0
    %2126 = vmatprep.subr.mxu0 0.0
    %2127 = vmatpush1.msra.mxu0 0.0
    %2128 = vmatprep.subr.mxu0 0.0
    %2129 = vmatpush1.msra.mxu0 0.0
    %2130 = vmatprep.subr.mxu0 0.0
    %2131 = vmatpush1.msra.mxu0 0.0
    %2132 = vmatprep.subr.mxu0 0.0
    %2133 = vmatpush1.msra.mxu0 0.0
    %2134 = vmatprep.subr.mxu0 0.0
    %2135 = vmatpush1.msra.mxu0 0.0
    %2136 = vmatprep.subr.mxu0 0.0
    %2137 = vmatpush1.msra.mxu0 0.0
    %2138 = vmatprep.mubr.f32.mxu0 0.0
    %2139 = vmatmul.mubr.f32.gmra.mrb[0].mxu0 %v2045
    %v2140 = vpop.f32.mrb[0].mxu0
    %v2141 = vadd.f32 %v2057, %v2140
    %v2142 = vpop.f32.mrb[0].mxu0
    %v2143 = vadd.f32 %v2061, %v2142
    %2144 = vmatprep.mubr.f32.mxu0 0.0
    %2145 = vmatmul.mubr.f32.gmra.mrb[0].mxu0 %v2046
    %v2146 = vpop.f32.mrb[0].mxu0
    %v2147 = vadd.f32 %v2057, %v2146
    %v2148 = vpop.f32.mrb[0].mxu0
    %v2149 = vadd.f32 %v2061, %v2148
    %2150 = vmatprep.mubr.f32.mxu0 0.0
    %2151 = vmatmul.mubr.f32.gmra.mrb[0].mxu0 %v2047
    %v2152 = vpop.f32.mrb[0].mxu0
    %v2153 = vadd.f32 %v2057, %v2152
    %v2154 = vpop.f32.mrb[0].mxu0
    %v2155 = vadd.f32 %v2061, %v2154
    %2156 = vmatprep.mubr.f32.mxu0 0.0
    %2157 = vmatmul.mubr.f32.gmra.mrb[0].mxu0 %v2048
    %v2158 = vpop.f32.mrb[0].mxu0
    %v2159 = vadd.f32 %v2057, %v2158
    %v2160 = vpop.f32.mrb[0].mxu0
    %v2161 = vadd.f32 %v2061, %v2160
    %2162 = vmatprep.mubr.f32.mxu0 0.0
    %2163 = vmatmul.mubr.f32.gmra.mrb[0].mxu0 %v2049
    %v2164 = vpop.f32.mrb[0].mxu0
    %v2165 = vadd.f32 %v2057, %v2164
    %v2166 = vpop.f32.mrb[0].mxu0
    %v2167 = vadd.f32 %v2061, %v2166
    %2168 = vmatprep.mubr.f32.mxu0 0.0
    %2169 = vmatmul.mubr.f32.gmra.mrb[0].mxu0 %v2050
    %v2170 = vpop.f32.mrb[0].mxu0
    %v2171 = vadd.f32 %v2057, %v2170
    %v2172 = vpop.f32.mrb[0].mxu0
    %v2173 = vadd.f32 %v2061, %v2172
    %2174 = vmatprep.mubr.f32.mxu0 0.0
    %2175 = vmatmul.mubr.f32.gmra.mrb[0].mxu0 %v2051
    %v2176 = vpop.f32.mrb[0].mxu0
    %v2177 = vadd.f32 %v2057, %v2176
    %v2178 = vpop.f32.mrb[0].mxu0
    %v2179 = vadd.f32 %v2061, %v2178
    %2180 = vmatprep.mubr.f32.mxu0 0.0
    %2181 = vmatmul.mubr.f32.gmra.mrb[0].mxu0 %v2052
    %v2182 = vpop.f32.mrb[0].mxu0
    %v2183 = vadd.f32 %v2057, %v2182
    %v2184 = vpop.f32.mrb[0].mxu0
    %v2185 = vadd.f32 %v2061, %v2184
    %2186 = vdwg.mxu0
    %2187 = vmatprep.subr.mxu0 %v1919
    %2188 = vmatpush1.msra.mxu0 %v1918
    %2189 = vmatprep.subr.mxu0 %v1923
    %2190 = vmatpush1.msra.mxu0 %v1922
    %2191 = vmatprep.subr.mxu0 %v1927
    %2192 = vmatpush1.msra.mxu0 %v1926
    %2193 = vmatprep.subr.mxu0 %v1931
    %2194 = vmatpush1.msra.mxu0 %v1930
    %2195 = vmatprep.subr.mxu0 %v1935
    %2196 = vmatpush1.msra.mxu0 %v1934
    %2197 = vmatprep.subr.mxu0 %v1939
    %2198 = vmatpush1.msra.mxu0 %v1938
    %2199 = vmatprep.subr.mxu0 %v1943
    %2200 = vmatpush1.msra.mxu0 %v1942
    %2201 = vmatprep.subr.mxu0 %v1947
    %2202 = vmatpush1.msra.mxu0 %v1946
    %2203 = vmatprep.subr.mxu0 %v1951
    %2204 = vmatpush1.msra.mxu0 %v1950
    %2205 = vmatprep.subr.mxu0 %v1955
    %2206 = vmatpush1.msra.mxu0 %v1954
    %2207 = vmatprep.subr.mxu0 %v1959
    %2208 = vmatpush1.msra.mxu0 %v1958
    %2209 = vmatprep.subr.mxu0 %v1963
    %2210 = vmatpush1.msra.mxu0 %v1962
    %2211 = vmatprep.subr.mxu0 %v1967
    %2212 = vmatpush1.msra.mxu0 %v1966
    %2213 = vmatprep.subr.mxu0 %v1971
    %2214 = vmatpush1.msra.mxu0 %v1970
    %2215 = vmatprep.subr.mxu0 %v1975
    %2216 = vmatpush1.msra.mxu0 %v1974
    %2217 = vmatprep.subr.mxu0 %v1979
    %2218 = vmatpush1.msra.mxu0 %v1978
    %2219 = vmatprep.subr.mxu0 0.0
    %2220 = vmatpush1.msra.mxu0 0.0
    %2221 = vmatprep.subr.mxu0 0.0
    %2222 = vmatpush1.msra.mxu0 0.0
    %2223 = vmatprep.subr.mxu0 0.0
    %2224 = vmatpush1.msra.mxu0 0.0
    %2225 = vmatprep.subr.mxu0 0.0
    %2226 = vmatpush1.msra.mxu0 0.0
    %2227 = vmatprep.subr.mxu0 0.0
    %2228 = vmatpush1.msra.mxu0 0.0
    %2229 = vmatprep.subr.mxu0 0.0
    %2230 = vmatpush1.msra.mxu0 0.0
    %2231 = vmatprep.subr.mxu0 0.0
    %2232 = vmatpush1.msra.mxu0 0.0
    %2233 = vmatprep.subr.mxu0 0.0
    %2234 = vmatpush1.msra.mxu0 0.0
    %2235 = vmatprep.subr.mxu0 0.0
    %2236 = vmatpush1.msra.mxu0 0.0
    %2237 = vmatprep.subr.mxu0 0.0
    %2238 = vmatpush1.msra.mxu0 0.0
    %2239 = vmatprep.subr.mxu0 0.0
    %2240 = vmatpush1.msra.mxu0 0.0
    %2241 = vmatprep.subr.mxu0 0.0
    %2242 = vmatpush1.msra.mxu0 0.0
    %2243 = vmatprep.subr.mxu0 0.0
    %2244 = vmatpush1.msra.mxu0 0.0
    %2245 = vmatprep.subr.mxu0 0.0
    %2246 = vmatpush1.msra.mxu0 0.0
    %2247 = vmatprep.subr.mxu0 0.0
    %2248 = vmatpush1.msra.mxu0 0.0
    %2249 = vmatprep.subr.mxu0 0.0
    %2250 = vmatpush1.msra.mxu0 0.0
    %2251 = vmatprep.mubr.f32.mxu0 0.0
    %2252 = vmatmul.mubr.f32.gmra.mrb[0].mxu0 %v2045
    %v2253 = vpop.f32.mrb[0].mxu0
    %v2254 = vadd.f32 %v2065, %v2253
    %v2255 = vpop.f32.mrb[0].mxu0
    %v2256 = vadd.f32 %v2069, %v2255
    %2257 = vmatprep.mubr.f32.mxu0 0.0
    %2258 = vmatmul.mubr.f32.gmra.mrb[0].mxu0 %v2046
    %v2259 = vpop.f32.mrb[0].mxu0
    %v2260 = vadd.f32 %v2065, %v2259
    %v2261 = vpop.f32.mrb[0].mxu0
    %v2262 = vadd.f32 %v2069, %v2261
    %2263 = vmatprep.mubr.f32.mxu0 0.0
    %2264 = vmatmul.mubr.f32.gmra.mrb[0].mxu0 %v2047
    %v2265 = vpop.f32.mrb[0].mxu0
    %v2266 = vadd.f32 %v2065, %v2265
    %v2267 = vpop.f32.mrb[0].mxu0
    %v2268 = vadd.f32 %v2069, %v2267
    %2269 = vmatprep.mubr.f32.mxu0 0.0
    %2270 = vmatmul.mubr.f32.gmra.mrb[0].mxu0 %v2048
    %v2271 = vpop.f32.mrb[0].mxu0
    %v2272 = vadd.f32 %v2065, %v2271
    %v2273 = vpop.f32.mrb[0].mxu0
    %v2274 = vadd.f32 %v2069, %v2273
    %2275 = vmatprep.mubr.f32.mxu0 0.0
    %2276 = vmatmul.mubr.f32.gmra.mrb[0].mxu0 %v2049
    %v2277 = vpop.f32.mrb[0].mxu0
    %v2278 = vadd.f32 %v2065, %v2277
    %v2279 = vpop.f32.mrb[0].mxu0
    %v2280 = vadd.f32 %v2069, %v2279
    %2281 = vmatprep.mubr.f32.mxu0 0.0
    %2282 = vmatmul.mubr.f32.gmra.mrb[0].mxu0 %v2050
    %v2283 = vpop.f32.mrb[0].mxu0
    %v2284 = vadd.f32 %v2065, %v2283
    %v2285 = vpop.f32.mrb[0].mxu0
    %v2286 = vadd.f32 %v2069, %v2285
    %2287 = vmatprep.mubr.f32.mxu0 0.0
    %2288 = vmatmul.mubr.f32.gmra.mrb[0].mxu0 %v2051
    %v2289 = vpop.f32.mrb[0].mxu0
    %v2290 = vadd.f32 %v2065, %v2289
    %v2291 = vpop.f32.mrb[0].mxu0
    %v2292 = vadd.f32 %v2069, %v2291
    %2293 = vmatprep.mubr.f32.mxu0 0.0
    %2294 = vmatmul.mubr.f32.gmra.mrb[0].mxu0 %v2052
    %v2295 = vpop.f32.mrb[0].mxu0
    %v2296 = vadd.f32 %v2065, %v2295
    %v2297 = vpop.f32.mrb[0].mxu0
    %v2298 = vadd.f32 %v2069, %v2297
    %2299 = vdwg.mxu0
    %2300 = vst [vmem:[#allocation5] sm:$0xff] %v2141
    %2301 = vst [vmem:[#allocation5 + $0x8] sm:$0xff] %v2143
    %2302 = vst [vmem:[#allocation5 + $0x10] sm:$0xff] %v2254
    %2303 = vst [vmem:[#allocation5 + $0x18] sm:$0xff] %v2256
    %2304 = vst [vmem:[#allocation5 + $0x20] sm:$0xff] %v2147
    %2305 = vst [vmem:[#allocation5 + $0x28] sm:$0xff] %v2149
    %2306 = vst [vmem:[#allocation5 + $0x30] sm:$0xff] %v2260
    %2307 = vst [vmem:[#allocation5 + $0x38] sm:$0xff] %v2262
    %2308 = vst [vmem:[#allocation5 + $0x40] sm:$0xff] %v2153
    %2309 = vst [vmem:[#allocation5 + $0x48] sm:$0xff] %v2155
    %2310 = vst [vmem:[#allocation5 + $0x50] sm:$0xff] %v2266
    %2311 = vst [vmem:[#allocation5 + $0x58] sm:$0xff] %v2268
    %2312 = vst [vmem:[#allocation5 + $0x60] sm:$0xff] %v2159
    %2313 = vst [vmem:[#allocation5 + $0x68] sm:$0xff] %v2161
    %2314 = vst [vmem:[#allocation5 + $0x70] sm:$0xff] %v2272
    %2315 = vst [vmem:[#allocation5 + $0x78] sm:$0xff] %v2274
    %2316 = vst [vmem:[#allocation5 + $0x80] sm:$0xff] %v2165
    %2317 = vst [vmem:[#allocation5 + $0x88] sm:$0xff] %v2167
    %2318 = vst [vmem:[#allocation5 + $0x90] sm:$0xff] %v2278
    %2319 = vst [vmem:[#allocation5 + $0x98] sm:$0xff] %v2280
    %2320 = vst [vmem:[#allocation5 + $0xa0] sm:$0xff] %v2171
    %2321 = vst [vmem:[#allocation5 + $0xa8] sm:$0xff] %v2173
    %2322 = vst [vmem:[#allocation5 + $0xb0] sm:$0xff] %v2284
    %2323 = vst [vmem:[#allocation5 + $0xb8] sm:$0xff] %v2286
    %2324 = vst [vmem:[#allocation5 + $0xc0] sm:$0xff] %v2177
    %2325 = vst [vmem:[#allocation5 + $0xc8] sm:$0xff] %v2179
    %2326 = vst [vmem:[#allocation5 + $0xd0] sm:$0xff] %v2290
    %2327 = vst [vmem:[#allocation5 + $0xd8] sm:$0xff] %v2292
    %2328 = vst [vmem:[#allocation5 + $0xe0] sm:$0xff] %v2183
    %2329 = vst [vmem:[#allocation5 + $0xe8] sm:$0xff] %v2185
    %2330 = vst [vmem:[#allocation5 + $0xf0] sm:$0xff] %v2296
    %2331 = vst [vmem:[#allocation5 + $0xf8] sm:$0xff] %v2298
    %s2332 = scalar_lea.vmem [#allocation2], 8
    %v2333 = vld [vmem:[%s2332] sm:$0xff]
    %s2334 = scalar_lea.vmem [#allocation3], 8
    %v2335 = vld [vmem:[%s2334] sm:$0xff]
    %v2336 = vld [vmem:[%s485] sm:$0xff]
    %v2337 = vld [vmem:[%s485 + $0x8] sm:$0xff]
    %v2338 = vld [vmem:[%s485 + $0x10] sm:$0xff]
    %v2339 = vld [vmem:[%s485 + $0x18] sm:$0xff]
    %2340 = vmatprep.subr.mxu0 %v1981
    %2341 = vmatpush1.msra.mxu0 %v1980
    %2342 = vmatprep.subr.mxu0 %v1985
    %2343 = vmatpush1.msra.mxu0 %v1984
    %2344 = vmatprep.subr.mxu0 %v1989
    %2345 = vmatpush1.msra.mxu0 %v1988
    %2346 = vmatprep.subr.mxu0 %v1993
    %2347 = vmatpush1.msra.mxu0 %v1992
    %2348 = vmatprep.subr.mxu0 %v1997
    %2349 = vmatpush1.msra.mxu0 %v1996
    %2350 = vmatprep.subr.mxu0 %v2001
    %2351 = vmatpush1.msra.mxu0 %v2000
    %2352 = vmatprep.subr.mxu0 %v2005
    %2353 = vmatpush1.msra.mxu0 %v2004
    %2354 = vmatprep.subr.mxu0 %v2009
    %2355 = vmatpush1.msra.mxu0 %v2008
    %2356 = vmatprep.subr.mxu0 %v2013
    %2357 = vmatpush1.msra.mxu0 %v2012
    %2358 = vmatprep.subr.mxu0 %v2017
    %2359 = vmatpush1.msra.mxu0 %v2016
    %2360 = vmatprep.subr.mxu0 %v2021
    %2361 = vmatpush1.msra.mxu0 %v2020
    %2362 = vmatprep.subr.mxu0 %v2025
    %2363 = vmatpush1.msra.mxu0 %v2024
    %2364 = vmatprep.subr.mxu0 %v2029
    %2365 = vmatpush1.msra.mxu0 %v2028
    %2366 = vmatprep.subr.mxu0 %v2033
    %2367 = vmatpush1.msra.mxu0 %v2032
    %2368 = vmatprep.subr.mxu0 %v2037
    %2369 = vmatpush1.msra.mxu0 %v2036
    %2370 = vmatprep.subr.mxu0 %v2041
    %2371 = vmatpush1.msra.mxu0 %v2040
    %2372 = vmatprep.subr.mxu0 0.0
    %2373 = vmatpush1.msra.mxu0 0.0
    %2374 = vmatprep.subr.mxu0 0.0
    %2375 = vmatpush1.msra.mxu0 0.0
    %2376 = vmatprep.subr.mxu0 0.0
    %2377 = vmatpush1.msra.mxu0 0.0
    %2378 = vmatprep.subr.mxu0 0.0
    %2379 = vmatpush1.msra.mxu0 0.0
    %2380 = vmatprep.subr.mxu0 0.0
    %2381 = vmatpush1.msra.mxu0 0.0
    %2382 = vmatprep.subr.mxu0 0.0
    %2383 = vmatpush1.msra.mxu0 0.0
    %2384 = vmatprep.subr.mxu0 0.0
    %2385 = vmatpush1.msra.mxu0 0.0
    %2386 = vmatprep.subr.mxu0 0.0
    %2387 = vmatpush1.msra.mxu0 0.0
    %2388 = vmatprep.subr.mxu0 0.0
    %2389 = vmatpush1.msra.mxu0 0.0
    %2390 = vmatprep.subr.mxu0 0.0
    %2391 = vmatpush1.msra.mxu0 0.0
    %2392 = vmatprep.subr.mxu0 0.0
    %2393 = vmatpush1.msra.mxu0 0.0
    %2394 = vmatprep.subr.mxu0 0.0
    %2395 = vmatpush1.msra.mxu0 0.0
    %2396 = vmatprep.subr.mxu0 0.0
    %2397 = vmatpush1.msra.mxu0 0.0
    %2398 = vmatprep.subr.mxu0 0.0
    %2399 = vmatpush1.msra.mxu0 0.0
    %2400 = vmatprep.subr.mxu0 0.0
    %2401 = vmatpush1.msra.mxu0 0.0
    %2402 = vmatprep.subr.mxu0 0.0
    %2403 = vmatpush1.msra.mxu0 0.0
    %2404 = vmatprep.mubr.f32.mxu0 0.0
    %2405 = vmatmul.mubr.f32.gmra.mrb[0].mxu0 %v2333
    %v2406 = vpop.f32.mrb[0].mxu0
    %v2407 = vadd.f32 0.0, %v2406
    %v2408 = vpop.f32.mrb[0].mxu0
    %v2409 = vadd.f32 0.0, %v2408
    %2410 = vdwg.mxu0
    %2411 = vmatprep.subr.mxu0 %v1983
    %2412 = vmatpush1.msra.mxu0 %v1982
    %2413 = vmatprep.subr.mxu0 %v1987
    %2414 = vmatpush1.msra.mxu0 %v1986
    %2415 = vmatprep.subr.mxu0 %v1991
    %2416 = vmatpush1.msra.mxu0 %v1990
    %2417 = vmatprep.subr.mxu0 %v1995
    %2418 = vmatpush1.msra.mxu0 %v1994
    %2419 = vmatprep.subr.mxu0 %v1999
    %2420 = vmatpush1.msra.mxu0 %v1998
    %2421 = vmatprep.subr.mxu0 %v2003
    %2422 = vmatpush1.msra.mxu0 %v2002
    %2423 = vmatprep.subr.mxu0 %v2007
    %2424 = vmatpush1.msra.mxu0 %v2006
    %2425 = vmatprep.subr.mxu0 %v2011
    %2426 = vmatpush1.msra.mxu0 %v2010
    %2427 = vmatprep.subr.mxu0 %v2015
    %2428 = vmatpush1.msra.mxu0 %v2014
    %2429 = vmatprep.subr.mxu0 %v2019
    %2430 = vmatpush1.msra.mxu0 %v2018
    %2431 = vmatprep.subr.mxu0 %v2023
    %2432 = vmatpush1.msra.mxu0 %v2022
    %2433 = vmatprep.subr.mxu0 %v2027
    %2434 = vmatpush1.msra.mxu0 %v2026
    %2435 = vmatprep.subr.mxu0 %v2031
    %2436 = vmatpush1.msra.mxu0 %v2030
    %2437 = vmatprep.subr.mxu0 %v2035
    %2438 = vmatpush1.msra.mxu0 %v2034
    %2439 = vmatprep.subr.mxu0 %v2039
    %2440 = vmatpush1.msra.mxu0 %v2038
    %2441 = vmatprep.subr.mxu0 %v2043
    %2442 = vmatpush1.msra.mxu0 %v2042
    %2443 = vmatprep.subr.mxu0 0.0
    %2444 = vmatpush1.msra.mxu0 0.0
    %2445 = vmatprep.subr.mxu0 0.0
    %2446 = vmatpush1.msra.mxu0 0.0
    %2447 = vmatprep.subr.mxu0 0.0
    %2448 = vmatpush1.msra.mxu0 0.0
    %2449 = vmatprep.subr.mxu0 0.0
    %2450 = vmatpush1.msra.mxu0 0.0
    %2451 = vmatprep.subr.mxu0 0.0
    %2452 = vmatpush1.msra.mxu0 0.0
    %2453 = vmatprep.subr.mxu0 0.0
    %2454 = vmatpush1.msra.mxu0 0.0
    %2455 = vmatprep.subr.mxu0 0.0
    %2456 = vmatpush1.msra.mxu0 0.0
    %2457 = vmatprep.subr.mxu0 0.0
    %2458 = vmatpush1.msra.mxu0 0.0
    %2459 = vmatprep.subr.mxu0 0.0
    %2460 = vmatpush1.msra.mxu0 0.0
    %2461 = vmatprep.subr.mxu0 0.0
    %2462 = vmatpush1.msra.mxu0 0.0
    %2463 = vmatprep.subr.mxu0 0.0
    %2464 = vmatpush1.msra.mxu0 0.0
    %2465 = vmatprep.subr.mxu0 0.0
    %2466 = vmatpush1.msra.mxu0 0.0
    %2467 = vmatprep.subr.mxu0 0.0
    %2468 = vmatpush1.msra.mxu0 0.0
    %2469 = vmatprep.subr.mxu0 0.0
    %2470 = vmatpush1.msra.mxu0 0.0
    %2471 = vmatprep.subr.mxu0 0.0
    %2472 = vmatpush1.msra.mxu0 0.0
    %2473 = vmatprep.subr.mxu0 0.0
    %2474 = vmatpush1.msra.mxu0 0.0
    %2475 = vmatprep.mubr.f32.mxu0 0.0
    %2476 = vmatmul.mubr.f32.gmra.mrb[0].mxu0 %v2333
    %v2477 = vpop.f32.mrb[0].mxu0
    %v2478 = vadd.f32 0.0, %v2477
    %v2479 = vpop.f32.mrb[0].mxu0
    %v2480 = vadd.f32 0.0, %v2479
    %2481 = vdwg.mxu0
    %v2482 = vadd.f32 %v2336, %v2407
    %v2483 = vadd.f32 %v2337, %v2409
    %v2484 = vadd.f32 %v2338, %v2478
    %v2485 = vadd.f32 %v2339, %v2480
    %v2486 = vxor.u32 %v2482, 2147483648
    %v2487 = vmul.f32 %v2486, 1.442695
    %v2488 = vpow.pop %v2487
    %v2489 = vadd.f32 %v2488, 1.0
    %v2490 = vrcp.pop %v2489
    %v2491 = vmul.f32 1.0, %v2490
    %v2492 = vxor.u32 %v2483, 2147483648
    %v2493 = vmul.f32 %v2492, 1.442695
    %v2494 = vpow.pop %v2493
    %v2495 = vadd.f32 %v2494, 1.0
    %v2496 = vrcp.pop %v2495
    %v2497 = vmul.f32 1.0, %v2496
    %v2498 = vtanh.pop %v2484
    %v2499 = vxor.u32 %v2485, 2147483648
    %v2500 = vmul.f32 %v2499, 1.442695
    %v2501 = vpow.pop %v2500
    %v2502 = vadd.f32 %v2501, 1.0
    %v2503 = vrcp.pop %v2502
    %v2504 = vmul.f32 1.0, %v2503
    %v2505 = vmul.f32 %v2497, %v2335
    %v2506 = vmul.f32 %v2491, %v2498
    %v2507 = vadd.f32 %v2505, %v2506
    %v2508 = vtanh.pop %v2507
    %v2509 = vmul.f32 %v2504, %v2508
    %v2510 = vld [vmem:[%s663] sm:$0xff]
    %v2511 = vld [vmem:[%s663 + $0x8] sm:$0xff]
    %v2512 = vld [vmem:[%s663 + $0x10] sm:$0xff]
    %v2513 = vld [vmem:[%s663 + $0x18] sm:$0xff]
    %2514 = vmatprep.subr.mxu0 %v1981
    %2515 = vmatpush1.msra.mxu0 %v1980
    %2516 = vmatprep.subr.mxu0 %v1985
    %2517 = vmatpush1.msra.mxu0 %v1984
    %2518 = vmatprep.subr.mxu0 %v1989
    %2519 = vmatpush1.msra.mxu0 %v1988
    %2520 = vmatprep.subr.mxu0 %v1993
    %2521 = vmatpush1.msra.mxu0 %v1992
    %2522 = vmatprep.subr.mxu0 %v1997
    %2523 = vmatpush1.msra.mxu0 %v1996
    %2524 = vmatprep.subr.mxu0 %v2001
    %2525 = vmatpush1.msra.mxu0 %v2000
    %2526 = vmatprep.subr.mxu0 %v2005
    %2527 = vmatpush1.msra.mxu0 %v2004
    %2528 = vmatprep.subr.mxu0 %v2009
    %2529 = vmatpush1.msra.mxu0 %v2008
    %2530 = vmatprep.subr.mxu0 %v2013
    %2531 = vmatpush1.msra.mxu0 %v2012
    %2532 = vmatprep.subr.mxu0 %v2017
    %2533 = vmatpush1.msra.mxu0 %v2016
    %2534 = vmatprep.subr.mxu0 %v2021
    %2535 = vmatpush1.msra.mxu0 %v2020
    %2536 = vmatprep.subr.mxu0 %v2025
    %2537 = vmatpush1.msra.mxu0 %v2024
    %2538 = vmatprep.subr.mxu0 %v2029
    %2539 = vmatpush1.msra.mxu0 %v2028
    %2540 = vmatprep.subr.mxu0 %v2033
    %2541 = vmatpush1.msra.mxu0 %v2032
    %2542 = vmatprep.subr.mxu0 %v2037
    %2543 = vmatpush1.msra.mxu0 %v2036
    %2544 = vmatprep.subr.mxu0 %v2041
    %2545 = vmatpush1.msra.mxu0 %v2040
    %2546 = vmatprep.subr.mxu0 0.0
    %2547 = vmatpush1.msra.mxu0 0.0
    %2548 = vmatprep.subr.mxu0 0.0
    %2549 = vmatpush1.msra.mxu0 0.0
    %2550 = vmatprep.subr.mxu0 0.0
    %2551 = vmatpush1.msra.mxu0 0.0
    %2552 = vmatprep.subr.mxu0 0.0
    %2553 = vmatpush1.msra.mxu0 0.0
    %2554 = vmatprep.subr.mxu0 0.0
    %2555 = vmatpush1.msra.mxu0 0.0
    %2556 = vmatprep.subr.mxu0 0.0
    %2557 = vmatpush1.msra.mxu0 0.0
    %2558 = vmatprep.subr.mxu0 0.0
    %2559 = vmatpush1.msra.mxu0 0.0
    %2560 = vmatprep.subr.mxu0 0.0
    %2561 = vmatpush1.msra.mxu0 0.0
    %2562 = vmatprep.subr.mxu0 0.0
    %2563 = vmatpush1.msra.mxu0 0.0
    %2564 = vmatprep.subr.mxu0 0.0
    %2565 = vmatpush1.msra.mxu0 0.0
    %2566 = vmatprep.subr.mxu0 0.0
    %2567 = vmatpush1.msra.mxu0 0.0
    %2568 = vmatprep.subr.mxu0 0.0
    %2569 = vmatpush1.msra.mxu0 0.0
    %2570 = vmatprep.subr.mxu0 0.0
    %2571 = vmatpush1.msra.mxu0 0.0
    %2572 = vmatprep.subr.mxu0 0.0
    %2573 = vmatpush1.msra.mxu0 0.0
    %2574 = vmatprep.subr.mxu0 0.0
    %2575 = vmatpush1.msra.mxu0 0.0
    %2576 = vmatprep.subr.mxu0 0.0
    %2577 = vmatpush1.msra.mxu0 0.0
    %2578 = vmatprep.mubr.f32.mxu0 0.0
    %2579 = vmatmul.mubr.f32.gmra.mrb[0].mxu0 %v2509
    %v2580 = vpop.f32.mrb[0].mxu0
    %v2581 = vadd.f32 0.0, %v2580
    %v2582 = vpop.f32.mrb[0].mxu0
    %v2583 = vadd.f32 0.0, %v2582
    %2584 = vdwg.mxu0
    %2585 = vmatprep.subr.mxu0 %v1983
    %2586 = vmatpush1.msra.mxu0 %v1982
    %2587 = vmatprep.subr.mxu0 %v1987
    %2588 = vmatpush1.msra.mxu0 %v1986
    %2589 = vmatprep.subr.mxu0 %v1991
    %2590 = vmatpush1.msra.mxu0 %v1990
    %2591 = vmatprep.subr.mxu0 %v1995
    %2592 = vmatpush1.msra.mxu0 %v1994
    %2593 = vmatprep.subr.mxu0 %v1999
    %2594 = vmatpush1.msra.mxu0 %v1998
    %2595 = vmatprep.subr.mxu0 %v2003
    %2596 = vmatpush1.msra.mxu0 %v2002
    %2597 = vmatprep.subr.mxu0 %v2007
    %2598 = vmatpush1.msra.mxu0 %v2006
    %2599 = vmatprep.subr.mxu0 %v2011
    %2600 = vmatpush1.msra.mxu0 %v2010
    %2601 = vmatprep.subr.mxu0 %v2015
    %2602 = vmatpush1.msra.mxu0 %v2014
    %2603 = vmatprep.subr.mxu0 %v2019
    %2604 = vmatpush1.msra.mxu0 %v2018
    %2605 = vmatprep.subr.mxu0 %v2023
    %2606 = vmatpush1.msra.mxu0 %v2022
    %2607 = vmatprep.subr.mxu0 %v2027
    %2608 = vmatpush1.msra.mxu0 %v2026
    %2609 = vmatprep.subr.mxu0 %v2031
    %2610 = vmatpush1.msra.mxu0 %v2030
    %2611 = vmatprep.subr.mxu0 %v2035
    %2612 = vmatpush1.msra.mxu0 %v2034
    %2613 = vmatprep.subr.mxu0 %v2039
    %2614 = vmatpush1.msra.mxu0 %v2038
    %2615 = vmatprep.subr.mxu0 %v2043
    %2616 = vmatpush1.msra.mxu0 %v2042
    %2617 = vmatprep.subr.mxu0 0.0
    %2618 = vmatpush1.msra.mxu0 0.0
    %2619 = vmatprep.subr.mxu0 0.0
    %2620 = vmatpush1.msra.mxu0 0.0
    %2621 = vmatprep.subr.mxu0 0.0
    %2622 = vmatpush1.msra.mxu0 0.0
    %2623 = vmatprep.subr.mxu0 0.0
    %2624 = vmatpush1.msra.mxu0 0.0
    %2625 = vmatprep.subr.mxu0 0.0
    %2626 = vmatpush1.msra.mxu0 0.0
    %2627 = vmatprep.subr.mxu0 0.0
    %2628 = vmatpush1.msra.mxu0 0.0
    %2629 = vmatprep.subr.mxu0 0.0
    %2630 = vmatpush1.msra.mxu0 0.0
    %2631 = vmatprep.subr.mxu0 0.0
    %2632 = vmatpush1.msra.mxu0 0.0
    %2633 = vmatprep.subr.mxu0 0.0
    %2634 = vmatpush1.msra.mxu0 0.0
    %2635 = vmatprep.subr.mxu0 0.0
    %2636 = vmatpush1.msra.mxu0 0.0
    %2637 = vmatprep.subr.mxu0 0.0
    %2638 = vmatpush1.msra.mxu0 0.0
    %2639 = vmatprep.subr.mxu0 0.0
    %2640 = vmatpush1.msra.mxu0 0.0
    %2641 = vmatprep.subr.mxu0 0.0
    %2642 = vmatpush1.msra.mxu0 0.0
    %2643 = vmatprep.subr.mxu0 0.0
    %2644 = vmatpush1.msra.mxu0 0.0
    %2645 = vmatprep.subr.mxu0 0.0
    %2646 = vmatpush1.msra.mxu0 0.0
    %2647 = vmatprep.subr.mxu0 0.0
    %2648 = vmatpush1.msra.mxu0 0.0
    %2649 = vmatprep.mubr.f32.mxu0 0.0
    %2650 = vmatmul.mubr.f32.gmra.mrb[0].mxu0 %v2509
    %v2651 = vpop.f32.mrb[0].mxu0
    %v2652 = vadd.f32 0.0, %v2651
    %v2653 = vpop.f32.mrb[0].mxu0
    %v2654 = vadd.f32 0.0, %v2653
    %2655 = vdwg.mxu0
    %v2656 = vadd.f32 %v2510, %v2581
    %v2657 = vadd.f32 %v2511, %v2583
    %v2658 = vadd.f32 %v2512, %v2652
    %v2659 = vadd.f32 %v2513, %v2654
    %v2660 = vxor.u32 %v2656, 2147483648
    %v2661 = vmul.f32 %v2660, 1.442695
    %v2662 = vpow.pop %v2661
    %v2663 = vadd.f32 %v2662, 1.0
    %v2664 = vrcp.pop %v2663
    %v2665 = vmul.f32 1.0, %v2664
    %v2666 = vxor.u32 %v2657, 2147483648
    %v2667 = vmul.f32 %v2666, 1.442695
    %v2668 = vpow.pop %v2667
    %v2669 = vadd.f32 %v2668, 1.0
    %v2670 = vrcp.pop %v2669
    %v2671 = vmul.f32 1.0, %v2670
    %v2672 = vtanh.pop %v2658
    %v2673 = vxor.u32 %v2659, 2147483648
    %v2674 = vmul.f32 %v2673, 1.442695
    %v2675 = vpow.pop %v2674
    %v2676 = vadd.f32 %v2675, 1.0
    %v2677 = vrcp.pop %v2676
    %v2678 = vmul.f32 1.0, %v2677
    %v2679 = vmul.f32 %v2671, %v2507
    %v2680 = vmul.f32 %v2665, %v2672
    %v2681 = vadd.f32 %v2679, %v2680
    %v2682 = vtanh.pop %v2681
    %v2683 = vmul.f32 %v2678, %v2682
    %v2684 = vld [vmem:[%s842] sm:$0xff]
    %v2685 = vld [vmem:[%s842 + $0x8] sm:$0xff]
    %v2686 = vld [vmem:[%s842 + $0x10] sm:$0xff]
    %v2687 = vld [vmem:[%s842 + $0x18] sm:$0xff]
    %2688 = vmatprep.subr.mxu0 %v1981
    %2689 = vmatpush1.msra.mxu0 %v1980
    %2690 = vmatprep.subr.mxu0 %v1985
    %2691 = vmatpush1.msra.mxu0 %v1984
    %2692 = vmatprep.subr.mxu0 %v1989
    %2693 = vmatpush1.msra.mxu0 %v1988
    %2694 = vmatprep.subr.mxu0 %v1993
    %2695 = vmatpush1.msra.mxu0 %v1992
    %2696 = vmatprep.subr.mxu0 %v1997
    %2697 = vmatpush1.msra.mxu0 %v1996
    %2698 = vmatprep.subr.mxu0 %v2001
    %2699 = vmatpush1.msra.mxu0 %v2000
    %2700 = vmatprep.subr.mxu0 %v2005
    %2701 = vmatpush1.msra.mxu0 %v2004
    %2702 = vmatprep.subr.mxu0 %v2009
    %2703 = vmatpush1.msra.mxu0 %v2008
    %2704 = vmatprep.subr.mxu0 %v2013
    %2705 = vmatpush1.msra.mxu0 %v2012
    %2706 = vmatprep.subr.mxu0 %v2017
    %2707 = vmatpush1.msra.mxu0 %v2016
    %2708 = vmatprep.subr.mxu0 %v2021
    %2709 = vmatpush1.msra.mxu0 %v2020
    %2710 = vmatprep.subr.mxu0 %v2025
    %2711 = vmatpush1.msra.mxu0 %v2024
    %2712 = vmatprep.subr.mxu0 %v2029
    %2713 = vmatpush1.msra.mxu0 %v2028
    %2714 = vmatprep.subr.mxu0 %v2033
    %2715 = vmatpush1.msra.mxu0 %v2032
    %2716 = vmatprep.subr.mxu0 %v2037
    %2717 = vmatpush1.msra.mxu0 %v2036
    %2718 = vmatprep.subr.mxu0 %v2041
    %2719 = vmatpush1.msra.mxu0 %v2040
    %2720 = vmatprep.subr.mxu0 0.0
    %2721 = vmatpush1.msra.mxu0 0.0
    %2722 = vmatprep.subr.mxu0 0.0
    %2723 = vmatpush1.msra.mxu0 0.0
    %2724 = vmatprep.subr.mxu0 0.0
    %2725 = vmatpush1.msra.mxu0 0.0
    %2726 = vmatprep.subr.mxu0 0.0
    %2727 = vmatpush1.msra.mxu0 0.0
    %2728 = vmatprep.subr.mxu0 0.0
    %2729 = vmatpush1.msra.mxu0 0.0
    %2730 = vmatprep.subr.mxu0 0.0
    %2731 = vmatpush1.msra.mxu0 0.0
    %2732 = vmatprep.subr.mxu0 0.0
    %2733 = vmatpush1.msra.mxu0 0.0
    %2734 = vmatprep.subr.mxu0 0.0
    %2735 = vmatpush1.msra.mxu0 0.0
    %2736 = vmatprep.subr.mxu0 0.0
    %2737 = vmatpush1.msra.mxu0 0.0
    %2738 = vmatprep.subr.mxu0 0.0
    %2739 = vmatpush1.msra.mxu0 0.0
    %2740 = vmatprep.subr.mxu0 0.0
    %2741 = vmatpush1.msra.mxu0 0.0
    %2742 = vmatprep.subr.mxu0 0.0
    %2743 = vmatpush1.msra.mxu0 0.0
    %2744 = vmatprep.subr.mxu0 0.0
    %2745 = vmatpush1.msra.mxu0 0.0
    %2746 = vmatprep.subr.mxu0 0.0
    %2747 = vmatpush1.msra.mxu0 0.0
    %2748 = vmatprep.subr.mxu0 0.0
    %2749 = vmatpush1.msra.mxu0 0.0
    %2750 = vmatprep.subr.mxu0 0.0
    %2751 = vmatpush1.msra.mxu0 0.0
    %2752 = vmatprep.mubr.f32.mxu0 0.0
    %2753 = vmatmul.mubr.f32.gmra.mrb[0].mxu0 %v2683
    %v2754 = vpop.f32.mrb[0].mxu0
    %v2755 = vadd.f32 0.0, %v2754
    %v2756 = vpop.f32.mrb[0].mxu0
    %v2757 = vadd.f32 0.0, %v2756
    %2758 = vdwg.mxu0
    %2759 = vmatprep.subr.mxu0 %v1983
    %2760 = vmatpush1.msra.mxu0 %v1982
    %2761 = vmatprep.subr.mxu0 %v1987
    %2762 = vmatpush1.msra.mxu0 %v1986
    %2763 = vmatprep.subr.mxu0 %v1991
    %2764 = vmatpush1.msra.mxu0 %v1990
    %2765 = vmatprep.subr.mxu0 %v1995
    %2766 = vmatpush1.msra.mxu0 %v1994
    %2767 = vmatprep.subr.mxu0 %v1999
    %2768 = vmatpush1.msra.mxu0 %v1998
    %2769 = vmatprep.subr.mxu0 %v2003
    %2770 = vmatpush1.msra.mxu0 %v2002
    %2771 = vmatprep.subr.mxu0 %v2007
    %2772 = vmatpush1.msra.mxu0 %v2006
    %2773 = vmatprep.subr.mxu0 %v2011
    %2774 = vmatpush1.msra.mxu0 %v2010
    %2775 = vmatprep.subr.mxu0 %v2015
    %2776 = vmatpush1.msra.mxu0 %v2014
    %2777 = vmatprep.subr.mxu0 %v2019
    %2778 = vmatpush1.msra.mxu0 %v2018
    %2779 = vmatprep.subr.mxu0 %v2023
    %2780 = vmatpush1.msra.mxu0 %v2022
    %2781 = vmatprep.subr.mxu0 %v2027
    %2782 = vmatpush1.msra.mxu0 %v2026
    %2783 = vmatprep.subr.mxu0 %v2031
    %2784 = vmatpush1.msra.mxu0 %v2030
    %2785 = vmatprep.subr.mxu0 %v2035
    %2786 = vmatpush1.msra.mxu0 %v2034
    %2787 = vmatprep.subr.mxu0 %v2039
    %2788 = vmatpush1.msra.mxu0 %v2038
    %2789 = vmatprep.subr.mxu0 %v2043
    %2790 = vmatpush1.msra.mxu0 %v2042
    %2791 = vmatprep.subr.mxu0 0.0
    %2792 = vmatpush1.msra.mxu0 0.0
    %2793 = vmatprep.subr.mxu0 0.0
    %2794 = vmatpush1.msra.mxu0 0.0
    %2795 = vmatprep.subr.mxu0 0.0
    %2796 = vmatpush1.msra.mxu0 0.0
    %2797 = vmatprep.subr.mxu0 0.0
    %2798 = vmatpush1.msra.mxu0 0.0
    %2799 = vmatprep.subr.mxu0 0.0
    %2800 = vmatpush1.msra.mxu0 0.0
    %2801 = vmatprep.subr.mxu0 0.0
    %2802 = vmatpush1.msra.mxu0 0.0
    %2803 = vmatprep.subr.mxu0 0.0
    %2804 = vmatpush1.msra.mxu0 0.0
    %2805 = vmatprep.subr.mxu0 0.0
    %2806 = vmatpush1.msra.mxu0 0.0
    %2807 = vmatprep.subr.mxu0 0.0
    %2808 = vmatpush1.msra.mxu0 0.0
    %2809 = vmatprep.subr.mxu0 0.0
    %2810 = vmatpush1.msra.mxu0 0.0
    %2811 = vmatprep.subr.mxu0 0.0
    %2812 = vmatpush1.msra.mxu0 0.0
    %2813 = vmatprep.subr.mxu0 0.0
    %2814 = vmatpush1.msra.mxu0 0.0
    %2815 = vmatprep.subr.mxu0 0.0
    %2816 = vmatpush1.msra.mxu0 0.0
    %2817 = vmatprep.subr.mxu0 0.0
    %2818 = vmatpush1.msra.mxu0 0.0
    %2819 = vmatprep.subr.mxu0 0.0
    %2820 = vmatpush1.msra.mxu0 0.0
    %2821 = vmatprep.subr.mxu0 0.0
    %2822 = vmatpush1.msra.mxu0 0.0
    %2823 = vmatprep.mubr.f32.mxu0 0.0
    %2824 = vmatmul.mubr.f32.gmra.mrb[0].mxu0 %v2683
    %v2825 = vpop.f32.mrb[0].mxu0
    %v2826 = vadd.f32 0.0, %v2825
    %v2827 = vpop.f32.mrb[0].mxu0
    %v2828 = vadd.f32 0.0, %v2827
    %2829 = vdwg.mxu0
    %v2830 = vadd.f32 %v2684, %v2755
    %v2831 = vadd.f32 %v2685, %v2757
    %v2832 = vadd.f32 %v2686, %v2826
    %v2833 = vadd.f32 %v2687, %v2828
    %v2834 = vxor.u32 %v2830, 2147483648
    %v2835 = vmul.f32 %v2834, 1.442695
    %v2836 = vpow.pop %v2835
    %v2837 = vadd.f32 %v2836, 1.0
    %v2838 = vrcp.pop %v2837
    %v2839 = vmul.f32 1.0, %v2838
    %v2840 = vxor.u32 %v2831, 2147483648
    %v2841 = vmul.f32 %v2840, 1.442695
    %v2842 = vpow.pop %v2841
    %v2843 = vadd.f32 %v2842, 1.0
    %v2844 = vrcp.pop %v2843
    %v2845 = vmul.f32 1.0, %v2844
    %v2846 = vtanh.pop %v2832
    %v2847 = vxor.u32 %v2833, 2147483648
    %v2848 = vmul.f32 %v2847, 1.442695
    %v2849 = vpow.pop %v2848
    %v2850 = vadd.f32 %v2849, 1.0
    %v2851 = vrcp.pop %v2850
    %v2852 = vmul.f32 1.0, %v2851
    %v2853 = vmul.f32 %v2845, %v2681
    %v2854 = vmul.f32 %v2839, %v2846
    %v2855 = vadd.f32 %v2853, %v2854
    %v2856 = vtanh.pop %v2855
    %v2857 = vmul.f32 %v2852, %v2856
    %v2858 = vld [vmem:[%s1021] sm:$0xff]
    %v2859 = vld [vmem:[%s1021 + $0x8] sm:$0xff]
    %v2860 = vld [vmem:[%s1021 + $0x10] sm:$0xff]
    %v2861 = vld [vmem:[%s1021 + $0x18] sm:$0xff]
    %2862 = vmatprep.subr.mxu0 %v1981
    %2863 = vmatpush1.msra.mxu0 %v1980
    %2864 = vmatprep.subr.mxu0 %v1985
    %2865 = vmatpush1.msra.mxu0 %v1984
    %2866 = vmatprep.subr.mxu0 %v1989
    %2867 = vmatpush1.msra.mxu0 %v1988
    %2868 = vmatprep.subr.mxu0 %v1993
    %2869 = vmatpush1.msra.mxu0 %v1992
    %2870 = vmatprep.subr.mxu0 %v1997
    %2871 = vmatpush1.msra.mxu0 %v1996
    %2872 = vmatprep.subr.mxu0 %v2001
    %2873 = vmatpush1.msra.mxu0 %v2000
    %2874 = vmatprep.subr.mxu0 %v2005
    %2875 = vmatpush1.msra.mxu0 %v2004
    %2876 = vmatprep.subr.mxu0 %v2009
    %2877 = vmatpush1.msra.mxu0 %v2008
    %2878 = vmatprep.subr.mxu0 %v2013
    %2879 = vmatpush1.msra.mxu0 %v2012
    %2880 = vmatprep.subr.mxu0 %v2017
    %2881 = vmatpush1.msra.mxu0 %v2016
    %2882 = vmatprep.subr.mxu0 %v2021
    %2883 = vmatpush1.msra.mxu0 %v2020
    %2884 = vmatprep.subr.mxu0 %v2025
    %2885 = vmatpush1.msra.mxu0 %v2024
    %2886 = vmatprep.subr.mxu0 %v2029
    %2887 = vmatpush1.msra.mxu0 %v2028
    %2888 = vmatprep.subr.mxu0 %v2033
    %2889 = vmatpush1.msra.mxu0 %v2032
    %2890 = vmatprep.subr.mxu0 %v2037
    %2891 = vmatpush1.msra.mxu0 %v2036
    %2892 = vmatprep.subr.mxu0 %v2041
    %2893 = vmatpush1.msra.mxu0 %v2040
    %2894 = vmatprep.subr.mxu0 0.0
    %2895 = vmatpush1.msra.mxu0 0.0
    %2896 = vmatprep.subr.mxu0 0.0
    %2897 = vmatpush1.msra.mxu0 0.0
    %2898 = vmatprep.subr.mxu0 0.0
    %2899 = vmatpush1.msra.mxu0 0.0
    %2900 = vmatprep.subr.mxu0 0.0
    %2901 = vmatpush1.msra.mxu0 0.0
    %2902 = vmatprep.subr.mxu0 0.0
    %2903 = vmatpush1.msra.mxu0 0.0
    %2904 = vmatprep.subr.mxu0 0.0
    %2905 = vmatpush1.msra.mxu0 0.0
    %2906 = vmatprep.subr.mxu0 0.0
    %2907 = vmatpush1.msra.mxu0 0.0
    %2908 = vmatprep.subr.mxu0 0.0
    %2909 = vmatpush1.msra.mxu0 0.0
    %2910 = vmatprep.subr.mxu0 0.0
    %2911 = vmatpush1.msra.mxu0 0.0
    %2912 = vmatprep.subr.mxu0 0.0
    %2913 = vmatpush1.msra.mxu0 0.0
    %2914 = vmatprep.subr.mxu0 0.0
    %2915 = vmatpush1.msra.mxu0 0.0
    %2916 = vmatprep.subr.mxu0 0.0
    %2917 = vmatpush1.msra.mxu0 0.0
    %2918 = vmatprep.subr.mxu0 0.0
    %2919 = vmatpush1.msra.mxu0 0.0
    %2920 = vmatprep.subr.mxu0 0.0
    %2921 = vmatpush1.msra.mxu0 0.0
    %2922 = vmatprep.subr.mxu0 0.0
    %2923 = vmatpush1.msra.mxu0 0.0
    %2924 = vmatprep.subr.mxu0 0.0
    %2925 = vmatpush1.msra.mxu0 0.0
    %2926 = vmatprep.mubr.f32.mxu0 0.0
    %2927 = vmatmul.mubr.f32.gmra.mrb[0].mxu0 %v2857
    %v2928 = vpop.f32.mrb[0].mxu0
    %v2929 = vadd.f32 0.0, %v2928
    %v2930 = vpop.f32.mrb[0].mxu0
    %v2931 = vadd.f32 0.0, %v2930
    %2932 = vdwg.mxu0
    %2933 = vmatprep.subr.mxu0 %v1983
    %2934 = vmatpush1.msra.mxu0 %v1982
    %2935 = vmatprep.subr.mxu0 %v1987
    %2936 = vmatpush1.msra.mxu0 %v1986
    %2937 = vmatprep.subr.mxu0 %v1991
    %2938 = vmatpush1.msra.mxu0 %v1990
    %2939 = vmatprep.subr.mxu0 %v1995
    %2940 = vmatpush1.msra.mxu0 %v1994
    %2941 = vmatprep.subr.mxu0 %v1999
    %2942 = vmatpush1.msra.mxu0 %v1998
    %2943 = vmatprep.subr.mxu0 %v2003
    %2944 = vmatpush1.msra.mxu0 %v2002
    %2945 = vmatprep.subr.mxu0 %v2007
    %2946 = vmatpush1.msra.mxu0 %v2006
    %2947 = vmatprep.subr.mxu0 %v2011
    %2948 = vmatpush1.msra.mxu0 %v2010
    %2949 = vmatprep.subr.mxu0 %v2015
    %2950 = vmatpush1.msra.mxu0 %v2014
    %2951 = vmatprep.subr.mxu0 %v2019
    %2952 = vmatpush1.msra.mxu0 %v2018
    %2953 = vmatprep.subr.mxu0 %v2023
    %2954 = vmatpush1.msra.mxu0 %v2022
    %2955 = vmatprep.subr.mxu0 %v2027
    %2956 = vmatpush1.msra.mxu0 %v2026
    %2957 = vmatprep.subr.mxu0 %v2031
    %2958 = vmatpush1.msra.mxu0 %v2030
    %2959 = vmatprep.subr.mxu0 %v2035
    %2960 = vmatpush1.msra.mxu0 %v2034
    %2961 = vmatprep.subr.mxu0 %v2039
    %2962 = vmatpush1.msra.mxu0 %v2038
    %2963 = vmatprep.subr.mxu0 %v2043
    %2964 = vmatpush1.msra.mxu0 %v2042
    %2965 = vmatprep.subr.mxu0 0.0
    %2966 = vmatpush1.msra.mxu0 0.0
    %2967 = vmatprep.subr.mxu0 0.0
    %2968 = vmatpush1.msra.mxu0 0.0
    %2969 = vmatprep.subr.mxu0 0.0
    %2970 = vmatpush1.msra.mxu0 0.0
    %2971 = vmatprep.subr.mxu0 0.0
    %2972 = vmatpush1.msra.mxu0 0.0
    %2973 = vmatprep.subr.mxu0 0.0
    %2974 = vmatpush1.msra.mxu0 0.0
    %2975 = vmatprep.subr.mxu0 0.0
    %2976 = vmatpush1.msra.mxu0 0.0
    %2977 = vmatprep.subr.mxu0 0.0
    %2978 = vmatpush1.msra.mxu0 0.0
    %2979 = vmatprep.subr.mxu0 0.0
    %2980 = vmatpush1.msra.mxu0 0.0
    %2981 = vmatprep.subr.mxu0 0.0
    %2982 = vmatpush1.msra.mxu0 0.0
    %2983 = vmatprep.subr.mxu0 0.0
    %2984 = vmatpush1.msra.mxu0 0.0
    %2985 = vmatprep.subr.mxu0 0.0
    %2986 = vmatpush1.msra.mxu0 0.0
    %2987 = vmatprep.subr.mxu0 0.0
    %2988 = vmatpush1.msra.mxu0 0.0
    %2989 = vmatprep.subr.mxu0 0.0
    %2990 = vmatpush1.msra.mxu0 0.0
    %2991 = vmatprep.subr.mxu0 0.0
    %2992 = vmatpush1.msra.mxu0 0.0
    %2993 = vmatprep.subr.mxu0 0.0
    %2994 = vmatpush1.msra.mxu0 0.0
    %2995 = vmatprep.subr.mxu0 0.0
    %2996 = vmatpush1.msra.mxu0 0.0
    %2997 = vmatprep.mubr.f32.mxu0 0.0
    %2998 = vmatmul.mubr.f32.gmra.mrb[0].mxu0 %v2857
    %v2999 = vpop.f32.mrb[0].mxu0
    %v3000 = vadd.f32 0.0, %v2999
    %v3001 = vpop.f32.mrb[0].mxu0
    %v3002 = vadd.f32 0.0, %v3001
    %3003 = vdwg.mxu0
    %v3004 = vadd.f32 %v2858, %v2929
    %v3005 = vadd.f32 %v2859, %v2931
    %v3006 = vadd.f32 %v2860, %v3000
    %v3007 = vadd.f32 %v2861, %v3002
    %v3008 = vxor.u32 %v3004, 2147483648
    %v3009 = vmul.f32 %v3008, 1.442695
    %v3010 = vpow.pop %v3009
    %v3011 = vadd.f32 %v3010, 1.0
    %v3012 = vrcp.pop %v3011
    %v3013 = vmul.f32 1.0, %v3012
    %v3014 = vxor.u32 %v3005, 2147483648
    %v3015 = vmul.f32 %v3014, 1.442695
    %v3016 = vpow.pop %v3015
    %v3017 = vadd.f32 %v3016, 1.0
    %v3018 = vrcp.pop %v3017
    %v3019 = vmul.f32 1.0, %v3018
    %v3020 = vtanh.pop %v3006
    %v3021 = vxor.u32 %v3007, 2147483648
    %v3022 = vmul.f32 %v3021, 1.442695
    %v3023 = vpow.pop %v3022
    %v3024 = vadd.f32 %v3023, 1.0
    %v3025 = vrcp.pop %v3024
    %v3026 = vmul.f32 1.0, %v3025
    %v3027 = vmul.f32 %v3019, %v2855
    %v3028 = vmul.f32 %v3013, %v3020
    %v3029 = vadd.f32 %v3027, %v3028
    %v3030 = vtanh.pop %v3029
    %v3031 = vmul.f32 %v3026, %v3030
    %v3032 = vld [vmem:[%s1200] sm:$0xff]
    %v3033 = vld [vmem:[%s1200 + $0x8] sm:$0xff]
    %v3034 = vld [vmem:[%s1200 + $0x10] sm:$0xff]
    %v3035 = vld [vmem:[%s1200 + $0x18] sm:$0xff]
    %3036 = vmatprep.subr.mxu0 %v1981
    %3037 = vmatpush1.msra.mxu0 %v1980
    %3038 = vmatprep.subr.mxu0 %v1985
    %3039 = vmatpush1.msra.mxu0 %v1984
    %3040 = vmatprep.subr.mxu0 %v1989
    %3041 = vmatpush1.msra.mxu0 %v1988
    %3042 = vmatprep.subr.mxu0 %v1993
    %3043 = vmatpush1.msra.mxu0 %v1992
    %3044 = vmatprep.subr.mxu0 %v1997
    %3045 = vmatpush1.msra.mxu0 %v1996
    %3046 = vmatprep.subr.mxu0 %v2001
    %3047 = vmatpush1.msra.mxu0 %v2000
    %3048 = vmatprep.subr.mxu0 %v2005
    %3049 = vmatpush1.msra.mxu0 %v2004
    %3050 = vmatprep.subr.mxu0 %v2009
    %3051 = vmatpush1.msra.mxu0 %v2008
    %3052 = vmatprep.subr.mxu0 %v2013
    %3053 = vmatpush1.msra.mxu0 %v2012
    %3054 = vmatprep.subr.mxu0 %v2017
    %3055 = vmatpush1.msra.mxu0 %v2016
    %3056 = vmatprep.subr.mxu0 %v2021
    %3057 = vmatpush1.msra.mxu0 %v2020
    %3058 = vmatprep.subr.mxu0 %v2025
    %3059 = vmatpush1.msra.mxu0 %v2024
    %3060 = vmatprep.subr.mxu0 %v2029
    %3061 = vmatpush1.msra.mxu0 %v2028
    %3062 = vmatprep.subr.mxu0 %v2033
    %3063 = vmatpush1.msra.mxu0 %v2032
    %3064 = vmatprep.subr.mxu0 %v2037
    %3065 = vmatpush1.msra.mxu0 %v2036
    %3066 = vmatprep.subr.mxu0 %v2041
    %3067 = vmatpush1.msra.mxu0 %v2040
    %3068 = vmatprep.subr.mxu0 0.0
    %3069 = vmatpush1.msra.mxu0 0.0
    %3070 = vmatprep.subr.mxu0 0.0
    %3071 = vmatpush1.msra.mxu0 0.0
    %3072 = vmatprep.subr.mxu0 0.0
    %3073 = vmatpush1.msra.mxu0 0.0
    %3074 = vmatprep.subr.mxu0 0.0
    %3075 = vmatpush1.msra.mxu0 0.0
    %3076 = vmatprep.subr.mxu0 0.0
    %3077 = vmatpush1.msra.mxu0 0.0
    %3078 = vmatprep.subr.mxu0 0.0
    %3079 = vmatpush1.msra.mxu0 0.0
    %3080 = vmatprep.subr.mxu0 0.0
    %3081 = vmatpush1.msra.mxu0 0.0
    %3082 = vmatprep.subr.mxu0 0.0
    %3083 = vmatpush1.msra.mxu0 0.0
    %3084 = vmatprep.subr.mxu0 0.0
    %3085 = vmatpush1.msra.mxu0 0.0
    %3086 = vmatprep.subr.mxu0 0.0
    %3087 = vmatpush1.msra.mxu0 0.0
    %3088 = vmatprep.subr.mxu0 0.0
    %3089 = vmatpush1.msra.mxu0 0.0
    %3090 = vmatprep.subr.mxu0 0.0
    %3091 = vmatpush1.msra.mxu0 0.0
    %3092 = vmatprep.subr.mxu0 0.0
    %3093 = vmatpush1.msra.mxu0 0.0
    %3094 = vmatprep.subr.mxu0 0.0
    %3095 = vmatpush1.msra.mxu0 0.0
    %3096 = vmatprep.subr.mxu0 0.0
    %3097 = vmatpush1.msra.mxu0 0.0
    %3098 = vmatprep.subr.mxu0 0.0
    %3099 = vmatpush1.msra.mxu0 0.0
    %3100 = vmatprep.mubr.f32.mxu0 0.0
    %3101 = vmatmul.mubr.f32.gmra.mrb[0].mxu0 %v3031
    %v3102 = vpop.f32.mrb[0].mxu0
    %v3103 = vadd.f32 0.0, %v3102
    %v3104 = vpop.f32.mrb[0].mxu0
    %v3105 = vadd.f32 0.0, %v3104
    %3106 = vdwg.mxu0
    %3107 = vmatprep.subr.mxu0 %v1983
    %3108 = vmatpush1.msra.mxu0 %v1982
    %3109 = vmatprep.subr.mxu0 %v1987
    %3110 = vmatpush1.msra.mxu0 %v1986
    %3111 = vmatprep.subr.mxu0 %v1991
    %3112 = vmatpush1.msra.mxu0 %v1990
    %3113 = vmatprep.subr.mxu0 %v1995
    %3114 = vmatpush1.msra.mxu0 %v1994
    %3115 = vmatprep.subr.mxu0 %v1999
    %3116 = vmatpush1.msra.mxu0 %v1998
    %3117 = vmatprep.subr.mxu0 %v2003
    %3118 = vmatpush1.msra.mxu0 %v2002
    %3119 = vmatprep.subr.mxu0 %v2007
    %3120 = vmatpush1.msra.mxu0 %v2006
    %3121 = vmatprep.subr.mxu0 %v2011
    %3122 = vmatpush1.msra.mxu0 %v2010
    %3123 = vmatprep.subr.mxu0 %v2015
    %3124 = vmatpush1.msra.mxu0 %v2014
    %3125 = vmatprep.subr.mxu0 %v2019
    %3126 = vmatpush1.msra.mxu0 %v2018
    %3127 = vmatprep.subr.mxu0 %v2023
    %3128 = vmatpush1.msra.mxu0 %v2022
    %3129 = vmatprep.subr.mxu0 %v2027
    %3130 = vmatpush1.msra.mxu0 %v2026
    %3131 = vmatprep.subr.mxu0 %v2031
    %3132 = vmatpush1.msra.mxu0 %v2030
    %3133 = vmatprep.subr.mxu0 %v2035
    %3134 = vmatpush1.msra.mxu0 %v2034
    %3135 = vmatprep.subr.mxu0 %v2039
    %3136 = vmatpush1.msra.mxu0 %v2038
    %3137 = vmatprep.subr.mxu0 %v2043
    %3138 = vmatpush1.msra.mxu0 %v2042
    %3139 = vmatprep.subr.mxu0 0.0
    %3140 = vmatpush1.msra.mxu0 0.0
    %3141 = vmatprep.subr.mxu0 0.0
    %3142 = vmatpush1.msra.mxu0 0.0
    %3143 = vmatprep.subr.mxu0 0.0
    %3144 = vmatpush1.msra.mxu0 0.0
    %3145 = vmatprep.subr.mxu0 0.0
    %3146 = vmatpush1.msra.mxu0 0.0
    %3147 = vmatprep.subr.mxu0 0.0
    %3148 = vmatpush1.msra.mxu0 0.0
    %3149 = vmatprep.subr.mxu0 0.0
    %3150 = vmatpush1.msra.mxu0 0.0
    %3151 = vmatprep.subr.mxu0 0.0
    %3152 = vmatpush1.msra.mxu0 0.0
    %3153 = vmatprep.subr.mxu0 0.0
    %3154 = vmatpush1.msra.mxu0 0.0
    %3155 = vmatprep.subr.mxu0 0.0
    %3156 = vmatpush1.msra.mxu0 0.0
    %3157 = vmatprep.subr.mxu0 0.0
    %3158 = vmatpush1.msra.mxu0 0.0
    %3159 = vmatprep.subr.mxu0 0.0
    %3160 = vmatpush1.msra.mxu0 0.0
    %3161 = vmatprep.subr.mxu0 0.0
    %3162 = vmatpush1.msra.mxu0 0.0
    %3163 = vmatprep.subr.mxu0 0.0
    %3164 = vmatpush1.msra.mxu0 0.0
    %3165 = vmatprep.subr.mxu0 0.0
    %3166 = vmatpush1.msra.mxu0 0.0
    %3167 = vmatprep.subr.mxu0 0.0
    %3168 = vmatpush1.msra.mxu0 0.0
    %3169 = vmatprep.subr.mxu0 0.0
    %3170 = vmatpush1.msra.mxu0 0.0
    %3171 = vmatprep.mubr.f32.mxu0 0.0
    %3172 = vmatmul.mubr.f32.gmra.mrb[0].mxu0 %v3031
    %v3173 = vpop.f32.mrb[0].mxu0
    %v3174 = vadd.f32 0.0, %v3173
    %v3175 = vpop.f32.mrb[0].mxu0
    %v3176 = vadd.f32 0.0, %v3175
    %3177 = vdwg.mxu0
    %v3178 = vadd.f32 %v3032, %v3103
    %v3179 = vadd.f32 %v3033, %v3105
    %v3180 = vadd.f32 %v3034, %v3174
    %v3181 = vadd.f32 %v3035, %v3176
    %v3182 = vxor.u32 %v3178, 2147483648
    %v3183 = vmul.f32 %v3182, 1.442695
    %v3184 = vpow.pop %v3183
    %v3185 = vadd.f32 %v3184, 1.0
    %v3186 = vrcp.pop %v3185
    %v3187 = vmul.f32 1.0, %v3186
    %v3188 = vxor.u32 %v3179, 2147483648
    %v3189 = vmul.f32 %v3188, 1.442695
    %v3190 = vpow.pop %v3189
    %v3191 = vadd.f32 %v3190, 1.0
    %v3192 = vrcp.pop %v3191
    %v3193 = vmul.f32 1.0, %v3192
    %v3194 = vtanh.pop %v3180
    %v3195 = vxor.u32 %v3181, 2147483648
    %v3196 = vmul.f32 %v3195, 1.442695
    %v3197 = vpow.pop %v3196
    %v3198 = vadd.f32 %v3197, 1.0
    %v3199 = vrcp.pop %v3198
    %v3200 = vmul.f32 1.0, %v3199
    %v3201 = vmul.f32 %v3193, %v3029
    %v3202 = vmul.f32 %v3187, %v3194
    %v3203 = vadd.f32 %v3201, %v3202
    %v3204 = vtanh.pop %v3203
    %v3205 = vmul.f32 %v3200, %v3204
    %v3206 = vld [vmem:[%s1379] sm:$0xff]
    %v3207 = vld [vmem:[%s1379 + $0x8] sm:$0xff]
    %v3208 = vld [vmem:[%s1379 + $0x10] sm:$0xff]
    %v3209 = vld [vmem:[%s1379 + $0x18] sm:$0xff]
    %3210 = vmatprep.subr.mxu0 %v1981
    %3211 = vmatpush1.msra.mxu0 %v1980
    %3212 = vmatprep.subr.mxu0 %v1985
    %3213 = vmatpush1.msra.mxu0 %v1984
    %3214 = vmatprep.subr.mxu0 %v1989
    %3215 = vmatpush1.msra.mxu0 %v1988
    %3216 = vmatprep.subr.mxu0 %v1993
    %3217 = vmatpush1.msra.mxu0 %v1992
    %3218 = vmatprep.subr.mxu0 %v1997
    %3219 = vmatpush1.msra.mxu0 %v1996
    %3220 = vmatprep.subr.mxu0 %v2001
    %3221 = vmatpush1.msra.mxu0 %v2000
    %3222 = vmatprep.subr.mxu0 %v2005
    %3223 = vmatpush1.msra.mxu0 %v2004
    %3224 = vmatprep.subr.mxu0 %v2009
    %3225 = vmatpush1.msra.mxu0 %v2008
    %3226 = vmatprep.subr.mxu0 %v2013
    %3227 = vmatpush1.msra.mxu0 %v2012
    %3228 = vmatprep.subr.mxu0 %v2017
    %3229 = vmatpush1.msra.mxu0 %v2016
    %3230 = vmatprep.subr.mxu0 %v2021
    %3231 = vmatpush1.msra.mxu0 %v2020
    %3232 = vmatprep.subr.mxu0 %v2025
    %3233 = vmatpush1.msra.mxu0 %v2024
    %3234 = vmatprep.subr.mxu0 %v2029
    %3235 = vmatpush1.msra.mxu0 %v2028
    %3236 = vmatprep.subr.mxu0 %v2033
    %3237 = vmatpush1.msra.mxu0 %v2032
    %3238 = vmatprep.subr.mxu0 %v2037
    %3239 = vmatpush1.msra.mxu0 %v2036
    %3240 = vmatprep.subr.mxu0 %v2041
    %3241 = vmatpush1.msra.mxu0 %v2040
    %3242 = vmatprep.subr.mxu0 0.0
    %3243 = vmatpush1.msra.mxu0 0.0
    %3244 = vmatprep.subr.mxu0 0.0
    %3245 = vmatpush1.msra.mxu0 0.0
    %3246 = vmatprep.subr.mxu0 0.0
    %3247 = vmatpush1.msra.mxu0 0.0
    %3248 = vmatprep.subr.mxu0 0.0
    %3249 = vmatpush1.msra.mxu0 0.0
    %3250 = vmatprep.subr.mxu0 0.0
    %3251 = vmatpush1.msra.mxu0 0.0
    %3252 = vmatprep.subr.mxu0 0.0
    %3253 = vmatpush1.msra.mxu0 0.0
    %3254 = vmatprep.subr.mxu0 0.0
    %3255 = vmatpush1.msra.mxu0 0.0
    %3256 = vmatprep.subr.mxu0 0.0
    %3257 = vmatpush1.msra.mxu0 0.0
    %3258 = vmatprep.subr.mxu0 0.0
    %3259 = vmatpush1.msra.mxu0 0.0
    %3260 = vmatprep.subr.mxu0 0.0
    %3261 = vmatpush1.msra.mxu0 0.0
    %3262 = vmatprep.subr.mxu0 0.0
    %3263 = vmatpush1.msra.mxu0 0.0
    %3264 = vmatprep.subr.mxu0 0.0
    %3265 = vmatpush1.msra.mxu0 0.0
    %3266 = vmatprep.subr.mxu0 0.0
    %3267 = vmatpush1.msra.mxu0 0.0
    %3268 = vmatprep.subr.mxu0 0.0
    %3269 = vmatpush1.msra.mxu0 0.0
    %3270 = vmatprep.subr.mxu0 0.0
    %3271 = vmatpush1.msra.mxu0 0.0
    %3272 = vmatprep.subr.mxu0 0.0
    %3273 = vmatpush1.msra.mxu0 0.0
    %3274 = vmatprep.mubr.f32.mxu0 0.0
    %3275 = vmatmul.mubr.f32.gmra.mrb[0].mxu0 %v3205
    %v3276 = vpop.f32.mrb[0].mxu0
    %v3277 = vadd.f32 0.0, %v3276
    %v3278 = vpop.f32.mrb[0].mxu0
    %v3279 = vadd.f32 0.0, %v3278
    %3280 = vdwg.mxu0
    %3281 = vmatprep.subr.mxu0 %v1983
    %3282 = vmatpush1.msra.mxu0 %v1982
    %3283 = vmatprep.subr.mxu0 %v1987
    %3284 = vmatpush1.msra.mxu0 %v1986
    %3285 = vmatprep.subr.mxu0 %v1991
    %3286 = vmatpush1.msra.mxu0 %v1990
    %3287 = vmatprep.subr.mxu0 %v1995
    %3288 = vmatpush1.msra.mxu0 %v1994
    %3289 = vmatprep.subr.mxu0 %v1999
    %3290 = vmatpush1.msra.mxu0 %v1998
    %3291 = vmatprep.subr.mxu0 %v2003
    %3292 = vmatpush1.msra.mxu0 %v2002
    %3293 = vmatprep.subr.mxu0 %v2007
    %3294 = vmatpush1.msra.mxu0 %v2006
    %3295 = vmatprep.subr.mxu0 %v2011
    %3296 = vmatpush1.msra.mxu0 %v2010
    %3297 = vmatprep.subr.mxu0 %v2015
    %3298 = vmatpush1.msra.mxu0 %v2014
    %3299 = vmatprep.subr.mxu0 %v2019
    %3300 = vmatpush1.msra.mxu0 %v2018
    %3301 = vmatprep.subr.mxu0 %v2023
    %3302 = vmatpush1.msra.mxu0 %v2022
    %3303 = vmatprep.subr.mxu0 %v2027
    %3304 = vmatpush1.msra.mxu0 %v2026
    %3305 = vmatprep.subr.mxu0 %v2031
    %3306 = vmatpush1.msra.mxu0 %v2030
    %3307 = vmatprep.subr.mxu0 %v2035
    %3308 = vmatpush1.msra.mxu0 %v2034
    %3309 = vmatprep.subr.mxu0 %v2039
    %3310 = vmatpush1.msra.mxu0 %v2038
    %3311 = vmatprep.subr.mxu0 %v2043
    %3312 = vmatpush1.msra.mxu0 %v2042
    %3313 = vmatprep.subr.mxu0 0.0
    %3314 = vmatpush1.msra.mxu0 0.0
    %3315 = vmatprep.subr.mxu0 0.0
    %3316 = vmatpush1.msra.mxu0 0.0
    %3317 = vmatprep.subr.mxu0 0.0
    %3318 = vmatpush1.msra.mxu0 0.0
    %3319 = vmatprep.subr.mxu0 0.0
    %3320 = vmatpush1.msra.mxu0 0.0
    %3321 = vmatprep.subr.mxu0 0.0
    %3322 = vmatpush1.msra.mxu0 0.0
    %3323 = vmatprep.subr.mxu0 0.0
    %3324 = vmatpush1.msra.mxu0 0.0
    %3325 = vmatprep.subr.mxu0 0.0
    %3326 = vmatpush1.msra.mxu0 0.0
    %3327 = vmatprep.subr.mxu0 0.0
    %3328 = vmatpush1.msra.mxu0 0.0
    %3329 = vmatprep.subr.mxu0 0.0
    %3330 = vmatpush1.msra.mxu0 0.0
    %3331 = vmatprep.subr.mxu0 0.0
    %3332 = vmatpush1.msra.mxu0 0.0
    %3333 = vmatprep.subr.mxu0 0.0
    %3334 = vmatpush1.msra.mxu0 0.0
    %3335 = vmatprep.subr.mxu0 0.0
    %3336 = vmatpush1.msra.mxu0 0.0
    %3337 = vmatprep.subr.mxu0 0.0
    %3338 = vmatpush1.msra.mxu0 0.0
    %3339 = vmatprep.subr.mxu0 0.0
    %3340 = vmatpush1.msra.mxu0 0.0
    %3341 = vmatprep.subr.mxu0 0.0
    %3342 = vmatpush1.msra.mxu0 0.0
    %3343 = vmatprep.subr.mxu0 0.0
    %3344 = vmatpush1.msra.mxu0 0.0
    %3345 = vmatprep.mubr.f32.mxu0 0.0
    %3346 = vmatmul.mubr.f32.gmra.mrb[0].mxu0 %v3205
    %v3347 = vpop.f32.mrb[0].mxu0
    %v3348 = vadd.f32 0.0, %v3347
    %v3349 = vpop.f32.mrb[0].mxu0
    %v3350 = vadd.f32 0.0, %v3349
    %3351 = vdwg.mxu0
    %v3352 = vadd.f32 %v3206, %v3277
    %v3353 = vadd.f32 %v3207, %v3279
    %v3354 = vadd.f32 %v3208, %v3348
    %v3355 = vadd.f32 %v3209, %v3350
    %v3356 = vxor.u32 %v3352, 2147483648
    %v3357 = vmul.f32 %v3356, 1.442695
    %v3358 = vpow.pop %v3357
    %v3359 = vadd.f32 %v3358, 1.0
    %v3360 = vrcp.pop %v3359
    %v3361 = vmul.f32 1.0, %v3360
    %v3362 = vxor.u32 %v3353, 2147483648
    %v3363 = vmul.f32 %v3362, 1.442695
    %v3364 = vpow.pop %v3363
    %v3365 = vadd.f32 %v3364, 1.0
    %v3366 = vrcp.pop %v3365
    %v3367 = vmul.f32 1.0, %v3366
    %v3368 = vtanh.pop %v3354
    %v3369 = vxor.u32 %v3355, 2147483648
    %v3370 = vmul.f32 %v3369, 1.442695
    %v3371 = vpow.pop %v3370
    %v3372 = vadd.f32 %v3371, 1.0
    %v3373 = vrcp.pop %v3372
    %v3374 = vmul.f32 1.0, %v3373
    %v3375 = vmul.f32 %v3367, %v3203
    %v3376 = vmul.f32 %v3361, %v3368
    %v3377 = vadd.f32 %v3375, %v3376
    %v3378 = vtanh.pop %v3377
    %v3379 = vmul.f32 %v3374, %v3378
    %v3380 = vld [vmem:[%s1558] sm:$0xff]
    %v3381 = vld [vmem:[%s1558 + $0x8] sm:$0xff]
    %v3382 = vld [vmem:[%s1558 + $0x10] sm:$0xff]
    %v3383 = vld [vmem:[%s1558 + $0x18] sm:$0xff]
    %3384 = vmatprep.subr.mxu0 %v1981
    %3385 = vmatpush1.msra.mxu0 %v1980
    %3386 = vmatprep.subr.mxu0 %v1985
    %3387 = vmatpush1.msra.mxu0 %v1984
    %3388 = vmatprep.subr.mxu0 %v1989
    %3389 = vmatpush1.msra.mxu0 %v1988
    %3390 = vmatprep.subr.mxu0 %v1993
    %3391 = vmatpush1.msra.mxu0 %v1992
    %3392 = vmatprep.subr.mxu0 %v1997
    %3393 = vmatpush1.msra.mxu0 %v1996
    %3394 = vmatprep.subr.mxu0 %v2001
    %3395 = vmatpush1.msra.mxu0 %v2000
    %3396 = vmatprep.subr.mxu0 %v2005
    %3397 = vmatpush1.msra.mxu0 %v2004
    %3398 = vmatprep.subr.mxu0 %v2009
    %3399 = vmatpush1.msra.mxu0 %v2008
    %3400 = vmatprep.subr.mxu0 %v2013
    %3401 = vmatpush1.msra.mxu0 %v2012
    %3402 = vmatprep.subr.mxu0 %v2017
    %3403 = vmatpush1.msra.mxu0 %v2016
    %3404 = vmatprep.subr.mxu0 %v2021
    %3405 = vmatpush1.msra.mxu0 %v2020
    %3406 = vmatprep.subr.mxu0 %v2025
    %3407 = vmatpush1.msra.mxu0 %v2024
    %3408 = vmatprep.subr.mxu0 %v2029
    %3409 = vmatpush1.msra.mxu0 %v2028
    %3410 = vmatprep.subr.mxu0 %v2033
    %3411 = vmatpush1.msra.mxu0 %v2032
    %3412 = vmatprep.subr.mxu0 %v2037
    %3413 = vmatpush1.msra.mxu0 %v2036
    %3414 = vmatprep.subr.mxu0 %v2041
    %3415 = vmatpush1.msra.mxu0 %v2040
    %3416 = vmatprep.subr.mxu0 0.0
    %3417 = vmatpush1.msra.mxu0 0.0
    %3418 = vmatprep.subr.mxu0 0.0
    %3419 = vmatpush1.msra.mxu0 0.0
    %3420 = vmatprep.subr.mxu0 0.0
    %3421 = vmatpush1.msra.mxu0 0.0
    %3422 = vmatprep.subr.mxu0 0.0
    %3423 = vmatpush1.msra.mxu0 0.0
    %3424 = vmatprep.subr.mxu0 0.0
    %3425 = vmatpush1.msra.mxu0 0.0
    %3426 = vmatprep.subr.mxu0 0.0
    %3427 = vmatpush1.msra.mxu0 0.0
    %3428 = vmatprep.subr.mxu0 0.0
    %3429 = vmatpush1.msra.mxu0 0.0
    %3430 = vmatprep.subr.mxu0 0.0
    %3431 = vmatpush1.msra.mxu0 0.0
    %3432 = vmatprep.subr.mxu0 0.0
    %3433 = vmatpush1.msra.mxu0 0.0
    %3434 = vmatprep.subr.mxu0 0.0
    %3435 = vmatpush1.msra.mxu0 0.0
    %3436 = vmatprep.subr.mxu0 0.0
    %3437 = vmatpush1.msra.mxu0 0.0
    %3438 = vmatprep.subr.mxu0 0.0
    %3439 = vmatpush1.msra.mxu0 0.0
    %3440 = vmatprep.subr.mxu0 0.0
    %3441 = vmatpush1.msra.mxu0 0.0
    %3442 = vmatprep.subr.mxu0 0.0
    %3443 = vmatpush1.msra.mxu0 0.0
    %3444 = vmatprep.subr.mxu0 0.0
    %3445 = vmatpush1.msra.mxu0 0.0
    %3446 = vmatprep.subr.mxu0 0.0
    %3447 = vmatpush1.msra.mxu0 0.0
    %3448 = vmatprep.mubr.f32.mxu0 0.0
    %3449 = vmatmul.mubr.f32.gmra.mrb[0].mxu0 %v3379
    %v3450 = vpop.f32.mrb[0].mxu0
    %v3451 = vadd.f32 0.0, %v3450
    %v3452 = vpop.f32.mrb[0].mxu0
    %v3453 = vadd.f32 0.0, %v3452
    %3454 = vdwg.mxu0
    %3455 = vmatprep.subr.mxu0 %v1983
    %3456 = vmatpush1.msra.mxu0 %v1982
    %3457 = vmatprep.subr.mxu0 %v1987
    %3458 = vmatpush1.msra.mxu0 %v1986
    %3459 = vmatprep.subr.mxu0 %v1991
    %3460 = vmatpush1.msra.mxu0 %v1990
    %3461 = vmatprep.subr.mxu0 %v1995
    %3462 = vmatpush1.msra.mxu0 %v1994
    %3463 = vmatprep.subr.mxu0 %v1999
    %3464 = vmatpush1.msra.mxu0 %v1998
    %3465 = vmatprep.subr.mxu0 %v2003
    %3466 = vmatpush1.msra.mxu0 %v2002
    %3467 = vmatprep.subr.mxu0 %v2007
    %3468 = vmatpush1.msra.mxu0 %v2006
    %3469 = vmatprep.subr.mxu0 %v2011
    %3470 = vmatpush1.msra.mxu0 %v2010
    %3471 = vmatprep.subr.mxu0 %v2015
    %3472 = vmatpush1.msra.mxu0 %v2014
    %3473 = vmatprep.subr.mxu0 %v2019
    %3474 = vmatpush1.msra.mxu0 %v2018
    %3475 = vmatprep.subr.mxu0 %v2023
    %3476 = vmatpush1.msra.mxu0 %v2022
    %3477 = vmatprep.subr.mxu0 %v2027
    %3478 = vmatpush1.msra.mxu0 %v2026
    %3479 = vmatprep.subr.mxu0 %v2031
    %3480 = vmatpush1.msra.mxu0 %v2030
    %3481 = vmatprep.subr.mxu0 %v2035
    %3482 = vmatpush1.msra.mxu0 %v2034
    %3483 = vmatprep.subr.mxu0 %v2039
    %3484 = vmatpush1.msra.mxu0 %v2038
    %3485 = vmatprep.subr.mxu0 %v2043
    %3486 = vmatpush1.msra.mxu0 %v2042
    %3487 = vmatprep.subr.mxu0 0.0
    %3488 = vmatpush1.msra.mxu0 0.0
    %3489 = vmatprep.subr.mxu0 0.0
    %3490 = vmatpush1.msra.mxu0 0.0
    %3491 = vmatprep.subr.mxu0 0.0
    %3492 = vmatpush1.msra.mxu0 0.0
    %3493 = vmatprep.subr.mxu0 0.0
    %3494 = vmatpush1.msra.mxu0 0.0
    %3495 = vmatprep.subr.mxu0 0.0
    %3496 = vmatpush1.msra.mxu0 0.0
    %3497 = vmatprep.subr.mxu0 0.0
    %3498 = vmatpush1.msra.mxu0 0.0
    %3499 = vmatprep.subr.mxu0 0.0
    %3500 = vmatpush1.msra.mxu0 0.0
    %3501 = vmatprep.subr.mxu0 0.0
    %3502 = vmatpush1.msra.mxu0 0.0
    %3503 = vmatprep.subr.mxu0 0.0
    %3504 = vmatpush1.msra.mxu0 0.0
    %3505 = vmatprep.subr.mxu0 0.0
    %3506 = vmatpush1.msra.mxu0 0.0
    %3507 = vmatprep.subr.mxu0 0.0
    %3508 = vmatpush1.msra.mxu0 0.0
    %3509 = vmatprep.subr.mxu0 0.0
    %3510 = vmatpush1.msra.mxu0 0.0
    %3511 = vmatprep.subr.mxu0 0.0
    %3512 = vmatpush1.msra.mxu0 0.0
    %3513 = vmatprep.subr.mxu0 0.0
    %3514 = vmatpush1.msra.mxu0 0.0
    %3515 = vmatprep.subr.mxu0 0.0
    %3516 = vmatpush1.msra.mxu0 0.0
    %3517 = vmatprep.subr.mxu0 0.0
    %3518 = vmatpush1.msra.mxu0 0.0
    %3519 = vmatprep.mubr.f32.mxu0 0.0
    %3520 = vmatmul.mubr.f32.gmra.mrb[0].mxu0 %v3379
    %v3521 = vpop.f32.mrb[0].mxu0
    %v3522 = vadd.f32 0.0, %v3521
    %v3523 = vpop.f32.mrb[0].mxu0
    %v3524 = vadd.f32 0.0, %v3523
    %3525 = vdwg.mxu0
    %v3526 = vadd.f32 %v3380, %v3451
    %v3527 = vadd.f32 %v3381, %v3453
    %v3528 = vadd.f32 %v3382, %v3522
    %v3529 = vadd.f32 %v3383, %v3524
    %v3530 = vxor.u32 %v3526, 2147483648
    %v3531 = vmul.f32 %v3530, 1.442695
    %v3532 = vpow.pop %v3531
    %v3533 = vadd.f32 %v3532, 1.0
    %v3534 = vrcp.pop %v3533
    %v3535 = vmul.f32 1.0, %v3534
    %v3536 = vxor.u32 %v3527, 2147483648
    %v3537 = vmul.f32 %v3536, 1.442695
    %v3538 = vpow.pop %v3537
    %v3539 = vadd.f32 %v3538, 1.0
    %v3540 = vrcp.pop %v3539
    %v3541 = vmul.f32 1.0, %v3540
    %v3542 = vtanh.pop %v3528
    %v3543 = vxor.u32 %v3529, 2147483648
    %v3544 = vmul.f32 %v3543, 1.442695
    %v3545 = vpow.pop %v3544
    %v3546 = vadd.f32 %v3545, 1.0
    %v3547 = vrcp.pop %v3546
    %v3548 = vmul.f32 1.0, %v3547
    %v3549 = vmul.f32 %v3541, %v3377
    %v3550 = vmul.f32 %v3535, %v3542
    %v3551 = vadd.f32 %v3549, %v3550
    %v3552 = vtanh.pop %v3551
    %v3553 = vmul.f32 %v3548, %v3552
    %v3554 = vld [vmem:[%s1737] sm:$0xff]
    %v3555 = vld [vmem:[%s1737 + $0x8] sm:$0xff]
    %v3556 = vld [vmem:[%s1737 + $0x10] sm:$0xff]
    %v3557 = vld [vmem:[%s1737 + $0x18] sm:$0xff]
    %3558 = vmatprep.subr.mxu0 %v1981
    %3559 = vmatpush1.msra.mxu0 %v1980
    %3560 = vmatprep.subr.mxu0 %v1985
    %3561 = vmatpush1.msra.mxu0 %v1984
    %3562 = vmatprep.subr.mxu0 %v1989
    %3563 = vmatpush1.msra.mxu0 %v1988
    %3564 = vmatprep.subr.mxu0 %v1993
    %3565 = vmatpush1.msra.mxu0 %v1992
    %3566 = vmatprep.subr.mxu0 %v1997
    %3567 = vmatpush1.msra.mxu0 %v1996
    %3568 = vmatprep.subr.mxu0 %v2001
    %3569 = vmatpush1.msra.mxu0 %v2000
    %3570 = vmatprep.subr.mxu0 %v2005
    %3571 = vmatpush1.msra.mxu0 %v2004
    %3572 = vmatprep.subr.mxu0 %v2009
    %3573 = vmatpush1.msra.mxu0 %v2008
    %3574 = vmatprep.subr.mxu0 %v2013
    %3575 = vmatpush1.msra.mxu0 %v2012
    %3576 = vmatprep.subr.mxu0 %v2017
    %3577 = vmatpush1.msra.mxu0 %v2016
    %3578 = vmatprep.subr.mxu0 %v2021
    %3579 = vmatpush1.msra.mxu0 %v2020
    %3580 = vmatprep.subr.mxu0 %v2025
    %3581 = vmatpush1.msra.mxu0 %v2024
    %3582 = vmatprep.subr.mxu0 %v2029
    %3583 = vmatpush1.msra.mxu0 %v2028
    %3584 = vmatprep.subr.mxu0 %v2033
    %3585 = vmatpush1.msra.mxu0 %v2032
    %3586 = vmatprep.subr.mxu0 %v2037
    %3587 = vmatpush1.msra.mxu0 %v2036
    %3588 = vmatprep.subr.mxu0 %v2041
    %3589 = vmatpush1.msra.mxu0 %v2040
    %3590 = vmatprep.subr.mxu0 0.0
    %3591 = vmatpush1.msra.mxu0 0.0
    %3592 = vmatprep.subr.mxu0 0.0
    %3593 = vmatpush1.msra.mxu0 0.0
    %3594 = vmatprep.subr.mxu0 0.0
    %3595 = vmatpush1.msra.mxu0 0.0
    %3596 = vmatprep.subr.mxu0 0.0
    %3597 = vmatpush1.msra.mxu0 0.0
    %3598 = vmatprep.subr.mxu0 0.0
    %3599 = vmatpush1.msra.mxu0 0.0
    %3600 = vmatprep.subr.mxu0 0.0
    %3601 = vmatpush1.msra.mxu0 0.0
    %3602 = vmatprep.subr.mxu0 0.0
    %3603 = vmatpush1.msra.mxu0 0.0
    %3604 = vmatprep.subr.mxu0 0.0
    %3605 = vmatpush1.msra.mxu0 0.0
    %3606 = vmatprep.subr.mxu0 0.0
    %3607 = vmatpush1.msra.mxu0 0.0
    %3608 = vmatprep.subr.mxu0 0.0
    %3609 = vmatpush1.msra.mxu0 0.0
    %3610 = vmatprep.subr.mxu0 0.0
    %3611 = vmatpush1.msra.mxu0 0.0
    %3612 = vmatprep.subr.mxu0 0.0
    %3613 = vmatpush1.msra.mxu0 0.0
    %3614 = vmatprep.subr.mxu0 0.0
    %3615 = vmatpush1.msra.mxu0 0.0
    %3616 = vmatprep.subr.mxu0 0.0
    %3617 = vmatpush1.msra.mxu0 0.0
    %3618 = vmatprep.subr.mxu0 0.0
    %3619 = vmatpush1.msra.mxu0 0.0
    %3620 = vmatprep.subr.mxu0 0.0
    %3621 = vmatpush1.msra.mxu0 0.0
    %3622 = vmatprep.mubr.f32.mxu0 0.0
    %3623 = vmatmul.mubr.f32.gmra.mrb[0].mxu0 %v3553
    %v3624 = vpop.f32.mrb[0].mxu0
    %v3625 = vadd.f32 0.0, %v3624
    %v3626 = vpop.f32.mrb[0].mxu0
    %v3627 = vadd.f32 0.0, %v3626
    %3628 = vdwg.mxu0
    %3629 = vmatprep.subr.mxu0 %v1983
    %3630 = vmatpush1.msra.mxu0 %v1982
    %3631 = vmatprep.subr.mxu0 %v1987
    %3632 = vmatpush1.msra.mxu0 %v1986
    %3633 = vmatprep.subr.mxu0 %v1991
    %3634 = vmatpush1.msra.mxu0 %v1990
    %3635 = vmatprep.subr.mxu0 %v1995
    %3636 = vmatpush1.msra.mxu0 %v1994
    %3637 = vmatprep.subr.mxu0 %v1999
    %3638 = vmatpush1.msra.mxu0 %v1998
    %3639 = vmatprep.subr.mxu0 %v2003
    %3640 = vmatpush1.msra.mxu0 %v2002
    %3641 = vmatprep.subr.mxu0 %v2007
    %3642 = vmatpush1.msra.mxu0 %v2006
    %3643 = vmatprep.subr.mxu0 %v2011
    %3644 = vmatpush1.msra.mxu0 %v2010
    %3645 = vmatprep.subr.mxu0 %v2015
    %3646 = vmatpush1.msra.mxu0 %v2014
    %3647 = vmatprep.subr.mxu0 %v2019
    %3648 = vmatpush1.msra.mxu0 %v2018
    %3649 = vmatprep.subr.mxu0 %v2023
    %3650 = vmatpush1.msra.mxu0 %v2022
    %3651 = vmatprep.subr.mxu0 %v2027
    %3652 = vmatpush1.msra.mxu0 %v2026
    %3653 = vmatprep.subr.mxu0 %v2031
    %3654 = vmatpush1.msra.mxu0 %v2030
    %3655 = vmatprep.subr.mxu0 %v2035
    %3656 = vmatpush1.msra.mxu0 %v2034
    %3657 = vmatprep.subr.mxu0 %v2039
    %3658 = vmatpush1.msra.mxu0 %v2038
    %3659 = vmatprep.subr.mxu0 %v2043
    %3660 = vmatpush1.msra.mxu0 %v2042
    %3661 = vmatprep.subr.mxu0 0.0
    %3662 = vmatpush1.msra.mxu0 0.0
    %3663 = vmatprep.subr.mxu0 0.0
    %3664 = vmatpush1.msra.mxu0 0.0
    %3665 = vmatprep.subr.mxu0 0.0
    %3666 = vmatpush1.msra.mxu0 0.0
    %3667 = vmatprep.subr.mxu0 0.0
    %3668 = vmatpush1.msra.mxu0 0.0
    %3669 = vmatprep.subr.mxu0 0.0
    %3670 = vmatpush1.msra.mxu0 0.0
    %3671 = vmatprep.subr.mxu0 0.0
    %3672 = vmatpush1.msra.mxu0 0.0
    %3673 = vmatprep.subr.mxu0 0.0
    %3674 = vmatpush1.msra.mxu0 0.0
    %3675 = vmatprep.subr.mxu0 0.0
    %3676 = vmatpush1.msra.mxu0 0.0
    %3677 = vmatprep.subr.mxu0 0.0
    %3678 = vmatpush1.msra.mxu0 0.0
    %3679 = vmatprep.subr.mxu0 0.0
    %3680 = vmatpush1.msra.mxu0 0.0
    %3681 = vmatprep.subr.mxu0 0.0
    %3682 = vmatpush1.msra.mxu0 0.0
    %3683 = vmatprep.subr.mxu0 0.0
    %3684 = vmatpush1.msra.mxu0 0.0
    %3685 = vmatprep.subr.mxu0 0.0
    %3686 = vmatpush1.msra.mxu0 0.0
    %3687 = vmatprep.subr.mxu0 0.0
    %3688 = vmatpush1.msra.mxu0 0.0
    %3689 = vmatprep.subr.mxu0 0.0
    %3690 = vmatpush1.msra.mxu0 0.0
    %3691 = vmatprep.subr.mxu0 0.0
    %3692 = vmatpush1.msra.mxu0 0.0
    %3693 = vmatprep.mubr.f32.mxu0 0.0
    %3694 = vmatmul.mubr.f32.gmra.mrb[0].mxu0 %v3553
    %v3695 = vpop.f32.mrb[0].mxu0
    %v3696 = vadd.f32 0.0, %v3695
    %v3697 = vpop.f32.mrb[0].mxu0
    %v3698 = vadd.f32 0.0, %v3697
    %3699 = vdwg.mxu0
    %v3700 = vadd.f32 %v3554, %v3625
    %v3701 = vadd.f32 %v3555, %v3627
    %v3702 = vadd.f32 %v3556, %v3696
    %v3703 = vadd.f32 %v3557, %v3698
    %v3704 = vxor.u32 %v3700, 2147483648
    %v3705 = vmul.f32 %v3704, 1.442695
    %v3706 = vpow.pop %v3705
    %v3707 = vadd.f32 %v3706, 1.0
    %v3708 = vrcp.pop %v3707
    %v3709 = vmul.f32 1.0, %v3708
    %v3710 = vxor.u32 %v3701, 2147483648
    %v3711 = vmul.f32 %v3710, 1.442695
    %v3712 = vpow.pop %v3711
    %v3713 = vadd.f32 %v3712, 1.0
    %v3714 = vrcp.pop %v3713
    %v3715 = vmul.f32 1.0, %v3714
    %v3716 = vtanh.pop %v3702
    %v3717 = vxor.u32 %v3703, 2147483648
    %v3718 = vmul.f32 %v3717, 1.442695
    %v3719 = vpow.pop %v3718
    %v3720 = vadd.f32 %v3719, 1.0
    %v3721 = vrcp.pop %v3720
    %v3722 = vmul.f32 1.0, %v3721
    %v3723 = vmul.f32 %v3715, %v3551
    %v3724 = vmul.f32 %v3709, %v3716
    %v3725 = vadd.f32 %v3723, %v3724
    %v3726 = vtanh.pop %v3725
    %v3727 = vmul.f32 %v3722, %v3726
    %3728 = vst [vmem:[%s2332] sm:$0xff] %v3727
    %3729 = vst [vmem:[%s2334] sm:$0xff] %v3725
    // Predicated region
    $region58: #{tpu_custom_call.1} parent=1 // pred_check
      %p3730 = pneg %p88
    $region59: #{tpu_custom_call.1} parent=1 // pred_check_branch
      %3732 = sbr.rel (%p3730) target = $region61
    $region60: #{tpu_custom_call.1} parent=1 // pred_region
      %v3733 = vld [vmem:[#allocation12] sm:$0xff]
      %v3734 = vld [vmem:[#allocation12 + $0x8] sm:$0xff]
      %v3735 = vld [vmem:[#allocation12 + $0x10] sm:$0xff]
      %v3736 = vld [vmem:[#allocation12 + $0x18] sm:$0xff]
      %v3737 = vld [vmem:[#allocation12 + $0x20] sm:$0xff]
      %v3738 = vld [vmem:[#allocation12 + $0x28] sm:$0xff]
      %v3739 = vld [vmem:[#allocation12 + $0x30] sm:$0xff]
      %v3740 = vld [vmem:[#allocation12 + $0x38] sm:$0xff]
      %v3741 = vld [vmem:[#allocation12 + $0x40] sm:$0xff]
      %v3742 = vld [vmem:[#allocation12 + $0x48] sm:$0xff]
      %v3743 = vld [vmem:[#allocation12 + $0x50] sm:$0xff]
      %v3744 = vld [vmem:[#allocation12 + $0x58] sm:$0xff]
      %v3745 = vld [vmem:[#allocation12 + $0x60] sm:$0xff]
      %v3746 = vld [vmem:[#allocation12 + $0x68] sm:$0xff]
      %v3747 = vld [vmem:[#allocation12 + $0x70] sm:$0xff]
      %v3748 = vld [vmem:[#allocation12 + $0x78] sm:$0xff]
      %v3749 = vld [vmem:[%s8] sm:$0x1]
      %v3751 = vlaneseq
      %v3752 = vshrl.u32 %v3751, 7
      %v3753 = vsub.s32 0, %v3752
      %v3754 = vrot.slane %v3749, %v3753
      %3756 = vmatprep.subr.mxu0 0.0
      %3757 = vmatpush1.msra.mxu0 %v3733
      %3758 = vmatprep.subr.mxu0 0.0
      %3759 = vmatpush1.msra.mxu0 %v3734
      %3760 = vmatprep.subr.mxu0 0.0
      %3761 = vmatpush1.msra.mxu0 %v3735
      %3762 = vmatprep.subr.mxu0 0.0
      %3763 = vmatpush1.msra.mxu0 %v3736
      %3764 = vmatprep.subr.mxu0 0.0
      %3765 = vmatpush1.msra.mxu0 %v3737
      %3766 = vmatprep.subr.mxu0 0.0
      %3767 = vmatpush1.msra.mxu0 %v3738
      %3768 = vmatprep.subr.mxu0 0.0
      %3769 = vmatpush1.msra.mxu0 %v3739
      %3770 = vmatprep.subr.mxu0 0.0
      %3771 = vmatpush1.msra.mxu0 %v3740
      %3772 = vmatprep.subr.mxu0 0.0
      %3773 = vmatpush1.msra.mxu0 %v3741
      %3774 = vmatprep.subr.mxu0 0.0
      %3775 = vmatpush1.msra.mxu0 %v3742
      %3776 = vmatprep.subr.mxu0 0.0
      %3777 = vmatpush1.msra.mxu0 %v3743
      %3778 = vmatprep.subr.mxu0 0.0
      %3779 = vmatpush1.msra.mxu0 %v3744
      %3780 = vmatprep.subr.mxu0 0.0
      %3781 = vmatpush1.msra.mxu0 %v3745
      %3782 = vmatprep.subr.mxu0 0.0
      %3783 = vmatpush1.msra.mxu0 %v3746
      %3784 = vmatprep.subr.mxu0 0.0
      %3785 = vmatpush1.msra.mxu0 %v3747
      %3786 = vmatprep.subr.mxu0 0.0
      %3787 = vmatpush1.msra.mxu0 %v3748
      %3788 = vmatprep.subr.mxu0 0.0
      %3789 = vmatpush1.msra.mxu0 0.0
      %3790 = vmatprep.subr.mxu0 0.0
      %3791 = vmatpush1.msra.mxu0 0.0
      %3792 = vmatprep.subr.mxu0 0.0
      %3793 = vmatpush1.msra.mxu0 0.0
      %3794 = vmatprep.subr.mxu0 0.0
      %3795 = vmatpush1.msra.mxu0 0.0
      %3796 = vmatprep.subr.mxu0 0.0
      %3797 = vmatpush1.msra.mxu0 0.0
      %3798 = vmatprep.subr.mxu0 0.0
      %3799 = vmatpush1.msra.mxu0 0.0
      %3800 = vmatprep.subr.mxu0 0.0
      %3801 = vmatpush1.msra.mxu0 0.0
      %3802 = vmatprep.subr.mxu0 0.0
      %3803 = vmatpush1.msra.mxu0 0.0
      %3804 = vmatprep.subr.mxu0 0.0
      %3805 = vmatpush1.msra.mxu0 0.0
      %3806 = vmatprep.subr.mxu0 0.0
      %3807 = vmatpush1.msra.mxu0 0.0
      %3808 = vmatprep.subr.mxu0 0.0
      %3809 = vmatpush1.msra.mxu0 0.0
      %3810 = vmatprep.subr.mxu0 0.0
      %3811 = vmatpush1.msra.mxu0 0.0
      %3812 = vmatprep.subr.mxu0 0.0
      %3813 = vmatpush1.msra.mxu0 0.0
      %3814 = vmatprep.subr.mxu0 0.0
      %3815 = vmatpush1.msra.mxu0 0.0
      %3816 = vmatprep.subr.mxu0 0.0
      %3817 = vmatpush1.msra.mxu0 0.0
      %3818 = vmatprep.subr.mxu0 0.0
      %3819 = vmatpush1.msra.mxu0 0.0
      %3820 = vmatprep.mubr.f32.mxu0 0.0
      %3821 = vmatmul.mubr.f32.gmra.mrb[0].mxu0 %v3727
      %v3822 = vpop.f32.mrb[0].mxu0
      %v3823 = vadd.f32 %v3754, %v3822
      %v3824 = vpop.f32.mrb[0].mxu0
      %3825 = vdwg.mxu0
      %v3826 = vxor.u32 %v3823, 2147483648
      %v3827 = vmul.f32 %v3826, 1.442695
      %v3828 = vpow.pop %v3827
      %v3829 = vadd.f32 %v3828, 1.0
      %v3830 = vrcp.pop %v3829
      %v3831 = vmul.f32 1.0, %v3830
      %3832 = vst [vmem:[#allocation14] sm:$0xff] %v3831
    $region61: #{tpu_custom_call.1} parent=1 // pred_fallthru
      _
    // Predicated region
    $region62: #{tpu_custom_call.1} parent=1 // pred_check
      _
    $region63: #{tpu_custom_call.1} parent=1 // pred_check_branch
      %3834 = sbr.rel (0) target = $region65
    $region64: #{tpu_custom_call.1} parent=1 // pred_region
      %s3836 = ssub.s32 128, 128
      %3837 = vsyncadd [#allocation8], %s3836
      %s3839 = sshll.u32 [#allocation14], 4
      %s3840 = int_to_ptr.vmem [resolvable:$true] %s3839
      %3842 = dma.vmem_to_hbm [thread:$0]  %s3840, 128, %s9, [#allocation8]
    $region65: #{tpu_custom_call.1} parent=1 // pred_fallthru
      _
    // Predicated region
    $region66: #{tpu_custom_call.1} parent=1 // pred_check
      _
    $region67: #{tpu_custom_call.1} parent=1 // pred_check_branch
      %3844 = sbr.rel (0) target = $region69
    $region68: #{tpu_custom_call.1} parent=1 // pred_region
      %3845 = dma.done [#allocation8], 128
    $region69: #{tpu_custom_call.1} parent=1 // pred_fallthru
      _
    %3846 = vsyncpa [#allocation7], 1
    %3847 = vsyncpa [#allocation10], 1
    %3848 = vsyncpa [#allocation13], 1
    %3849 = vsyncpa [#allocation8], 1

</llo_original>
